<compile_context>
chip_gen: v5e
topology: v5e:2x2
jax: 0.10.0
libtpu: 0.0.40
codegen_flags: <defaults>
</compile_context>

<pallas_src>
from functools import partial

import jax
import jax.numpy as jnp
from jax.experimental import pallas as pl
from jax.experimental.pallas import tpu as pltpu

BN_EPS = 1e-5


# ---------------------------------------------------------------------------
# Fused Pallas kernel
# ---------------------------------------------------------------------------
def _srm_pa_kernel(xs_ref, w1_ref, w2_ref, g1_ref, b1_ref, g2_ref, b2_ref,
                   sel_ref, pick_avg_ref, pick_max_ref, m1_ref, m2_ref, wsa_ref,
                   out_ref, f1_act, pool_pad, *, N, Hs, Ws):
    """Fully fused SRMPixelAttention forward.

    xs_ref:       (M + tail1, 4*Cin)  row-flattened space-to-depth input (MXU dtype)
    w1_ref:       (4, 4*Cin, 32)      conv1 as per-tap mats of a 2x2 stride-1 conv
    w2_ref:       (9, 32, 64)         conv2 3x3 per-tap matrices
    g*/b*:        (1, C) f32          BatchNorm affine params
    sel_ref:      (N*Hs, M) f32       row-selection matrix for the pooled scatter
    pick_*_ref:   (M, 2*Ws) f32       lane-pick matrices (validity already folded in)
    m1/m2_ref:    (M, 1) f32          valid-row masks for BN1 / BN2 batch stats
    wsa_ref:      (98,) f32 SMEM      SA 7x7 weights, [c, kh, kw] flattened
    out_ref:      (N, H2, W2) f32     attention map (lane-dense)
    f1_act:       (M + tail2, 32)     scratch: ReLU(BN(conv1)) in MXU dtype
    pool_pad:     (2, N, H2+6, W2+6)  scratch: zero-padded [avg, max] maps (lane = W)
    """
    H1, W1 = Hs - 1, Ws - 1
    H2, W2 = H1 - 2, W1 - 2
    M = N * Hs * Ws
    C1 = w1_ref.shape[-1]
    C2 = w2_ref.shape[-1]

    # ---- conv1: 3x3/stride-2 == 2x2/stride-1 over the space-to-depth input.
    # Shift trick: tap (ai, aj)'s contribution to ALL output rows is one
    # whole-buffer matmul on a contiguous shifted slice (4 MXU pushes, M=128).
    acc1 = jnp.zeros((M, C1), jnp.float32)
    for ai in range(2):
        for aj in range(2):
            sh = ai * Ws + aj
            acc1 = acc1 + jnp.dot(xs_ref[sh:sh + M, :], w1_ref[ai * 2 + aj],
                                  preferred_element_type=jnp.float32)

    # ---- BatchNorm(32): training-mode batch stats over valid rows only (rows of
    # the full Hs x Ws grid with i >= H1 or j >= W1 are finite border garbage).
    mask1 = m1_ref[...]
    cnt1 = float(N * H1 * W1)
    mu1 = jnp.sum(acc1 * mask1, axis=0, keepdims=True) / cnt1
    d1 = (acc1 - mu1) * mask1
    var1 = jnp.sum(d1 * d1, axis=0, keepdims=True) / cnt1
    scale1 = jax.lax.rsqrt(var1 + BN_EPS) * g1_ref[...]
    shift1 = b1_ref[...] - mu1 * scale1
    y1 = jnp.maximum(acc1 * scale1 + shift1, 0.0)

    # f1 lives only in VMEM; zero the shift-trick tail so conv2 never reads
    # uninitialised memory, then store the activated map in MXU dtype.
    tail2 = f1_act.shape[0] - M
    f1_act[0:M, :] = y1.astype(f1_act.dtype)
    f1_act[M:M + tail2, :] = jnp.zeros((tail2, C1), f1_act.dtype)

    # ---- conv2: 3x3 stride-1 valid, same shift trick (9 big-M matmuls).
    acc2 = jnp.zeros((M, C2), jnp.float32)
    for di in range(3):
        for dj in range(3):
            sh = di * Ws + dj
            acc2 = acc2 + jnp.dot(f1_act[sh:sh + M, :], w2_ref[di * 3 + dj],
                                  preferred_element_type=jnp.float32)

    # ---- BatchNorm(64) + ReLU + channel mean/max pooling: one whole-buffer pass.
    mask2 = m2_ref[...]
    cnt2 = float(N * H2 * W2)
    mu2 = jnp.sum(acc2 * mask2, axis=0, keepdims=True) / cnt2
    d2 = (acc2 - mu2) * mask2
    var2 = jnp.sum(d2 * d2, axis=0, keepdims=True) / cnt2
    scale2 = jax.lax.rsqrt(var2 + BN_EPS) * g2_ref[...]
    shift2 = b2_ref[...] - mu2 * scale2
    y2 = jnp.maximum(acc2 * scale2 + shift2, 0.0)
    avg_col = jnp.mean(y2, axis=1, keepdims=True)          # (M, 1)
    max_col = jnp.max(y2, axis=1, keepdims=True)           # (M, 1)

    # ---- Scatter the pooled columns into a lane-major (W on lanes) padded map
    # with one small selection matmul ("MXU transpose"): grid2d[n*Hs+i, j] = avg,
    # grid2d[n*Hs+i, Ws+j] = max.  pick_* zero out invalid rows so garbage never
    # leaks into the SpatialAttention window.
    picked = avg_col * pick_avg_ref[...] + max_col * pick_max_ref[...]   # (M, 2*Ws)
    grid2d = jnp.dot(sel_ref[...], picked,
                     preferred_element_type=jnp.float32)                 # (N*Hs, 2*Ws)

    pool_pad[...] = jnp.zeros(pool_pad.shape, pool_pad.dtype)
    for n in range(N):
        r0 = n * Hs
        pool_pad[0, n, 3:3 + H2, 3:3 + W2] = grid2d[r0:r0 + H2, 0:W2]
        pool_pad[1, n, 3:3 + H2, 3:3 + W2] = grid2d[r0:r0 + H2, Ws:Ws + W2]

    # ---- SpatialAttention 7x7 conv (Cout=1): 98-tap VPU MAC over lane-major
    # slices of the padded pooled map (a width-1 MXU matmul would waste the
    # array); sigmoid rides the EUP.  Output stays lane-dense (N, H2, W2).
    acc = jnp.zeros((N, H2, W2), jnp.float32)
    for c in range(2):
        for kh in range(7):
            for kw in range(7):
                w = wsa_ref[(c * 7 + kh) * 7 + kw]
                acc = acc + w * pool_pad[c, :, kh:kh + H2, kw:kw + W2]
    out_ref[...] = jax.nn.sigmoid(acc)


# ---------------------------------------------------------------------------
# Wrapper
# ---------------------------------------------------------------------------
def _pack_conv1_weight(w1_hwio):
    """(3,3,Cin,32) HWIO -> (4, 4*Cin, 32): per-tap matrices of the equivalent
    2x2 stride-1 conv over the space-to-depth input (unused grid positions = 0)."""
    _, _, cin, cout = w1_hwio.shape
    w = jnp.zeros((2, 2, 2, 2, cin, cout), w1_hwio.dtype)   # [ai, aj, bi, bj, c, o]
    for di in range(3):
        for dj in range(3):
            ai, bi = di // 2, di % 2
            aj, bj = dj // 2, dj % 2
            w = w.at[ai, aj, bi, bj].set(w1_hwio[di, dj])
    return w.reshape(4, 4 * cin, cout)


@partial(jax.jit, static_argnames=("mxu_dtype",))
def srm_pixel_attention(x_nchw, params, *, mxu_dtype=jnp.bfloat16):
    """Fused forward pass. `params` holds HWIO conv weights + BN affine params."""
    x = jnp.transpose(x_nchw, (0, 2, 3, 1)).astype(jnp.float32)       # NCHW -> NHWC
    N, H, W, Cin = x.shape
    assert H % 2 == 0 and W % 2 == 0, "space-to-depth path assumes even H, W"

    Hs, Ws = H // 2, W // 2
    H1, W1 = Hs - 1, Ws - 1
    H2, W2 = H1 - 2, W1 - 2
    C1, C2 = 32, 64
    M = N * Hs * Ws

    # Space-to-depth by 2 (pure relayout): stride-2 3x3 conv -> stride-1 2x2 conv.
    # Flatten rows and zero-pad a small tail so the in-kernel shifted reads of the
    # shift-trick conv never go out of bounds.
    xs = x.reshape(N, Hs, 2, Ws, 2, Cin).transpose(0, 1, 3, 2, 4, 5)
    xs = xs.reshape(M, 4 * Cin)
    tail1 = Ws + 2
    xs = jnp.pad(xs, ((0, tail1), (0, 0))).astype(mxu_dtype)

    w1 = _pack_conv1_weight(params["w1"]).astype(mxu_dtype)           # (4, 4*Cin, 32)
    w2 = params["w2"].reshape(9, C1, C2).astype(mxu_dtype)            # (9, 32, 64)
    wsa = jnp.transpose(params["w_sa"][..., 0], (2, 0, 1)).reshape(2 * 7 * 7)
    wsa = wsa.astype(jnp.float32)                                     # [c, kh, kw] flat

    g1 = params["g1"].reshape(1, C1).astype(jnp.float32)
    b1 = params["b1"].reshape(1, C1).astype(jnp.float32)
    g2 = params["g2"].reshape(1, C2).astype(jnp.float32)
    b2 = params["b2"].reshape(1, C2).astype(jnp.float32)

    # Compile-time index-structure constants (tiny, constant-folded by XLA):
    # valid-row masks for the BN batch stats and the selection/pick matrices that
    # turn the pooled (M,1) columns into a lane-major 2D map via one matmul.
    m = jnp.arange(M)
    i_m = (m // Ws) % Hs
    j_m = m % Ws
    mask1 = ((i_m < H1) & (j_m < W1)).astype(jnp.float32)[:, None]    # (M, 1)
    valid2 = (i_m < H2) & (j_m < W2)
    mask2 = valid2.astype(jnp.float32)[:, None]                       # (M, 1)
    lane = jnp.arange(2 * Ws)[None, :]
    pick_avg = ((lane == j_m[:, None]) & valid2[:, None]).astype(jnp.float32)
    pick_max = ((lane == (j_m[:, None] + Ws)) & valid2[:, None]).astype(jnp.float32)
    rows = jnp.arange(N * Hs)[:, None]
    sel = ((m[None, :] // Ws) == rows).astype(jnp.float32)            # (N*Hs, M)

    tail2 = 2 * Ws + 2
    vmem = pl.BlockSpec(memory_space=pltpu.MemorySpace.VMEM)
    smem = pl.BlockSpec(memory_space=pltpu.MemorySpace.SMEM)

    kernel = partial(_srm_pa_kernel, N=N, Hs=Hs, Ws=Ws)
    out = pl.pallas_call(
        kernel,
        out_shape=jax.ShapeDtypeStruct((N, H2, W2), jnp.float32),
        in_specs=[vmem] * 12 + [smem],
        out_specs=vmem,
        scratch_shapes=[
            pltpu.VMEM((M + tail2, C1), mxu_dtype),           # ReLU(BN(conv1))
            pltpu.VMEM((2, N, H2 + 6, W2 + 6), jnp.float32),  # padded [avg, max]
        ],
        compiler_params=pltpu.CompilerParams(
            vmem_limit_bytes=32 * 1024 * 1024),
    )(xs, w1, w2, g1, b1, g2, b2, sel, pick_avg, pick_max, mask1, mask2, wsa)

    # kernel output is already lane-dense [n, h, w]; just add the channel dim.
    return out[:, None, :, :]


# ---------------------------------------------------------------------------
# Pure-JAX reference (used only for the numerical self-check)
# ---------------------------------------------------------------------------
def srm_pixel_attention_reference(x_nchw, params):
    def bn_relu(x, g, b):
        mu = jnp.mean(x, axis=(0, 1, 2), keepdims=True)
        var = jnp.mean((x - mu) ** 2, axis=(0, 1, 2), keepdims=True)
        return jnp.maximum((x - mu) * jax.lax.rsqrt(var + BN_EPS) * g + b, 0.0)

    dn = ("NHWC", "HWIO", "NHWC")
    x = jnp.transpose(x_nchw, (0, 2, 3, 1)).astype(jnp.float32)
    f = jax.lax.conv_general_dilated(x, params["w1"], (2, 2), "VALID",
                                     dimension_numbers=dn)
    f = bn_relu(f, params["g1"], params["b1"])
    f = jax.lax.conv_general_dilated(f, params["w2"], (1, 1), "VALID",
                                     dimension_numbers=dn)
    f = bn_relu(f, params["g2"], params["b2"])
    pooled = jnp.concatenate([jnp.mean(f, axis=-1, keepdims=True),
                              jnp.max(f, axis=-1, keepdims=True)], axis=-1)
    att = jax.lax.conv_general_dilated(pooled, params["w_sa"], (1, 1),
                                       [(3, 3), (3, 3)], dimension_numbers=dn)
    return jnp.transpose(jax.nn.sigmoid(att), (0, 3, 1, 2))


def init_params(key, in_channels):
    k1, k2, k3 = jax.random.split(key, 3)
    # kaiming_normal_(a=1): gain = sqrt(2/(1+a^2)) = 1  =>  std = 1/sqrt(fan_in)
    w1 = jax.random.normal(k1, (3, 3, in_channels, 32), jnp.float32) / jnp.sqrt(
        in_channels * 9.0)
    w2 = jax.random.normal(k2, (3, 3, 32, 64), jnp.float32) / jnp.sqrt(32 * 9.0)
    w_sa = jax.random.normal(k3, (7, 7, 2, 1), jnp.float32) / jnp.sqrt(2 * 49.0)
    return {
        "w1": w1, "w2": w2, "w_sa": w_sa,                 # HWIO conv weights
        "g1": jnp.ones((32,), jnp.float32), "b1": jnp.zeros((32,), jnp.float32),
        "g2": jnp.ones((64,), jnp.float32), "b2": jnp.zeros((64,), jnp.float32),
    }


if __name__ == "__main__":
    key = jax.random.PRNGKey(0)
    kp, kx = jax.random.split(key)

    B, C_IN, H, W = 2, 4, 16, 16
    params = init_params(kp, C_IN)
    x = jax.random.normal(kx, (B, C_IN, H, W), jnp.float32)   # NCHW like PyTorch

    # main path: bf16 MXU operands, f32 epilogue
    out = jax.block_until_ready(srm_pixel_attention(x, params))
    assert out.shape == (B, 1, 5, 5), out.shape
    assert bool(jnp.all(jnp.isfinite(out)))
    assert bool(jnp.all((out >= 0.0) & (out <= 1.0)))         # sigmoid range

    # numerical self-check of the fused kernel against plain XLA
    ref = srm_pixel_attention_reference(x, params)
    out_f32 = jax.block_until_ready(
        srm_pixel_attention(x, params, mxu_dtype=jnp.float32))
    assert bool(jnp.all(jnp.abs(out_f32 - ref) < 2e-2)), \
        float(jnp.max(jnp.abs(out_f32 - ref)))
    assert bool(jnp.all(jnp.abs(out.astype(jnp.float32) - ref) < 5e-2))

    print("KERNEL_OK")
</pallas_src>

<mosaic_0001>
module attributes {stable_mosaic.version = 11 : i64} {
  func.func @_srm_pa_kernel(%arg0: memref<138x16xbf16, #tpu.memory_space<vmem>>, %arg1: memref<4x16x32xbf16, #tpu.memory_space<vmem>>, %arg2: memref<9x32x64xbf16, #tpu.memory_space<vmem>>, %arg3: memref<1x32xf32, #tpu.memory_space<vmem>>, %arg4: memref<1x32xf32, #tpu.memory_space<vmem>>, %arg5: memref<1x64xf32, #tpu.memory_space<vmem>>, %arg6: memref<1x64xf32, #tpu.memory_space<vmem>>, %arg7: memref<16x128xf32, #tpu.memory_space<vmem>>, %arg8: memref<128x16xf32, #tpu.memory_space<vmem>>, %arg9: memref<128x16xf32, #tpu.memory_space<vmem>>, %arg10: memref<128x1xf32, #tpu.memory_space<vmem>>, %arg11: memref<128x1xf32, #tpu.memory_space<vmem>>, %arg12: memref<98xf32, #tpu.memory_space<smem>>, %arg13: memref<2x5x5xf32, #tpu.memory_space<vmem>>, %arg14: memref<146x32xbf16, #tpu.memory_space<vmem>>, %arg15: memref<2x2x11x11xf32, #tpu.memory_space<vmem>>) attributes {dimension_semantics = [], scalar_prefetch = 0 : i64, scratch_operands = 2 : i64, tpu.core_type = #tpu.core_type<tc>} {
    %cst = arith.constant 0.000000e+00 : f32
    %0 = vector.broadcast %cst : f32 to vector<128x32xf32>
    %c0 = arith.constant 0 : index
    %c0_0 = arith.constant 0 : index
    %1 = vector.load %arg0[%c0, %c0_0] : memref<138x16xbf16, #tpu.memory_space<vmem>>, vector<128x16xbf16>
    %c0_1 = arith.constant 0 : index
    %c0_2 = arith.constant 0 : index
    %c0_3 = arith.constant 0 : index
    %2 = vector.load %arg1[%c0_1, %c0_2, %c0_3] : memref<4x16x32xbf16, #tpu.memory_space<vmem>>, vector<1x16x32xbf16>
    %3 = vector.shape_cast %2 : vector<1x16x32xbf16> to vector<16x32xbf16>
    %cst_4 = arith.constant dense<0.000000e+00> : vector<128x32xf32>
    %4 = tpu.matmul %1, %3, %cst_4 {dimension_numbers = #tpu.dot_dimension_numbers<[1], [0], [0], [1], [0, 0, 1, 1], [], []>} : vector<128x16xbf16>, vector<16x32xbf16>, vector<128x32xf32> -> vector<128x32xf32>
    %5 = arith.addf %0, %4 : vector<128x32xf32>
    %c1 = arith.constant 1 : index
    %c0_5 = arith.constant 0 : index
    %6 = vector.load %arg0[%c1, %c0_5] : memref<138x16xbf16, #tpu.memory_space<vmem>>, vector<128x16xbf16>
    %c1_6 = arith.constant 1 : index
    %c0_7 = arith.constant 0 : index
    %c0_8 = arith.constant 0 : index
    %7 = vector.load %arg1[%c1_6, %c0_7, %c0_8] : memref<4x16x32xbf16, #tpu.memory_space<vmem>>, vector<1x16x32xbf16>
    %8 = vector.shape_cast %7 : vector<1x16x32xbf16> to vector<16x32xbf16>
    %cst_9 = arith.constant dense<0.000000e+00> : vector<128x32xf32>
    %9 = tpu.matmul %6, %8, %cst_9 {dimension_numbers = #tpu.dot_dimension_numbers<[1], [0], [0], [1], [0, 0, 1, 1], [], []>} : vector<128x16xbf16>, vector<16x32xbf16>, vector<128x32xf32> -> vector<128x32xf32>
    %10 = arith.addf %5, %9 : vector<128x32xf32>
    %c8 = arith.constant 8 : index
    %c0_10 = arith.constant 0 : index
    %11 = vector.load %arg0[%c8, %c0_10] : memref<138x16xbf16, #tpu.memory_space<vmem>>, vector<128x16xbf16>
    %c2 = arith.constant 2 : index
    %c0_11 = arith.constant 0 : index
    %c0_12 = arith.constant 0 : index
    %12 = vector.load %arg1[%c2, %c0_11, %c0_12] : memref<4x16x32xbf16, #tpu.memory_space<vmem>>, vector<1x16x32xbf16>
    %13 = vector.shape_cast %12 : vector<1x16x32xbf16> to vector<16x32xbf16>
    %cst_13 = arith.constant dense<0.000000e+00> : vector<128x32xf32>
    %14 = tpu.matmul %11, %13, %cst_13 {dimension_numbers = #tpu.dot_dimension_numbers<[1], [0], [0], [1], [0, 0, 1, 1], [], []>} : vector<128x16xbf16>, vector<16x32xbf16>, vector<128x32xf32> -> vector<128x32xf32>
    %15 = arith.addf %10, %14 : vector<128x32xf32>
    %c9 = arith.constant 9 : index
    %c0_14 = arith.constant 0 : index
    %16 = vector.load %arg0[%c9, %c0_14] : memref<138x16xbf16, #tpu.memory_space<vmem>>, vector<128x16xbf16>
    %c3 = arith.constant 3 : index
    %c0_15 = arith.constant 0 : index
    %c0_16 = arith.constant 0 : index
    %17 = vector.load %arg1[%c3, %c0_15, %c0_16] : memref<4x16x32xbf16, #tpu.memory_space<vmem>>, vector<1x16x32xbf16>
    %18 = vector.shape_cast %17 : vector<1x16x32xbf16> to vector<16x32xbf16>
    %cst_17 = arith.constant dense<0.000000e+00> : vector<128x32xf32>
    %19 = tpu.matmul %16, %18, %cst_17 {dimension_numbers = #tpu.dot_dimension_numbers<[1], [0], [0], [1], [0, 0, 1, 1], [], []>} : vector<128x16xbf16>, vector<16x32xbf16>, vector<128x32xf32> -> vector<128x32xf32>
    %20 = arith.addf %15, %19 : vector<128x32xf32>
    %c0_18 = arith.constant 0 : index
    %c0_19 = arith.constant 0 : index
    %21 = vector.load %arg10[%c0_18, %c0_19] : memref<128x1xf32, #tpu.memory_space<vmem>>, vector<128x1xf32>
    %22 = vector.broadcast %21 : vector<128x1xf32> to vector<128x32xf32>
    %23 = arith.mulf %20, %22 : vector<128x32xf32>
    %cst_20 = arith.constant dense<0.000000e+00> : vector<32xf32>
    %24 = vector.multi_reduction <add>, %23, %cst_20 [0] : vector<128x32xf32> to vector<32xf32>
    %25 = vector.shape_cast %24 : vector<32xf32> to vector<1x32xf32>
    %cst_21 = arith.constant 9.800000e+01 : f32
    %26 = vector.broadcast %cst_21 : f32 to vector<1x32xf32>
    %27 = arith.divf %25, %26 : vector<1x32xf32>
    %28 = vector.broadcast %27 : vector<1x32xf32> to vector<128x32xf32>
    %29 = arith.subf %20, %28 : vector<128x32xf32>
    %30 = vector.broadcast %21 : vector<128x1xf32> to vector<128x32xf32>
    %31 = arith.mulf %29, %30 : vector<128x32xf32>
    %32 = arith.mulf %31, %31 : vector<128x32xf32>
    %cst_22 = arith.constant dense<0.000000e+00> : vector<32xf32>
    %33 = vector.multi_reduction <add>, %32, %cst_22 [0] : vector<128x32xf32> to vector<32xf32>
    %34 = vector.shape_cast %33 : vector<32xf32> to vector<1x32xf32>
    %cst_23 = arith.constant 9.800000e+01 : f32
    %35 = vector.broadcast %cst_23 : f32 to vector<1x32xf32>
    %36 = arith.divf %34, %35 : vector<1x32xf32>
    %cst_24 = arith.constant 9.99999974E-6 : f32
    %37 = vector.broadcast %cst_24 : f32 to vector<1x32xf32>
    %38 = arith.addf %36, %37 : vector<1x32xf32>
    %39 = math.rsqrt %38 : vector<1x32xf32>
    %c0_25 = arith.constant 0 : index
    %c0_26 = arith.constant 0 : index
    %40 = vector.load %arg3[%c0_25, %c0_26] : memref<1x32xf32, #tpu.memory_space<vmem>>, vector<1x32xf32>
    %41 = arith.mulf %39, %40 : vector<1x32xf32>
    %c0_27 = arith.constant 0 : index
    %c0_28 = arith.constant 0 : index
    %42 = vector.load %arg4[%c0_27, %c0_28] : memref<1x32xf32, #tpu.memory_space<vmem>>, vector<1x32xf32>
    %43 = arith.mulf %27, %41 : vector<1x32xf32>
    %44 = arith.subf %42, %43 : vector<1x32xf32>
    %45 = vector.broadcast %41 : vector<1x32xf32> to vector<128x32xf32>
    %46 = arith.mulf %20, %45 : vector<128x32xf32>
    %47 = vector.broadcast %44 : vector<1x32xf32> to vector<128x32xf32>
    %48 = arith.addf %46, %47 : vector<128x32xf32>
    %cst_29 = arith.constant 0.000000e+00 : f32
    %49 = vector.broadcast %cst_29 : f32 to vector<128x32xf32>
    %50 = arith.maximumf %48, %49 : vector<128x32xf32>
    %51 = arith.truncf %50 : vector<128x32xf32> to vector<128x32xbf16>
    %c0_30 = arith.constant 0 : index
    %c0_31 = arith.constant 0 : index
    %52 = vector.load %arg14[%c0_30, %c0_31] : memref<146x32xbf16, #tpu.memory_space<vmem>>, vector<128x32xbf16>
    tpu.vector_store %arg14[%c0_30, %c0_31], %51 {strides = array<i32>} : memref<146x32xbf16, #tpu.memory_space<vmem>>, vector<128x32xbf16>,
    %cst_32 = arith.constant 0.000000e+00 : bf16
    %53 = vector.broadcast %cst_32 : bf16 to vector<18x32xbf16>
    %c128 = arith.constant 128 : index
    %c0_33 = arith.constant 0 : index
    %54 = vector.load %arg14[%c128, %c0_33] : memref<146x32xbf16, #tpu.memory_space<vmem>>, vector<18x32xbf16>
    tpu.vector_store %arg14[%c128, %c0_33], %53 {strides = array<i32>} : memref<146x32xbf16, #tpu.memory_space<vmem>>, vector<18x32xbf16>,
    %cst_34 = arith.constant 0.000000e+00 : f32
    %55 = vector.broadcast %cst_34 : f32 to vector<128x64xf32>
    %c0_35 = arith.constant 0 : index
    %c0_36 = arith.constant 0 : index
    %56 = vector.load %arg14[%c0_35, %c0_36] : memref<146x32xbf16, #tpu.memory_space<vmem>>, vector<128x32xbf16>
    %c0_37 = arith.constant 0 : index
    %c0_38 = arith.constant 0 : index
    %c0_39 = arith.constant 0 : index
    %57 = vector.load %arg2[%c0_37, %c0_38, %c0_39] : memref<9x32x64xbf16, #tpu.memory_space<vmem>>, vector<1x32x64xbf16>
    %58 = vector.shape_cast %57 : vector<1x32x64xbf16> to vector<32x64xbf16>
    %cst_40 = arith.constant dense<0.000000e+00> : vector<128x64xf32>
    %59 = tpu.matmul %56, %58, %cst_40 {dimension_numbers = #tpu.dot_dimension_numbers<[1], [0], [0], [1], [0, 0, 1, 1], [], []>} : vector<128x32xbf16>, vector<32x64xbf16>, vector<128x64xf32> -> vector<128x64xf32>
    %60 = arith.addf %55, %59 : vector<128x64xf32>
    %c1_41 = arith.constant 1 : index
    %c0_42 = arith.constant 0 : index
    %61 = vector.load %arg14[%c1_41, %c0_42] : memref<146x32xbf16, #tpu.memory_space<vmem>>, vector<128x32xbf16>
    %c1_43 = arith.constant 1 : index
    %c0_44 = arith.constant 0 : index
    %c0_45 = arith.constant 0 : index
    %62 = vector.load %arg2[%c1_43, %c0_44, %c0_45] : memref<9x32x64xbf16, #tpu.memory_space<vmem>>, vector<1x32x64xbf16>
    %63 = vector.shape_cast %62 : vector<1x32x64xbf16> to vector<32x64xbf16>
    %cst_46 = arith.constant dense<0.000000e+00> : vector<128x64xf32>
    %64 = tpu.matmul %61, %63, %cst_46 {dimension_numbers = #tpu.dot_dimension_numbers<[1], [0], [0], [1], [0, 0, 1, 1], [], []>} : vector<128x32xbf16>, vector<32x64xbf16>, vector<128x64xf32> -> vector<128x64xf32>
    %65 = arith.addf %60, %64 : vector<128x64xf32>
    %c2_47 = arith.constant 2 : index
    %c0_48 = arith.constant 0 : index
    %66 = vector.load %arg14[%c2_47, %c0_48] : memref<146x32xbf16, #tpu.memory_space<vmem>>, vector<128x32xbf16>
    %c2_49 = arith.constant 2 : index
    %c0_50 = arith.constant 0 : index
    %c0_51 = arith.constant 0 : index
    %67 = vector.load %arg2[%c2_49, %c0_50, %c0_51] : memref<9x32x64xbf16, #tpu.memory_space<vmem>>, vector<1x32x64xbf16>
    %68 = vector.shape_cast %67 : vector<1x32x64xbf16> to vector<32x64xbf16>
    %cst_52 = arith.constant dense<0.000000e+00> : vector<128x64xf32>
    %69 = tpu.matmul %66, %68, %cst_52 {dimension_numbers = #tpu.dot_dimension_numbers<[1], [0], [0], [1], [0, 0, 1, 1], [], []>} : vector<128x32xbf16>, vector<32x64xbf16>, vector<128x64xf32> -> vector<128x64xf32>
    %70 = arith.addf %65, %69 : vector<128x64xf32>
    %c8_53 = arith.constant 8 : index
    %c0_54 = arith.constant 0 : index
    %71 = vector.load %arg14[%c8_53, %c0_54] : memref<146x32xbf16, #tpu.memory_space<vmem>>, vector<128x32xbf16>
    %c3_55 = arith.constant 3 : index
    %c0_56 = arith.constant 0 : index
    %c0_57 = arith.constant 0 : index
    %72 = vector.load %arg2[%c3_55, %c0_56, %c0_57] : memref<9x32x64xbf16, #tpu.memory_space<vmem>>, vector<1x32x64xbf16>
    %73 = vector.shape_cast %72 : vector<1x32x64xbf16> to vector<32x64xbf16>
    %cst_58 = arith.constant dense<0.000000e+00> : vector<128x64xf32>
    %74 = tpu.matmul %71, %73, %cst_58 {dimension_numbers = #tpu.dot_dimension_numbers<[1], [0], [0], [1], [0, 0, 1, 1], [], []>} : vector<128x32xbf16>, vector<32x64xbf16>, vector<128x64xf32> -> vector<128x64xf32>
    %75 = arith.addf %70, %74 : vector<128x64xf32>
    %c9_59 = arith.constant 9 : index
    %c0_60 = arith.constant 0 : index
    %76 = vector.load %arg14[%c9_59, %c0_60] : memref<146x32xbf16, #tpu.memory_space<vmem>>, vector<128x32xbf16>
    %c4 = arith.constant 4 : index
    %c0_61 = arith.constant 0 : index
    %c0_62 = arith.constant 0 : index
    %77 = vector.load %arg2[%c4, %c0_61, %c0_62] : memref<9x32x64xbf16, #tpu.memory_space<vmem>>, vector<1x32x64xbf16>
    %78 = vector.shape_cast %77 : vector<1x32x64xbf16> to vector<32x64xbf16>
    %cst_63 = arith.constant dense<0.000000e+00> : vector<128x64xf32>
    %79 = tpu.matmul %76, %78, %cst_63 {dimension_numbers = #tpu.dot_dimension_numbers<[1], [0], [0], [1], [0, 0, 1, 1], [], []>} : vector<128x32xbf16>, vector<32x64xbf16>, vector<128x64xf32> -> vector<128x64xf32>
    %80 = arith.addf %75, %79 : vector<128x64xf32>
    %c10 = arith.constant 10 : index
    %c0_64 = arith.constant 0 : index
    %81 = vector.load %arg14[%c10, %c0_64] : memref<146x32xbf16, #tpu.memory_space<vmem>>, vector<128x32xbf16>
    %c5 = arith.constant 5 : index
    %c0_65 = arith.constant 0 : index
    %c0_66 = arith.constant 0 : index
    %82 = vector.load %arg2[%c5, %c0_65, %c0_66] : memref<9x32x64xbf16, #tpu.memory_space<vmem>>, vector<1x32x64xbf16>
    %83 = vector.shape_cast %82 : vector<1x32x64xbf16> to vector<32x64xbf16>
    %cst_67 = arith.constant dense<0.000000e+00> : vector<128x64xf32>
    %84 = tpu.matmul %81, %83, %cst_67 {dimension_numbers = #tpu.dot_dimension_numbers<[1], [0], [0], [1], [0, 0, 1, 1], [], []>} : vector<128x32xbf16>, vector<32x64xbf16>, vector<128x64xf32> -> vector<128x64xf32>
    %85 = arith.addf %80, %84 : vector<128x64xf32>
    %c16 = arith.constant 16 : index
    %c0_68 = arith.constant 0 : index
    %86 = vector.load %arg14[%c16, %c0_68] : memref<146x32xbf16, #tpu.memory_space<vmem>>, vector<128x32xbf16>
    %c6 = arith.constant 6 : index
    %c0_69 = arith.constant 0 : index
    %c0_70 = arith.constant 0 : index
    %87 = vector.load %arg2[%c6, %c0_69, %c0_70] : memref<9x32x64xbf16, #tpu.memory_space<vmem>>, vector<1x32x64xbf16>
    %88 = vector.shape_cast %87 : vector<1x32x64xbf16> to vector<32x64xbf16>
    %cst_71 = arith.constant dense<0.000000e+00> : vector<128x64xf32>
    %89 = tpu.matmul %86, %88, %cst_71 {dimension_numbers = #tpu.dot_dimension_numbers<[1], [0], [0], [1], [0, 0, 1, 1], [], []>} : vector<128x32xbf16>, vector<32x64xbf16>, vector<128x64xf32> -> vector<128x64xf32>
    %90 = arith.addf %85, %89 : vector<128x64xf32>
    %c17 = arith.constant 17 : index
    %c0_72 = arith.constant 0 : index
    %91 = vector.load %arg14[%c17, %c0_72] : memref<146x32xbf16, #tpu.memory_space<vmem>>, vector<128x32xbf16>
    %c7 = arith.constant 7 : index
    %c0_73 = arith.constant 0 : index
    %c0_74 = arith.constant 0 : index
    %92 = vector.load %arg2[%c7, %c0_73, %c0_74] : memref<9x32x64xbf16, #tpu.memory_space<vmem>>, vector<1x32x64xbf16>
    %93 = vector.shape_cast %92 : vector<1x32x64xbf16> to vector<32x64xbf16>
    %cst_75 = arith.constant dense<0.000000e+00> : vector<128x64xf32>
    %94 = tpu.matmul %91, %93, %cst_75 {dimension_numbers = #tpu.dot_dimension_numbers<[1], [0], [0], [1], [0, 0, 1, 1], [], []>} : vector<128x32xbf16>, vector<32x64xbf16>, vector<128x64xf32> -> vector<128x64xf32>
    %95 = arith.addf %90, %94 : vector<128x64xf32>
    %c18 = arith.constant 18 : index
    %c0_76 = arith.constant 0 : index
    %96 = vector.load %arg14[%c18, %c0_76] : memref<146x32xbf16, #tpu.memory_space<vmem>>, vector<128x32xbf16>
    %c8_77 = arith.constant 8 : index
    %c0_78 = arith.constant 0 : index
    %c0_79 = arith.constant 0 : index
    %97 = vector.load %arg2[%c8_77, %c0_78, %c0_79] : memref<9x32x64xbf16, #tpu.memory_space<vmem>>, vector<1x32x64xbf16>
    %98 = vector.shape_cast %97 : vector<1x32x64xbf16> to vector<32x64xbf16>
    %cst_80 = arith.constant dense<0.000000e+00> : vector<128x64xf32>
    %99 = tpu.matmul %96, %98, %cst_80 {dimension_numbers = #tpu.dot_dimension_numbers<[1], [0], [0], [1], [0, 0, 1, 1], [], []>} : vector<128x32xbf16>, vector<32x64xbf16>, vector<128x64xf32> -> vector<128x64xf32>
    %100 = arith.addf %95, %99 : vector<128x64xf32>
    %c0_81 = arith.constant 0 : index
    %c0_82 = arith.constant 0 : index
    %101 = vector.load %arg11[%c0_81, %c0_82] : memref<128x1xf32, #tpu.memory_space<vmem>>, vector<128x1xf32>
    %102 = vector.broadcast %101 : vector<128x1xf32> to vector<128x64xf32>
    %103 = arith.mulf %100, %102 : vector<128x64xf32>
    %cst_83 = arith.constant dense<0.000000e+00> : vector<64xf32>
    %104 = vector.multi_reduction <add>, %103, %cst_83 [0] : vector<128x64xf32> to vector<64xf32>
    %105 = vector.shape_cast %104 : vector<64xf32> to vector<1x64xf32>
    %cst_84 = arith.constant 5.000000e+01 : f32
    %106 = vector.broadcast %cst_84 : f32 to vector<1x64xf32>
    %107 = arith.divf %105, %106 : vector<1x64xf32>
    %108 = vector.broadcast %107 : vector<1x64xf32> to vector<128x64xf32>
    %109 = arith.subf %100, %108 : vector<128x64xf32>
    %110 = vector.broadcast %101 : vector<128x1xf32> to vector<128x64xf32>
    %111 = arith.mulf %109, %110 : vector<128x64xf32>
    %112 = arith.mulf %111, %111 : vector<128x64xf32>
    %cst_85 = arith.constant dense<0.000000e+00> : vector<64xf32>
    %113 = vector.multi_reduction <add>, %112, %cst_85 [0] : vector<128x64xf32> to vector<64xf32>
    %114 = vector.shape_cast %113 : vector<64xf32> to vector<1x64xf32>
    %cst_86 = arith.constant 5.000000e+01 : f32
    %115 = vector.broadcast %cst_86 : f32 to vector<1x64xf32>
    %116 = arith.divf %114, %115 : vector<1x64xf32>
    %cst_87 = arith.constant 9.99999974E-6 : f32
    %117 = vector.broadcast %cst_87 : f32 to vector<1x64xf32>
    %118 = arith.addf %116, %117 : vector<1x64xf32>
    %119 = math.rsqrt %118 : vector<1x64xf32>
    %c0_88 = arith.constant 0 : index
    %c0_89 = arith.constant 0 : index
    %120 = vector.load %arg5[%c0_88, %c0_89] : memref<1x64xf32, #tpu.memory_space<vmem>>, vector<1x64xf32>
    %121 = arith.mulf %119, %120 : vector<1x64xf32>
    %c0_90 = arith.constant 0 : index
    %c0_91 = arith.constant 0 : index
    %122 = vector.load %arg6[%c0_90, %c0_91] : memref<1x64xf32, #tpu.memory_space<vmem>>, vector<1x64xf32>
    %123 = arith.mulf %107, %121 : vector<1x64xf32>
    %124 = arith.subf %122, %123 : vector<1x64xf32>
    %125 = vector.broadcast %121 : vector<1x64xf32> to vector<128x64xf32>
    %126 = arith.mulf %100, %125 : vector<128x64xf32>
    %127 = vector.broadcast %124 : vector<1x64xf32> to vector<128x64xf32>
    %128 = arith.addf %126, %127 : vector<128x64xf32>
    %cst_92 = arith.constant 0.000000e+00 : f32
    %129 = vector.broadcast %cst_92 : f32 to vector<128x64xf32>
    %130 = arith.maximumf %128, %129 : vector<128x64xf32>
    %cst_93 = arith.constant dense<0.000000e+00> : vector<128xf32>
    %131 = vector.multi_reduction <add>, %130, %cst_93 [1] : vector<128x64xf32> to vector<128xf32>
    %132 = vector.shape_cast %131 : vector<128xf32> to vector<128x1xf32>
    %cst_94 = arith.constant 6.400000e+01 : f32
    %133 = vector.broadcast %cst_94 : f32 to vector<128x1xf32>
    %134 = arith.divf %132, %133 : vector<128x1xf32>
    %cst_95 = arith.constant dense<0xFF800000> : vector<128xf32>
    %135 = vector.multi_reduction <maximumf>, %130, %cst_95 [1] : vector<128x64xf32> to vector<128xf32>
    %136 = vector.shape_cast %135 : vector<128xf32> to vector<128x1xf32>
    %c0_96 = arith.constant 0 : index
    %c0_97 = arith.constant 0 : index
    %137 = vector.load %arg8[%c0_96, %c0_97] : memref<128x16xf32, #tpu.memory_space<vmem>>, vector<128x16xf32>
    %138 = vector.broadcast %134 : vector<128x1xf32> to vector<128x16xf32>
    %139 = arith.mulf %138, %137 : vector<128x16xf32>
    %c0_98 = arith.constant 0 : index
    %c0_99 = arith.constant 0 : index
    %140 = vector.load %arg9[%c0_98, %c0_99] : memref<128x16xf32, #tpu.memory_space<vmem>>, vector<128x16xf32>
    %141 = vector.broadcast %136 : vector<128x1xf32> to vector<128x16xf32>
    %142 = arith.mulf %141, %140 : vector<128x16xf32>
    %143 = arith.addf %139, %142 : vector<128x16xf32>
    %c0_100 = arith.constant 0 : index
    %c0_101 = arith.constant 0 : index
    %144 = vector.load %arg7[%c0_100, %c0_101] : memref<16x128xf32, #tpu.memory_space<vmem>>, vector<16x128xf32>
    %cst_102 = arith.constant dense<0.000000e+00> : vector<16x16xf32>
    %145 = tpu.matmul %144, %143, %cst_102 {dimension_numbers = #tpu.dot_dimension_numbers<[1], [0], [0], [1], [0, 0, 1, 1], [], []>} : vector<16x128xf32>, vector<128x16xf32>, vector<16x16xf32> -> vector<16x16xf32>
    %cst_103 = arith.constant 0.000000e+00 : f32
    %146 = vector.broadcast %cst_103 : f32 to vector<2x2x11x11xf32>
    %c0_104 = arith.constant 0 : index
    %c0_105 = arith.constant 0 : index
    %c0_106 = arith.constant 0 : index
    %c0_107 = arith.constant 0 : index
    %147 = vector.load %arg15[%c0_104, %c0_105, %c0_106, %c0_107] : memref<2x2x11x11xf32, #tpu.memory_space<vmem>>, vector<2x2x11x11xf32>
    tpu.vector_store %arg15[%c0_104, %c0_105, %c0_106, %c0_107], %146 {strides = array<i32>} : memref<2x2x11x11xf32, #tpu.memory_space<vmem>>, vector<2x2x11x11xf32>,
    %148 = vector.extract_strided_slice %145 {offsets = [0, 0], sizes = [5, 5], strides = [1, 1]} : vector<16x16xf32> to vector<5x5xf32>
    %c0_108 = arith.constant 0 : index
    %c0_109 = arith.constant 0 : index
    %c3_110 = arith.constant 3 : index
    %c3_111 = arith.constant 3 : index
    %149 = vector.load %arg15[%c0_108, %c0_109, %c3_110, %c3_111] : memref<2x2x11x11xf32, #tpu.memory_space<vmem>>, vector<1x1x5x5xf32>
    %150 = vector.shape_cast %149 : vector<1x1x5x5xf32> to vector<5x5xf32>
    %151 = vector.shape_cast %148 : vector<5x5xf32> to vector<1x1x5x5xf32>
    tpu.vector_store %arg15[%c0_108, %c0_109, %c3_110, %c3_111], %151 {strides = array<i32>} : memref<2x2x11x11xf32, #tpu.memory_space<vmem>>, vector<1x1x5x5xf32>,
    %152 = vector.extract_strided_slice %145 {offsets = [0, 8], sizes = [5, 5], strides = [1, 1]} : vector<16x16xf32> to vector<5x5xf32>
    %c1_112 = arith.constant 1 : index
    %c0_113 = arith.constant 0 : index
    %c3_114 = arith.constant 3 : index
    %c3_115 = arith.constant 3 : index
    %153 = vector.load %arg15[%c1_112, %c0_113, %c3_114, %c3_115] : memref<2x2x11x11xf32, #tpu.memory_space<vmem>>, vector<1x1x5x5xf32>
    %154 = vector.shape_cast %153 : vector<1x1x5x5xf32> to vector<5x5xf32>
    %155 = vector.shape_cast %152 : vector<5x5xf32> to vector<1x1x5x5xf32>
    tpu.vector_store %arg15[%c1_112, %c0_113, %c3_114, %c3_115], %155 {strides = array<i32>} : memref<2x2x11x11xf32, #tpu.memory_space<vmem>>, vector<1x1x5x5xf32>,
    %156 = vector.extract_strided_slice %145 {offsets = [8, 0], sizes = [5, 5], strides = [1, 1]} : vector<16x16xf32> to vector<5x5xf32>
    %c0_116 = arith.constant 0 : index
    %c1_117 = arith.constant 1 : index
    %c3_118 = arith.constant 3 : index
    %c3_119 = arith.constant 3 : index
    %157 = vector.load %arg15[%c0_116, %c1_117, %c3_118, %c3_119] : memref<2x2x11x11xf32, #tpu.memory_space<vmem>>, vector<1x1x5x5xf32>
    %158 = vector.shape_cast %157 : vector<1x1x5x5xf32> to vector<5x5xf32>
    %159 = vector.shape_cast %156 : vector<5x5xf32> to vector<1x1x5x5xf32>
    tpu.vector_store %arg15[%c0_116, %c1_117, %c3_118, %c3_119], %159 {strides = array<i32>} : memref<2x2x11x11xf32, #tpu.memory_space<vmem>>, vector<1x1x5x5xf32>,
    %160 = vector.extract_strided_slice %145 {offsets = [8, 8], sizes = [5, 5], strides = [1, 1]} : vector<16x16xf32> to vector<5x5xf32>
    %c1_120 = arith.constant 1 : index
    %c1_121 = arith.constant 1 : index
    %c3_122 = arith.constant 3 : index
    %c3_123 = arith.constant 3 : index
    %161 = vector.load %arg15[%c1_120, %c1_121, %c3_122, %c3_123] : memref<2x2x11x11xf32, #tpu.memory_space<vmem>>, vector<1x1x5x5xf32>
    %162 = vector.shape_cast %161 : vector<1x1x5x5xf32> to vector<5x5xf32>
    %163 = vector.shape_cast %160 : vector<5x5xf32> to vector<1x1x5x5xf32>
    tpu.vector_store %arg15[%c1_120, %c1_121, %c3_122, %c3_123], %163 {strides = array<i32>} : memref<2x2x11x11xf32, #tpu.memory_space<vmem>>, vector<1x1x5x5xf32>,
    %cst_124 = arith.constant 0.000000e+00 : f32
    %164 = vector.broadcast %cst_124 : f32 to vector<2x5x5xf32>
    %c0_125 = arith.constant 0 : index
    %165 = memref.load %arg12[%c0_125] : memref<98xf32, #tpu.memory_space<smem>>
    %c0_126 = arith.constant 0 : index
    %c0_127 = arith.constant 0 : index
    %c0_128 = arith.constant 0 : index
    %c0_129 = arith.constant 0 : index
    %166 = vector.load %arg15[%c0_126, %c0_127, %c0_128, %c0_129] : memref<2x2x11x11xf32, #tpu.memory_space<vmem>>, vector<1x2x5x5xf32>
    %167 = vector.shape_cast %166 : vector<1x2x5x5xf32> to vector<2x5x5xf32>
    %168 = vector.broadcast %165 : f32 to vector<2x5x5xf32>
    %169 = arith.mulf %168, %167 : vector<2x5x5xf32>
    %170 = arith.addf %164, %169 : vector<2x5x5xf32>
    %c1_130 = arith.constant 1 : index
    %171 = memref.load %arg12[%c1_130] : memref<98xf32, #tpu.memory_space<smem>>
    %c0_131 = arith.constant 0 : index
    %c0_132 = arith.constant 0 : index
    %c0_133 = arith.constant 0 : index
    %c1_134 = arith.constant 1 : index
    %172 = vector.load %arg15[%c0_131, %c0_132, %c0_133, %c1_134] : memref<2x2x11x11xf32, #tpu.memory_space<vmem>>, vector<1x2x5x5xf32>
    %173 = vector.shape_cast %172 : vector<1x2x5x5xf32> to vector<2x5x5xf32>
    %174 = vector.broadcast %171 : f32 to vector<2x5x5xf32>
    %175 = arith.mulf %174, %173 : vector<2x5x5xf32>
    %176 = arith.addf %170, %175 : vector<2x5x5xf32>
    %c2_135 = arith.constant 2 : index
    %177 = memref.load %arg12[%c2_135] : memref<98xf32, #tpu.memory_space<smem>>
    %c0_136 = arith.constant 0 : index
    %c0_137 = arith.constant 0 : index
    %c0_138 = arith.constant 0 : index
    %c2_139 = arith.constant 2 : index
    %178 = vector.load %arg15[%c0_136, %c0_137, %c0_138, %c2_139] : memref<2x2x11x11xf32, #tpu.memory_space<vmem>>, vector<1x2x5x5xf32>
    %179 = vector.shape_cast %178 : vector<1x2x5x5xf32> to vector<2x5x5xf32>
    %180 = vector.broadcast %177 : f32 to vector<2x5x5xf32>
    %181 = arith.mulf %180, %179 : vector<2x5x5xf32>
    %182 = arith.addf %176, %181 : vector<2x5x5xf32>
    %c3_140 = arith.constant 3 : index
    %183 = memref.load %arg12[%c3_140] : memref<98xf32, #tpu.memory_space<smem>>
    %c0_141 = arith.constant 0 : index
    %c0_142 = arith.constant 0 : index
    %c0_143 = arith.constant 0 : index
    %c3_144 = arith.constant 3 : index
    %184 = vector.load %arg15[%c0_141, %c0_142, %c0_143, %c3_144] : memref<2x2x11x11xf32, #tpu.memory_space<vmem>>, vector<1x2x5x5xf32>
    %185 = vector.shape_cast %184 : vector<1x2x5x5xf32> to vector<2x5x5xf32>
    %186 = vector.broadcast %183 : f32 to vector<2x5x5xf32>
    %187 = arith.mulf %186, %185 : vector<2x5x5xf32>
    %188 = arith.addf %182, %187 : vector<2x5x5xf32>
    %c4_145 = arith.constant 4 : index
    %189 = memref.load %arg12[%c4_145] : memref<98xf32, #tpu.memory_space<smem>>
    %c0_146 = arith.constant 0 : index
    %c0_147 = arith.constant 0 : index
    %c0_148 = arith.constant 0 : index
    %c4_149 = arith.constant 4 : index
    %190 = vector.load %arg15[%c0_146, %c0_147, %c0_148, %c4_149] : memref<2x2x11x11xf32, #tpu.memory_space<vmem>>, vector<1x2x5x5xf32>
    %191 = vector.shape_cast %190 : vector<1x2x5x5xf32> to vector<2x5x5xf32>
    %192 = vector.broadcast %189 : f32 to vector<2x5x5xf32>
    %193 = arith.mulf %192, %191 : vector<2x5x5xf32>
    %194 = arith.addf %188, %193 : vector<2x5x5xf32>
    %c5_150 = arith.constant 5 : index
    %195 = memref.load %arg12[%c5_150] : memref<98xf32, #tpu.memory_space<smem>>
    %c0_151 = arith.constant 0 : index
    %c0_152 = arith.constant 0 : index
    %c0_153 = arith.constant 0 : index
    %c5_154 = arith.constant 5 : index
    %196 = vector.load %arg15[%c0_151, %c0_152, %c0_153, %c5_154] : memref<2x2x11x11xf32, #tpu.memory_space<vmem>>, vector<1x2x5x5xf32>
    %197 = vector.shape_cast %196 : vector<1x2x5x5xf32> to vector<2x5x5xf32>
    %198 = vector.broadcast %195 : f32 to vector<2x5x5xf32>
    %199 = arith.mulf %198, %197 : vector<2x5x5xf32>
    %200 = arith.addf %194, %199 : vector<2x5x5xf32>
    %c6_155 = arith.constant 6 : index
    %201 = memref.load %arg12[%c6_155] : memref<98xf32, #tpu.memory_space<smem>>
    %c0_156 = arith.constant 0 : index
    %c0_157 = arith.constant 0 : index
    %c0_158 = arith.constant 0 : index
    %c6_159 = arith.constant 6 : index
    %202 = vector.load %arg15[%c0_156, %c0_157, %c0_158, %c6_159] : memref<2x2x11x11xf32, #tpu.memory_space<vmem>>, vector<1x2x5x5xf32>
    %203 = vector.shape_cast %202 : vector<1x2x5x5xf32> to vector<2x5x5xf32>
    %204 = vector.broadcast %201 : f32 to vector<2x5x5xf32>
    %205 = arith.mulf %204, %203 : vector<2x5x5xf32>
    %206 = arith.addf %200, %205 : vector<2x5x5xf32>
    %c7_160 = arith.constant 7 : index
    %207 = memref.load %arg12[%c7_160] : memref<98xf32, #tpu.memory_space<smem>>
    %c0_161 = arith.constant 0 : index
    %c0_162 = arith.constant 0 : index
    %c1_163 = arith.constant 1 : index
    %c0_164 = arith.constant 0 : index
    %208 = vector.load %arg15[%c0_161, %c0_162, %c1_163, %c0_164] : memref<2x2x11x11xf32, #tpu.memory_space<vmem>>, vector<1x2x5x5xf32>
    %209 = vector.shape_cast %208 : vector<1x2x5x5xf32> to vector<2x5x5xf32>
    %210 = vector.broadcast %207 : f32 to vector<2x5x5xf32>
    %211 = arith.mulf %210, %209 : vector<2x5x5xf32>
    %212 = arith.addf %206, %211 : vector<2x5x5xf32>
    %c8_165 = arith.constant 8 : index
    %213 = memref.load %arg12[%c8_165] : memref<98xf32, #tpu.memory_space<smem>>
    %c0_166 = arith.constant 0 : index
    %c0_167 = arith.constant 0 : index
    %c1_168 = arith.constant 1 : index
    %c1_169 = arith.constant 1 : index
    %214 = vector.load %arg15[%c0_166, %c0_167, %c1_168, %c1_169] : memref<2x2x11x11xf32, #tpu.memory_space<vmem>>, vector<1x2x5x5xf32>
    %215 = vector.shape_cast %214 : vector<1x2x5x5xf32> to vector<2x5x5xf32>
    %216 = vector.broadcast %213 : f32 to vector<2x5x5xf32>
    %217 = arith.mulf %216, %215 : vector<2x5x5xf32>
    %218 = arith.addf %212, %217 : vector<2x5x5xf32>
    %c9_170 = arith.constant 9 : index
    %219 = memref.load %arg12[%c9_170] : memref<98xf32, #tpu.memory_space<smem>>
    %c0_171 = arith.constant 0 : index
    %c0_172 = arith.constant 0 : index
    %c1_173 = arith.constant 1 : index
    %c2_174 = arith.constant 2 : index
    %220 = vector.load %arg15[%c0_171, %c0_172, %c1_173, %c2_174] : memref<2x2x11x11xf32, #tpu.memory_space<vmem>>, vector<1x2x5x5xf32>
    %221 = vector.shape_cast %220 : vector<1x2x5x5xf32> to vector<2x5x5xf32>
    %222 = vector.broadcast %219 : f32 to vector<2x5x5xf32>
    %223 = arith.mulf %222, %221 : vector<2x5x5xf32>
    %224 = arith.addf %218, %223 : vector<2x5x5xf32>
    %c10_175 = arith.constant 10 : index
    %225 = memref.load %arg12[%c10_175] : memref<98xf32, #tpu.memory_space<smem>>
    %c0_176 = arith.constant 0 : index
    %c0_177 = arith.constant 0 : index
    %c1_178 = arith.constant 1 : index
    %c3_179 = arith.constant 3 : index
    %226 = vector.load %arg15[%c0_176, %c0_177, %c1_178, %c3_179] : memref<2x2x11x11xf32, #tpu.memory_space<vmem>>, vector<1x2x5x5xf32>
    %227 = vector.shape_cast %226 : vector<1x2x5x5xf32> to vector<2x5x5xf32>
    %228 = vector.broadcast %225 : f32 to vector<2x5x5xf32>
    %229 = arith.mulf %228, %227 : vector<2x5x5xf32>
    %230 = arith.addf %224, %229 : vector<2x5x5xf32>
    %c11 = arith.constant 11 : index
    %231 = memref.load %arg12[%c11] : memref<98xf32, #tpu.memory_space<smem>>
    %c0_180 = arith.constant 0 : index
    %c0_181 = arith.constant 0 : index
    %c1_182 = arith.constant 1 : index
    %c4_183 = arith.constant 4 : index
    %232 = vector.load %arg15[%c0_180, %c0_181, %c1_182, %c4_183] : memref<2x2x11x11xf32, #tpu.memory_space<vmem>>, vector<1x2x5x5xf32>
    %233 = vector.shape_cast %232 : vector<1x2x5x5xf32> to vector<2x5x5xf32>
    %234 = vector.broadcast %231 : f32 to vector<2x5x5xf32>
    %235 = arith.mulf %234, %233 : vector<2x5x5xf32>
    %236 = arith.addf %230, %235 : vector<2x5x5xf32>
    %c12 = arith.constant 12 : index
    %237 = memref.load %arg12[%c12] : memref<98xf32, #tpu.memory_space<smem>>
    %c0_184 = arith.constant 0 : index
    %c0_185 = arith.constant 0 : index
    %c1_186 = arith.constant 1 : index
    %c5_187 = arith.constant 5 : index
    %238 = vector.load %arg15[%c0_184, %c0_185, %c1_186, %c5_187] : memref<2x2x11x11xf32, #tpu.memory_space<vmem>>, vector<1x2x5x5xf32>
    %239 = vector.shape_cast %238 : vector<1x2x5x5xf32> to vector<2x5x5xf32>
    %240 = vector.broadcast %237 : f32 to vector<2x5x5xf32>
    %241 = arith.mulf %240, %239 : vector<2x5x5xf32>
    %242 = arith.addf %236, %241 : vector<2x5x5xf32>
    %c13 = arith.constant 13 : index
    %243 = memref.load %arg12[%c13] : memref<98xf32, #tpu.memory_space<smem>>
    %c0_188 = arith.constant 0 : index
    %c0_189 = arith.constant 0 : index
    %c1_190 = arith.constant 1 : index
    %c6_191 = arith.constant 6 : index
    %244 = vector.load %arg15[%c0_188, %c0_189, %c1_190, %c6_191] : memref<2x2x11x11xf32, #tpu.memory_space<vmem>>, vector<1x2x5x5xf32>
    %245 = vector.shape_cast %244 : vector<1x2x5x5xf32> to vector<2x5x5xf32>
    %246 = vector.broadcast %243 : f32 to vector<2x5x5xf32>
    %247 = arith.mulf %246, %245 : vector<2x5x5xf32>
    %248 = arith.addf %242, %247 : vector<2x5x5xf32>
    %c14 = arith.constant 14 : index
    %249 = memref.load %arg12[%c14] : memref<98xf32, #tpu.memory_space<smem>>
    %c0_192 = arith.constant 0 : index
    %c0_193 = arith.constant 0 : index
    %c2_194 = arith.constant 2 : index
    %c0_195 = arith.constant 0 : index
    %250 = vector.load %arg15[%c0_192, %c0_193, %c2_194, %c0_195] : memref<2x2x11x11xf32, #tpu.memory_space<vmem>>, vector<1x2x5x5xf32>
    %251 = vector.shape_cast %250 : vector<1x2x5x5xf32> to vector<2x5x5xf32>
    %252 = vector.broadcast %249 : f32 to vector<2x5x5xf32>
    %253 = arith.mulf %252, %251 : vector<2x5x5xf32>
    %254 = arith.addf %248, %253 : vector<2x5x5xf32>
    %c15 = arith.constant 15 : index
    %255 = memref.load %arg12[%c15] : memref<98xf32, #tpu.memory_space<smem>>
    %c0_196 = arith.constant 0 : index
    %c0_197 = arith.constant 0 : index
    %c2_198 = arith.constant 2 : index
    %c1_199 = arith.constant 1 : index
    %256 = vector.load %arg15[%c0_196, %c0_197, %c2_198, %c1_199] : memref<2x2x11x11xf32, #tpu.memory_space<vmem>>, vector<1x2x5x5xf32>
    %257 = vector.shape_cast %256 : vector<1x2x5x5xf32> to vector<2x5x5xf32>
    %258 = vector.broadcast %255 : f32 to vector<2x5x5xf32>
    %259 = arith.mulf %258, %257 : vector<2x5x5xf32>
    %260 = arith.addf %254, %259 : vector<2x5x5xf32>
    %c16_200 = arith.constant 16 : index
    %261 = memref.load %arg12[%c16_200] : memref<98xf32, #tpu.memory_space<smem>>
    %c0_201 = arith.constant 0 : index
    %c0_202 = arith.constant 0 : index
    %c2_203 = arith.constant 2 : index
    %c2_204 = arith.constant 2 : index
    %262 = vector.load %arg15[%c0_201, %c0_202, %c2_203, %c2_204] : memref<2x2x11x11xf32, #tpu.memory_space<vmem>>, vector<1x2x5x5xf32>
    %263 = vector.shape_cast %262 : vector<1x2x5x5xf32> to vector<2x5x5xf32>
    %264 = vector.broadcast %261 : f32 to vector<2x5x5xf32>
    %265 = arith.mulf %264, %263 : vector<2x5x5xf32>
    %266 = arith.addf %260, %265 : vector<2x5x5xf32>
    %c17_205 = arith.constant 17 : index
    %267 = memref.load %arg12[%c17_205] : memref<98xf32, #tpu.memory_space<smem>>
    %c0_206 = arith.constant 0 : index
    %c0_207 = arith.constant 0 : index
    %c2_208 = arith.constant 2 : index
    %c3_209 = arith.constant 3 : index
    %268 = vector.load %arg15[%c0_206, %c0_207, %c2_208, %c3_209] : memref<2x2x11x11xf32, #tpu.memory_space<vmem>>, vector<1x2x5x5xf32>
    %269 = vector.shape_cast %268 : vector<1x2x5x5xf32> to vector<2x5x5xf32>
    %270 = vector.broadcast %267 : f32 to vector<2x5x5xf32>
    %271 = arith.mulf %270, %269 : vector<2x5x5xf32>
    %272 = arith.addf %266, %271 : vector<2x5x5xf32>
    %c18_210 = arith.constant 18 : index
    %273 = memref.load %arg12[%c18_210] : memref<98xf32, #tpu.memory_space<smem>>
    %c0_211 = arith.constant 0 : index
    %c0_212 = arith.constant 0 : index
    %c2_213 = arith.constant 2 : index
    %c4_214 = arith.constant 4 : index
    %274 = vector.load %arg15[%c0_211, %c0_212, %c2_213, %c4_214] : memref<2x2x11x11xf32, #tpu.memory_space<vmem>>, vector<1x2x5x5xf32>
    %275 = vector.shape_cast %274 : vector<1x2x5x5xf32> to vector<2x5x5xf32>
    %276 = vector.broadcast %273 : f32 to vector<2x5x5xf32>
    %277 = arith.mulf %276, %275 : vector<2x5x5xf32>
    %278 = arith.addf %272, %277 : vector<2x5x5xf32>
    %c19 = arith.constant 19 : index
    %279 = memref.load %arg12[%c19] : memref<98xf32, #tpu.memory_space<smem>>
    %c0_215 = arith.constant 0 : index
    %c0_216 = arith.constant 0 : index
    %c2_217 = arith.constant 2 : index
    %c5_218 = arith.constant 5 : index
    %280 = vector.load %arg15[%c0_215, %c0_216, %c2_217, %c5_218] : memref<2x2x11x11xf32, #tpu.memory_space<vmem>>, vector<1x2x5x5xf32>
    %281 = vector.shape_cast %280 : vector<1x2x5x5xf32> to vector<2x5x5xf32>
    %282 = vector.broadcast %279 : f32 to vector<2x5x5xf32>
    %283 = arith.mulf %282, %281 : vector<2x5x5xf32>
    %284 = arith.addf %278, %283 : vector<2x5x5xf32>
    %c20 = arith.constant 20 : index
    %285 = memref.load %arg12[%c20] : memref<98xf32, #tpu.memory_space<smem>>
    %c0_219 = arith.constant 0 : index
    %c0_220 = arith.constant 0 : index
    %c2_221 = arith.constant 2 : index
    %c6_222 = arith.constant 6 : index
    %286 = vector.load %arg15[%c0_219, %c0_220, %c2_221, %c6_222] : memref<2x2x11x11xf32, #tpu.memory_space<vmem>>, vector<1x2x5x5xf32>
    %287 = vector.shape_cast %286 : vector<1x2x5x5xf32> to vector<2x5x5xf32>
    %288 = vector.broadcast %285 : f32 to vector<2x5x5xf32>
    %289 = arith.mulf %288, %287 : vector<2x5x5xf32>
    %290 = arith.addf %284, %289 : vector<2x5x5xf32>
    %c21 = arith.constant 21 : index
    %291 = memref.load %arg12[%c21] : memref<98xf32, #tpu.memory_space<smem>>
    %c0_223 = arith.constant 0 : index
    %c0_224 = arith.constant 0 : index
    %c3_225 = arith.constant 3 : index
    %c0_226 = arith.constant 0 : index
    %292 = vector.load %arg15[%c0_223, %c0_224, %c3_225, %c0_226] : memref<2x2x11x11xf32, #tpu.memory_space<vmem>>, vector<1x2x5x5xf32>
    %293 = vector.shape_cast %292 : vector<1x2x5x5xf32> to vector<2x5x5xf32>
    %294 = vector.broadcast %291 : f32 to vector<2x5x5xf32>
    %295 = arith.mulf %294, %293 : vector<2x5x5xf32>
    %296 = arith.addf %290, %295 : vector<2x5x5xf32>
    %c22 = arith.constant 22 : index
    %297 = memref.load %arg12[%c22] : memref<98xf32, #tpu.memory_space<smem>>
    %c0_227 = arith.constant 0 : index
    %c0_228 = arith.constant 0 : index
    %c3_229 = arith.constant 3 : index
    %c1_230 = arith.constant 1 : index
    %298 = vector.load %arg15[%c0_227, %c0_228, %c3_229, %c1_230] : memref<2x2x11x11xf32, #tpu.memory_space<vmem>>, vector<1x2x5x5xf32>
    %299 = vector.shape_cast %298 : vector<1x2x5x5xf32> to vector<2x5x5xf32>
    %300 = vector.broadcast %297 : f32 to vector<2x5x5xf32>
    %301 = arith.mulf %300, %299 : vector<2x5x5xf32>
    %302 = arith.addf %296, %301 : vector<2x5x5xf32>
    %c23 = arith.constant 23 : index
    %303 = memref.load %arg12[%c23] : memref<98xf32, #tpu.memory_space<smem>>
    %c0_231 = arith.constant 0 : index
    %c0_232 = arith.constant 0 : index
    %c3_233 = arith.constant 3 : index
    %c2_234 = arith.constant 2 : index
    %304 = vector.load %arg15[%c0_231, %c0_232, %c3_233, %c2_234] : memref<2x2x11x11xf32, #tpu.memory_space<vmem>>, vector<1x2x5x5xf32>
    %305 = vector.shape_cast %304 : vector<1x2x5x5xf32> to vector<2x5x5xf32>
    %306 = vector.broadcast %303 : f32 to vector<2x5x5xf32>
    %307 = arith.mulf %306, %305 : vector<2x5x5xf32>
    %308 = arith.addf %302, %307 : vector<2x5x5xf32>
    %c24 = arith.constant 24 : index
    %309 = memref.load %arg12[%c24] : memref<98xf32, #tpu.memory_space<smem>>
    %c0_235 = arith.constant 0 : index
    %c0_236 = arith.constant 0 : index
    %c3_237 = arith.constant 3 : index
    %c3_238 = arith.constant 3 : index
    %310 = vector.load %arg15[%c0_235, %c0_236, %c3_237, %c3_238] : memref<2x2x11x11xf32, #tpu.memory_space<vmem>>, vector<1x2x5x5xf32>
    %311 = vector.shape_cast %310 : vector<1x2x5x5xf32> to vector<2x5x5xf32>
    %312 = vector.broadcast %309 : f32 to vector<2x5x5xf32>
    %313 = arith.mulf %312, %311 : vector<2x5x5xf32>
    %314 = arith.addf %308, %313 : vector<2x5x5xf32>
    %c25 = arith.constant 25 : index
    %315 = memref.load %arg12[%c25] : memref<98xf32, #tpu.memory_space<smem>>
    %c0_239 = arith.constant 0 : index
    %c0_240 = arith.constant 0 : index
    %c3_241 = arith.constant 3 : index
    %c4_242 = arith.constant 4 : index
    %316 = vector.load %arg15[%c0_239, %c0_240, %c3_241, %c4_242] : memref<2x2x11x11xf32, #tpu.memory_space<vmem>>, vector<1x2x5x5xf32>
    %317 = vector.shape_cast %316 : vector<1x2x5x5xf32> to vector<2x5x5xf32>
    %318 = vector.broadcast %315 : f32 to vector<2x5x5xf32>
    %319 = arith.mulf %318, %317 : vector<2x5x5xf32>
    %320 = arith.addf %314, %319 : vector<2x5x5xf32>
    %c26 = arith.constant 26 : index
    %321 = memref.load %arg12[%c26] : memref<98xf32, #tpu.memory_space<smem>>
    %c0_243 = arith.constant 0 : index
    %c0_244 = arith.constant 0 : index
    %c3_245 = arith.constant 3 : index
    %c5_246 = arith.constant 5 : index
    %322 = vector.load %arg15[%c0_243, %c0_244, %c3_245, %c5_246] : memref<2x2x11x11xf32, #tpu.memory_space<vmem>>, vector<1x2x5x5xf32>
    %323 = vector.shape_cast %322 : vector<1x2x5x5xf32> to vector<2x5x5xf32>
    %324 = vector.broadcast %321 : f32 to vector<2x5x5xf32>
    %325 = arith.mulf %324, %323 : vector<2x5x5xf32>
    %326 = arith.addf %320, %325 : vector<2x5x5xf32>
    %c27 = arith.constant 27 : index
    %327 = memref.load %arg12[%c27] : memref<98xf32, #tpu.memory_space<smem>>
    %c0_247 = arith.constant 0 : index
    %c0_248 = arith.constant 0 : index
    %c3_249 = arith.constant 3 : index
    %c6_250 = arith.constant 6 : index
    %328 = vector.load %arg15[%c0_247, %c0_248, %c3_249, %c6_250] : memref<2x2x11x11xf32, #tpu.memory_space<vmem>>, vector<1x2x5x5xf32>
    %329 = vector.shape_cast %328 : vector<1x2x5x5xf32> to vector<2x5x5xf32>
    %330 = vector.broadcast %327 : f32 to vector<2x5x5xf32>
    %331 = arith.mulf %330, %329 : vector<2x5x5xf32>
    %332 = arith.addf %326, %331 : vector<2x5x5xf32>
    %c28 = arith.constant 28 : index
    %333 = memref.load %arg12[%c28] : memref<98xf32, #tpu.memory_space<smem>>
    %c0_251 = arith.constant 0 : index
    %c0_252 = arith.constant 0 : index
    %c4_253 = arith.constant 4 : index
    %c0_254 = arith.constant 0 : index
    %334 = vector.load %arg15[%c0_251, %c0_252, %c4_253, %c0_254] : memref<2x2x11x11xf32, #tpu.memory_space<vmem>>, vector<1x2x5x5xf32>
    %335 = vector.shape_cast %334 : vector<1x2x5x5xf32> to vector<2x5x5xf32>
    %336 = vector.broadcast %333 : f32 to vector<2x5x5xf32>
    %337 = arith.mulf %336, %335 : vector<2x5x5xf32>
    %338 = arith.addf %332, %337 : vector<2x5x5xf32>
    %c29 = arith.constant 29 : index
    %339 = memref.load %arg12[%c29] : memref<98xf32, #tpu.memory_space<smem>>
    %c0_255 = arith.constant 0 : index
    %c0_256 = arith.constant 0 : index
    %c4_257 = arith.constant 4 : index
    %c1_258 = arith.constant 1 : index
    %340 = vector.load %arg15[%c0_255, %c0_256, %c4_257, %c1_258] : memref<2x2x11x11xf32, #tpu.memory_space<vmem>>, vector<1x2x5x5xf32>
    %341 = vector.shape_cast %340 : vector<1x2x5x5xf32> to vector<2x5x5xf32>
    %342 = vector.broadcast %339 : f32 to vector<2x5x5xf32>
    %343 = arith.mulf %342, %341 : vector<2x5x5xf32>
    %344 = arith.addf %338, %343 : vector<2x5x5xf32>
    %c30 = arith.constant 30 : index
    %345 = memref.load %arg12[%c30] : memref<98xf32, #tpu.memory_space<smem>>
    %c0_259 = arith.constant 0 : index
    %c0_260 = arith.constant 0 : index
    %c4_261 = arith.constant 4 : index
    %c2_262 = arith.constant 2 : index
    %346 = vector.load %arg15[%c0_259, %c0_260, %c4_261, %c2_262] : memref<2x2x11x11xf32, #tpu.memory_space<vmem>>, vector<1x2x5x5xf32>
    %347 = vector.shape_cast %346 : vector<1x2x5x5xf32> to vector<2x5x5xf32>
    %348 = vector.broadcast %345 : f32 to vector<2x5x5xf32>
    %349 = arith.mulf %348, %347 : vector<2x5x5xf32>
    %350 = arith.addf %344, %349 : vector<2x5x5xf32>
    %c31 = arith.constant 31 : index
    %351 = memref.load %arg12[%c31] : memref<98xf32, #tpu.memory_space<smem>>
    %c0_263 = arith.constant 0 : index
    %c0_264 = arith.constant 0 : index
    %c4_265 = arith.constant 4 : index
    %c3_266 = arith.constant 3 : index
    %352 = vector.load %arg15[%c0_263, %c0_264, %c4_265, %c3_266] : memref<2x2x11x11xf32, #tpu.memory_space<vmem>>, vector<1x2x5x5xf32>
    %353 = vector.shape_cast %352 : vector<1x2x5x5xf32> to vector<2x5x5xf32>
    %354 = vector.broadcast %351 : f32 to vector<2x5x5xf32>
    %355 = arith.mulf %354, %353 : vector<2x5x5xf32>
    %356 = arith.addf %350, %355 : vector<2x5x5xf32>
    %c32 = arith.constant 32 : index
    %357 = memref.load %arg12[%c32] : memref<98xf32, #tpu.memory_space<smem>>
    %c0_267 = arith.constant 0 : index
    %c0_268 = arith.constant 0 : index
    %c4_269 = arith.constant 4 : index
    %c4_270 = arith.constant 4 : index
    %358 = vector.load %arg15[%c0_267, %c0_268, %c4_269, %c4_270] : memref<2x2x11x11xf32, #tpu.memory_space<vmem>>, vector<1x2x5x5xf32>
    %359 = vector.shape_cast %358 : vector<1x2x5x5xf32> to vector<2x5x5xf32>
    %360 = vector.broadcast %357 : f32 to vector<2x5x5xf32>
    %361 = arith.mulf %360, %359 : vector<2x5x5xf32>
    %362 = arith.addf %356, %361 : vector<2x5x5xf32>
    %c33 = arith.constant 33 : index
    %363 = memref.load %arg12[%c33] : memref<98xf32, #tpu.memory_space<smem>>
    %c0_271 = arith.constant 0 : index
    %c0_272 = arith.constant 0 : index
    %c4_273 = arith.constant 4 : index
    %c5_274 = arith.constant 5 : index
    %364 = vector.load %arg15[%c0_271, %c0_272, %c4_273, %c5_274] : memref<2x2x11x11xf32, #tpu.memory_space<vmem>>, vector<1x2x5x5xf32>
    %365 = vector.shape_cast %364 : vector<1x2x5x5xf32> to vector<2x5x5xf32>
    %366 = vector.broadcast %363 : f32 to vector<2x5x5xf32>
    %367 = arith.mulf %366, %365 : vector<2x5x5xf32>
    %368 = arith.addf %362, %367 : vector<2x5x5xf32>
    %c34 = arith.constant 34 : index
    %369 = memref.load %arg12[%c34] : memref<98xf32, #tpu.memory_space<smem>>
    %c0_275 = arith.constant 0 : index
    %c0_276 = arith.constant 0 : index
    %c4_277 = arith.constant 4 : index
    %c6_278 = arith.constant 6 : index
    %370 = vector.load %arg15[%c0_275, %c0_276, %c4_277, %c6_278] : memref<2x2x11x11xf32, #tpu.memory_space<vmem>>, vector<1x2x5x5xf32>
    %371 = vector.shape_cast %370 : vector<1x2x5x5xf32> to vector<2x5x5xf32>
    %372 = vector.broadcast %369 : f32 to vector<2x5x5xf32>
    %373 = arith.mulf %372, %371 : vector<2x5x5xf32>
    %374 = arith.addf %368, %373 : vector<2x5x5xf32>
    %c35 = arith.constant 35 : index
    %375 = memref.load %arg12[%c35] : memref<98xf32, #tpu.memory_space<smem>>
    %c0_279 = arith.constant 0 : index
    %c0_280 = arith.constant 0 : index
    %c5_281 = arith.constant 5 : index
    %c0_282 = arith.constant 0 : index
    %376 = vector.load %arg15[%c0_279, %c0_280, %c5_281, %c0_282] : memref<2x2x11x11xf32, #tpu.memory_space<vmem>>, vector<1x2x5x5xf32>
    %377 = vector.shape_cast %376 : vector<1x2x5x5xf32> to vector<2x5x5xf32>
    %378 = vector.broadcast %375 : f32 to vector<2x5x5xf32>
    %379 = arith.mulf %378, %377 : vector<2x5x5xf32>
    %380 = arith.addf %374, %379 : vector<2x5x5xf32>
    %c36 = arith.constant 36 : index
    %381 = memref.load %arg12[%c36] : memref<98xf32, #tpu.memory_space<smem>>
    %c0_283 = arith.constant 0 : index
    %c0_284 = arith.constant 0 : index
    %c5_285 = arith.constant 5 : index
    %c1_286 = arith.constant 1 : index
    %382 = vector.load %arg15[%c0_283, %c0_284, %c5_285, %c1_286] : memref<2x2x11x11xf32, #tpu.memory_space<vmem>>, vector<1x2x5x5xf32>
    %383 = vector.shape_cast %382 : vector<1x2x5x5xf32> to vector<2x5x5xf32>
    %384 = vector.broadcast %381 : f32 to vector<2x5x5xf32>
    %385 = arith.mulf %384, %383 : vector<2x5x5xf32>
    %386 = arith.addf %380, %385 : vector<2x5x5xf32>
    %c37 = arith.constant 37 : index
    %387 = memref.load %arg12[%c37] : memref<98xf32, #tpu.memory_space<smem>>
    %c0_287 = arith.constant 0 : index
    %c0_288 = arith.constant 0 : index
    %c5_289 = arith.constant 5 : index
    %c2_290 = arith.constant 2 : index
    %388 = vector.load %arg15[%c0_287, %c0_288, %c5_289, %c2_290] : memref<2x2x11x11xf32, #tpu.memory_space<vmem>>, vector<1x2x5x5xf32>
    %389 = vector.shape_cast %388 : vector<1x2x5x5xf32> to vector<2x5x5xf32>
    %390 = vector.broadcast %387 : f32 to vector<2x5x5xf32>
    %391 = arith.mulf %390, %389 : vector<2x5x5xf32>
    %392 = arith.addf %386, %391 : vector<2x5x5xf32>
    %c38 = arith.constant 38 : index
    %393 = memref.load %arg12[%c38] : memref<98xf32, #tpu.memory_space<smem>>
    %c0_291 = arith.constant 0 : index
    %c0_292 = arith.constant 0 : index
    %c5_293 = arith.constant 5 : index
    %c3_294 = arith.constant 3 : index
    %394 = vector.load %arg15[%c0_291, %c0_292, %c5_293, %c3_294] : memref<2x2x11x11xf32, #tpu.memory_space<vmem>>, vector<1x2x5x5xf32>
    %395 = vector.shape_cast %394 : vector<1x2x5x5xf32> to vector<2x5x5xf32>
    %396 = vector.broadcast %393 : f32 to vector<2x5x5xf32>
    %397 = arith.mulf %396, %395 : vector<2x5x5xf32>
    %398 = arith.addf %392, %397 : vector<2x5x5xf32>
    %c39 = arith.constant 39 : index
    %399 = memref.load %arg12[%c39] : memref<98xf32, #tpu.memory_space<smem>>
    %c0_295 = arith.constant 0 : index
    %c0_296 = arith.constant 0 : index
    %c5_297 = arith.constant 5 : index
    %c4_298 = arith.constant 4 : index
    %400 = vector.load %arg15[%c0_295, %c0_296, %c5_297, %c4_298] : memref<2x2x11x11xf32, #tpu.memory_space<vmem>>, vector<1x2x5x5xf32>
    %401 = vector.shape_cast %400 : vector<1x2x5x5xf32> to vector<2x5x5xf32>
    %402 = vector.broadcast %399 : f32 to vector<2x5x5xf32>
    %403 = arith.mulf %402, %401 : vector<2x5x5xf32>
    %404 = arith.addf %398, %403 : vector<2x5x5xf32>
    %c40 = arith.constant 40 : index
    %405 = memref.load %arg12[%c40] : memref<98xf32, #tpu.memory_space<smem>>
    %c0_299 = arith.constant 0 : index
    %c0_300 = arith.constant 0 : index
    %c5_301 = arith.constant 5 : index
    %c5_302 = arith.constant 5 : index
    %406 = vector.load %arg15[%c0_299, %c0_300, %c5_301, %c5_302] : memref<2x2x11x11xf32, #tpu.memory_space<vmem>>, vector<1x2x5x5xf32>
    %407 = vector.shape_cast %406 : vector<1x2x5x5xf32> to vector<2x5x5xf32>
    %408 = vector.broadcast %405 : f32 to vector<2x5x5xf32>
    %409 = arith.mulf %408, %407 : vector<2x5x5xf32>
    %410 = arith.addf %404, %409 : vector<2x5x5xf32>
    %c41 = arith.constant 41 : index
    %411 = memref.load %arg12[%c41] : memref<98xf32, #tpu.memory_space<smem>>
    %c0_303 = arith.constant 0 : index
    %c0_304 = arith.constant 0 : index
    %c5_305 = arith.constant 5 : index
    %c6_306 = arith.constant 6 : index
    %412 = vector.load %arg15[%c0_303, %c0_304, %c5_305, %c6_306] : memref<2x2x11x11xf32, #tpu.memory_space<vmem>>, vector<1x2x5x5xf32>
    %413 = vector.shape_cast %412 : vector<1x2x5x5xf32> to vector<2x5x5xf32>
    %414 = vector.broadcast %411 : f32 to vector<2x5x5xf32>
    %415 = arith.mulf %414, %413 : vector<2x5x5xf32>
    %416 = arith.addf %410, %415 : vector<2x5x5xf32>
    %c42 = arith.constant 42 : index
    %417 = memref.load %arg12[%c42] : memref<98xf32, #tpu.memory_space<smem>>
    %c0_307 = arith.constant 0 : index
    %c0_308 = arith.constant 0 : index
    %c6_309 = arith.constant 6 : index
    %c0_310 = arith.constant 0 : index
    %418 = vector.load %arg15[%c0_307, %c0_308, %c6_309, %c0_310] : memref<2x2x11x11xf32, #tpu.memory_space<vmem>>, vector<1x2x5x5xf32>
    %419 = vector.shape_cast %418 : vector<1x2x5x5xf32> to vector<2x5x5xf32>
    %420 = vector.broadcast %417 : f32 to vector<2x5x5xf32>
    %421 = arith.mulf %420, %419 : vector<2x5x5xf32>
    %422 = arith.addf %416, %421 : vector<2x5x5xf32>
    %c43 = arith.constant 43 : index
    %423 = memref.load %arg12[%c43] : memref<98xf32, #tpu.memory_space<smem>>
    %c0_311 = arith.constant 0 : index
    %c0_312 = arith.constant 0 : index
    %c6_313 = arith.constant 6 : index
    %c1_314 = arith.constant 1 : index
    %424 = vector.load %arg15[%c0_311, %c0_312, %c6_313, %c1_314] : memref<2x2x11x11xf32, #tpu.memory_space<vmem>>, vector<1x2x5x5xf32>
    %425 = vector.shape_cast %424 : vector<1x2x5x5xf32> to vector<2x5x5xf32>
    %426 = vector.broadcast %423 : f32 to vector<2x5x5xf32>
    %427 = arith.mulf %426, %425 : vector<2x5x5xf32>
    %428 = arith.addf %422, %427 : vector<2x5x5xf32>
    %c44 = arith.constant 44 : index
    %429 = memref.load %arg12[%c44] : memref<98xf32, #tpu.memory_space<smem>>
    %c0_315 = arith.constant 0 : index
    %c0_316 = arith.constant 0 : index
    %c6_317 = arith.constant 6 : index
    %c2_318 = arith.constant 2 : index
    %430 = vector.load %arg15[%c0_315, %c0_316, %c6_317, %c2_318] : memref<2x2x11x11xf32, #tpu.memory_space<vmem>>, vector<1x2x5x5xf32>
    %431 = vector.shape_cast %430 : vector<1x2x5x5xf32> to vector<2x5x5xf32>
    %432 = vector.broadcast %429 : f32 to vector<2x5x5xf32>
    %433 = arith.mulf %432, %431 : vector<2x5x5xf32>
    %434 = arith.addf %428, %433 : vector<2x5x5xf32>
    %c45 = arith.constant 45 : index
    %435 = memref.load %arg12[%c45] : memref<98xf32, #tpu.memory_space<smem>>
    %c0_319 = arith.constant 0 : index
    %c0_320 = arith.constant 0 : index
    %c6_321 = arith.constant 6 : index
    %c3_322 = arith.constant 3 : index
    %436 = vector.load %arg15[%c0_319, %c0_320, %c6_321, %c3_322] : memref<2x2x11x11xf32, #tpu.memory_space<vmem>>, vector<1x2x5x5xf32>
    %437 = vector.shape_cast %436 : vector<1x2x5x5xf32> to vector<2x5x5xf32>
    %438 = vector.broadcast %435 : f32 to vector<2x5x5xf32>
    %439 = arith.mulf %438, %437 : vector<2x5x5xf32>
    %440 = arith.addf %434, %439 : vector<2x5x5xf32>
    %c46 = arith.constant 46 : index
    %441 = memref.load %arg12[%c46] : memref<98xf32, #tpu.memory_space<smem>>
    %c0_323 = arith.constant 0 : index
    %c0_324 = arith.constant 0 : index
    %c6_325 = arith.constant 6 : index
    %c4_326 = arith.constant 4 : index
    %442 = vector.load %arg15[%c0_323, %c0_324, %c6_325, %c4_326] : memref<2x2x11x11xf32, #tpu.memory_space<vmem>>, vector<1x2x5x5xf32>
    %443 = vector.shape_cast %442 : vector<1x2x5x5xf32> to vector<2x5x5xf32>
    %444 = vector.broadcast %441 : f32 to vector<2x5x5xf32>
    %445 = arith.mulf %444, %443 : vector<2x5x5xf32>
    %446 = arith.addf %440, %445 : vector<2x5x5xf32>
    %c47 = arith.constant 47 : index
    %447 = memref.load %arg12[%c47] : memref<98xf32, #tpu.memory_space<smem>>
    %c0_327 = arith.constant 0 : index
    %c0_328 = arith.constant 0 : index
    %c6_329 = arith.constant 6 : index
    %c5_330 = arith.constant 5 : index
    %448 = vector.load %arg15[%c0_327, %c0_328, %c6_329, %c5_330] : memref<2x2x11x11xf32, #tpu.memory_space<vmem>>, vector<1x2x5x5xf32>
    %449 = vector.shape_cast %448 : vector<1x2x5x5xf32> to vector<2x5x5xf32>
    %450 = vector.broadcast %447 : f32 to vector<2x5x5xf32>
    %451 = arith.mulf %450, %449 : vector<2x5x5xf32>
    %452 = arith.addf %446, %451 : vector<2x5x5xf32>
    %c48 = arith.constant 48 : index
    %453 = memref.load %arg12[%c48] : memref<98xf32, #tpu.memory_space<smem>>
    %c0_331 = arith.constant 0 : index
    %c0_332 = arith.constant 0 : index
    %c6_333 = arith.constant 6 : index
    %c6_334 = arith.constant 6 : index
    %454 = vector.load %arg15[%c0_331, %c0_332, %c6_333, %c6_334] : memref<2x2x11x11xf32, #tpu.memory_space<vmem>>, vector<1x2x5x5xf32>
    %455 = vector.shape_cast %454 : vector<1x2x5x5xf32> to vector<2x5x5xf32>
    %456 = vector.broadcast %453 : f32 to vector<2x5x5xf32>
    %457 = arith.mulf %456, %455 : vector<2x5x5xf32>
    %458 = arith.addf %452, %457 : vector<2x5x5xf32>
    %c49 = arith.constant 49 : index
    %459 = memref.load %arg12[%c49] : memref<98xf32, #tpu.memory_space<smem>>
    %c1_335 = arith.constant 1 : index
    %c0_336 = arith.constant 0 : index
    %c0_337 = arith.constant 0 : index
    %c0_338 = arith.constant 0 : index
    %460 = vector.load %arg15[%c1_335, %c0_336, %c0_337, %c0_338] : memref<2x2x11x11xf32, #tpu.memory_space<vmem>>, vector<1x2x5x5xf32>
    %461 = vector.shape_cast %460 : vector<1x2x5x5xf32> to vector<2x5x5xf32>
    %462 = vector.broadcast %459 : f32 to vector<2x5x5xf32>
    %463 = arith.mulf %462, %461 : vector<2x5x5xf32>
    %464 = arith.addf %458, %463 : vector<2x5x5xf32>
    %c50 = arith.constant 50 : index
    %465 = memref.load %arg12[%c50] : memref<98xf32, #tpu.memory_space<smem>>
    %c1_339 = arith.constant 1 : index
    %c0_340 = arith.constant 0 : index
    %c0_341 = arith.constant 0 : index
    %c1_342 = arith.constant 1 : index
    %466 = vector.load %arg15[%c1_339, %c0_340, %c0_341, %c1_342] : memref<2x2x11x11xf32, #tpu.memory_space<vmem>>, vector<1x2x5x5xf32>
    %467 = vector.shape_cast %466 : vector<1x2x5x5xf32> to vector<2x5x5xf32>
    %468 = vector.broadcast %465 : f32 to vector<2x5x5xf32>
    %469 = arith.mulf %468, %467 : vector<2x5x5xf32>
    %470 = arith.addf %464, %469 : vector<2x5x5xf32>
    %c51 = arith.constant 51 : index
    %471 = memref.load %arg12[%c51] : memref<98xf32, #tpu.memory_space<smem>>
    %c1_343 = arith.constant 1 : index
    %c0_344 = arith.constant 0 : index
    %c0_345 = arith.constant 0 : index
    %c2_346 = arith.constant 2 : index
    %472 = vector.load %arg15[%c1_343, %c0_344, %c0_345, %c2_346] : memref<2x2x11x11xf32, #tpu.memory_space<vmem>>, vector<1x2x5x5xf32>
    %473 = vector.shape_cast %472 : vector<1x2x5x5xf32> to vector<2x5x5xf32>
    %474 = vector.broadcast %471 : f32 to vector<2x5x5xf32>
    %475 = arith.mulf %474, %473 : vector<2x5x5xf32>
    %476 = arith.addf %470, %475 : vector<2x5x5xf32>
    %c52 = arith.constant 52 : index
    %477 = memref.load %arg12[%c52] : memref<98xf32, #tpu.memory_space<smem>>
    %c1_347 = arith.constant 1 : index
    %c0_348 = arith.constant 0 : index
    %c0_349 = arith.constant 0 : index
    %c3_350 = arith.constant 3 : index
    %478 = vector.load %arg15[%c1_347, %c0_348, %c0_349, %c3_350] : memref<2x2x11x11xf32, #tpu.memory_space<vmem>>, vector<1x2x5x5xf32>
    %479 = vector.shape_cast %478 : vector<1x2x5x5xf32> to vector<2x5x5xf32>
    %480 = vector.broadcast %477 : f32 to vector<2x5x5xf32>
    %481 = arith.mulf %480, %479 : vector<2x5x5xf32>
    %482 = arith.addf %476, %481 : vector<2x5x5xf32>
    %c53 = arith.constant 53 : index
    %483 = memref.load %arg12[%c53] : memref<98xf32, #tpu.memory_space<smem>>
    %c1_351 = arith.constant 1 : index
    %c0_352 = arith.constant 0 : index
    %c0_353 = arith.constant 0 : index
    %c4_354 = arith.constant 4 : index
    %484 = vector.load %arg15[%c1_351, %c0_352, %c0_353, %c4_354] : memref<2x2x11x11xf32, #tpu.memory_space<vmem>>, vector<1x2x5x5xf32>
    %485 = vector.shape_cast %484 : vector<1x2x5x5xf32> to vector<2x5x5xf32>
    %486 = vector.broadcast %483 : f32 to vector<2x5x5xf32>
    %487 = arith.mulf %486, %485 : vector<2x5x5xf32>
    %488 = arith.addf %482, %487 : vector<2x5x5xf32>
    %c54 = arith.constant 54 : index
    %489 = memref.load %arg12[%c54] : memref<98xf32, #tpu.memory_space<smem>>
    %c1_355 = arith.constant 1 : index
    %c0_356 = arith.constant 0 : index
    %c0_357 = arith.constant 0 : index
    %c5_358 = arith.constant 5 : index
    %490 = vector.load %arg15[%c1_355, %c0_356, %c0_357, %c5_358] : memref<2x2x11x11xf32, #tpu.memory_space<vmem>>, vector<1x2x5x5xf32>
    %491 = vector.shape_cast %490 : vector<1x2x5x5xf32> to vector<2x5x5xf32>
    %492 = vector.broadcast %489 : f32 to vector<2x5x5xf32>
    %493 = arith.mulf %492, %491 : vector<2x5x5xf32>
    %494 = arith.addf %488, %493 : vector<2x5x5xf32>
    %c55 = arith.constant 55 : index
    %495 = memref.load %arg12[%c55] : memref<98xf32, #tpu.memory_space<smem>>
    %c1_359 = arith.constant 1 : index
    %c0_360 = arith.constant 0 : index
    %c0_361 = arith.constant 0 : index
    %c6_362 = arith.constant 6 : index
    %496 = vector.load %arg15[%c1_359, %c0_360, %c0_361, %c6_362] : memref<2x2x11x11xf32, #tpu.memory_space<vmem>>, vector<1x2x5x5xf32>
    %497 = vector.shape_cast %496 : vector<1x2x5x5xf32> to vector<2x5x5xf32>
    %498 = vector.broadcast %495 : f32 to vector<2x5x5xf32>
    %499 = arith.mulf %498, %497 : vector<2x5x5xf32>
    %500 = arith.addf %494, %499 : vector<2x5x5xf32>
    %c56 = arith.constant 56 : index
    %501 = memref.load %arg12[%c56] : memref<98xf32, #tpu.memory_space<smem>>
    %c1_363 = arith.constant 1 : index
    %c0_364 = arith.constant 0 : index
    %c1_365 = arith.constant 1 : index
    %c0_366 = arith.constant 0 : index
    %502 = vector.load %arg15[%c1_363, %c0_364, %c1_365, %c0_366] : memref<2x2x11x11xf32, #tpu.memory_space<vmem>>, vector<1x2x5x5xf32>
    %503 = vector.shape_cast %502 : vector<1x2x5x5xf32> to vector<2x5x5xf32>
    %504 = vector.broadcast %501 : f32 to vector<2x5x5xf32>
    %505 = arith.mulf %504, %503 : vector<2x5x5xf32>
    %506 = arith.addf %500, %505 : vector<2x5x5xf32>
    %c57 = arith.constant 57 : index
    %507 = memref.load %arg12[%c57] : memref<98xf32, #tpu.memory_space<smem>>
    %c1_367 = arith.constant 1 : index
    %c0_368 = arith.constant 0 : index
    %c1_369 = arith.constant 1 : index
    %c1_370 = arith.constant 1 : index
    %508 = vector.load %arg15[%c1_367, %c0_368, %c1_369, %c1_370] : memref<2x2x11x11xf32, #tpu.memory_space<vmem>>, vector<1x2x5x5xf32>
    %509 = vector.shape_cast %508 : vector<1x2x5x5xf32> to vector<2x5x5xf32>
    %510 = vector.broadcast %507 : f32 to vector<2x5x5xf32>
    %511 = arith.mulf %510, %509 : vector<2x5x5xf32>
    %512 = arith.addf %506, %511 : vector<2x5x5xf32>
    %c58 = arith.constant 58 : index
    %513 = memref.load %arg12[%c58] : memref<98xf32, #tpu.memory_space<smem>>
    %c1_371 = arith.constant 1 : index
    %c0_372 = arith.constant 0 : index
    %c1_373 = arith.constant 1 : index
    %c2_374 = arith.constant 2 : index
    %514 = vector.load %arg15[%c1_371, %c0_372, %c1_373, %c2_374] : memref<2x2x11x11xf32, #tpu.memory_space<vmem>>, vector<1x2x5x5xf32>
    %515 = vector.shape_cast %514 : vector<1x2x5x5xf32> to vector<2x5x5xf32>
    %516 = vector.broadcast %513 : f32 to vector<2x5x5xf32>
    %517 = arith.mulf %516, %515 : vector<2x5x5xf32>
    %518 = arith.addf %512, %517 : vector<2x5x5xf32>
    %c59 = arith.constant 59 : index
    %519 = memref.load %arg12[%c59] : memref<98xf32, #tpu.memory_space<smem>>
    %c1_375 = arith.constant 1 : index
    %c0_376 = arith.constant 0 : index
    %c1_377 = arith.constant 1 : index
    %c3_378 = arith.constant 3 : index
    %520 = vector.load %arg15[%c1_375, %c0_376, %c1_377, %c3_378] : memref<2x2x11x11xf32, #tpu.memory_space<vmem>>, vector<1x2x5x5xf32>
    %521 = vector.shape_cast %520 : vector<1x2x5x5xf32> to vector<2x5x5xf32>
    %522 = vector.broadcast %519 : f32 to vector<2x5x5xf32>
    %523 = arith.mulf %522, %521 : vector<2x5x5xf32>
    %524 = arith.addf %518, %523 : vector<2x5x5xf32>
    %c60 = arith.constant 60 : index
    %525 = memref.load %arg12[%c60] : memref<98xf32, #tpu.memory_space<smem>>
    %c1_379 = arith.constant 1 : index
    %c0_380 = arith.constant 0 : index
    %c1_381 = arith.constant 1 : index
    %c4_382 = arith.constant 4 : index
    %526 = vector.load %arg15[%c1_379, %c0_380, %c1_381, %c4_382] : memref<2x2x11x11xf32, #tpu.memory_space<vmem>>, vector<1x2x5x5xf32>
    %527 = vector.shape_cast %526 : vector<1x2x5x5xf32> to vector<2x5x5xf32>
    %528 = vector.broadcast %525 : f32 to vector<2x5x5xf32>
    %529 = arith.mulf %528, %527 : vector<2x5x5xf32>
    %530 = arith.addf %524, %529 : vector<2x5x5xf32>
    %c61 = arith.constant 61 : index
    %531 = memref.load %arg12[%c61] : memref<98xf32, #tpu.memory_space<smem>>
    %c1_383 = arith.constant 1 : index
    %c0_384 = arith.constant 0 : index
    %c1_385 = arith.constant 1 : index
    %c5_386 = arith.constant 5 : index
    %532 = vector.load %arg15[%c1_383, %c0_384, %c1_385, %c5_386] : memref<2x2x11x11xf32, #tpu.memory_space<vmem>>, vector<1x2x5x5xf32>
    %533 = vector.shape_cast %532 : vector<1x2x5x5xf32> to vector<2x5x5xf32>
    %534 = vector.broadcast %531 : f32 to vector<2x5x5xf32>
    %535 = arith.mulf %534, %533 : vector<2x5x5xf32>
    %536 = arith.addf %530, %535 : vector<2x5x5xf32>
    %c62 = arith.constant 62 : index
    %537 = memref.load %arg12[%c62] : memref<98xf32, #tpu.memory_space<smem>>
    %c1_387 = arith.constant 1 : index
    %c0_388 = arith.constant 0 : index
    %c1_389 = arith.constant 1 : index
    %c6_390 = arith.constant 6 : index
    %538 = vector.load %arg15[%c1_387, %c0_388, %c1_389, %c6_390] : memref<2x2x11x11xf32, #tpu.memory_space<vmem>>, vector<1x2x5x5xf32>
    %539 = vector.shape_cast %538 : vector<1x2x5x5xf32> to vector<2x5x5xf32>
    %540 = vector.broadcast %537 : f32 to vector<2x5x5xf32>
    %541 = arith.mulf %540, %539 : vector<2x5x5xf32>
    %542 = arith.addf %536, %541 : vector<2x5x5xf32>
    %c63 = arith.constant 63 : index
    %543 = memref.load %arg12[%c63] : memref<98xf32, #tpu.memory_space<smem>>
    %c1_391 = arith.constant 1 : index
    %c0_392 = arith.constant 0 : index
    %c2_393 = arith.constant 2 : index
    %c0_394 = arith.constant 0 : index
    %544 = vector.load %arg15[%c1_391, %c0_392, %c2_393, %c0_394] : memref<2x2x11x11xf32, #tpu.memory_space<vmem>>, vector<1x2x5x5xf32>
    %545 = vector.shape_cast %544 : vector<1x2x5x5xf32> to vector<2x5x5xf32>
    %546 = vector.broadcast %543 : f32 to vector<2x5x5xf32>
    %547 = arith.mulf %546, %545 : vector<2x5x5xf32>
    %548 = arith.addf %542, %547 : vector<2x5x5xf32>
    %c64 = arith.constant 64 : index
    %549 = memref.load %arg12[%c64] : memref<98xf32, #tpu.memory_space<smem>>
    %c1_395 = arith.constant 1 : index
    %c0_396 = arith.constant 0 : index
    %c2_397 = arith.constant 2 : index
    %c1_398 = arith.constant 1 : index
    %550 = vector.load %arg15[%c1_395, %c0_396, %c2_397, %c1_398] : memref<2x2x11x11xf32, #tpu.memory_space<vmem>>, vector<1x2x5x5xf32>
    %551 = vector.shape_cast %550 : vector<1x2x5x5xf32> to vector<2x5x5xf32>
    %552 = vector.broadcast %549 : f32 to vector<2x5x5xf32>
    %553 = arith.mulf %552, %551 : vector<2x5x5xf32>
    %554 = arith.addf %548, %553 : vector<2x5x5xf32>
    %c65 = arith.constant 65 : index
    %555 = memref.load %arg12[%c65] : memref<98xf32, #tpu.memory_space<smem>>
    %c1_399 = arith.constant 1 : index
    %c0_400 = arith.constant 0 : index
    %c2_401 = arith.constant 2 : index
    %c2_402 = arith.constant 2 : index
    %556 = vector.load %arg15[%c1_399, %c0_400, %c2_401, %c2_402] : memref<2x2x11x11xf32, #tpu.memory_space<vmem>>, vector<1x2x5x5xf32>
    %557 = vector.shape_cast %556 : vector<1x2x5x5xf32> to vector<2x5x5xf32>
    %558 = vector.broadcast %555 : f32 to vector<2x5x5xf32>
    %559 = arith.mulf %558, %557 : vector<2x5x5xf32>
    %560 = arith.addf %554, %559 : vector<2x5x5xf32>
    %c66 = arith.constant 66 : index
    %561 = memref.load %arg12[%c66] : memref<98xf32, #tpu.memory_space<smem>>
    %c1_403 = arith.constant 1 : index
    %c0_404 = arith.constant 0 : index
    %c2_405 = arith.constant 2 : index
    %c3_406 = arith.constant 3 : index
    %562 = vector.load %arg15[%c1_403, %c0_404, %c2_405, %c3_406] : memref<2x2x11x11xf32, #tpu.memory_space<vmem>>, vector<1x2x5x5xf32>
    %563 = vector.shape_cast %562 : vector<1x2x5x5xf32> to vector<2x5x5xf32>
    %564 = vector.broadcast %561 : f32 to vector<2x5x5xf32>
    %565 = arith.mulf %564, %563 : vector<2x5x5xf32>
    %566 = arith.addf %560, %565 : vector<2x5x5xf32>
    %c67 = arith.constant 67 : index
    %567 = memref.load %arg12[%c67] : memref<98xf32, #tpu.memory_space<smem>>
    %c1_407 = arith.constant 1 : index
    %c0_408 = arith.constant 0 : index
    %c2_409 = arith.constant 2 : index
    %c4_410 = arith.constant 4 : index
    %568 = vector.load %arg15[%c1_407, %c0_408, %c2_409, %c4_410] : memref<2x2x11x11xf32, #tpu.memory_space<vmem>>, vector<1x2x5x5xf32>
    %569 = vector.shape_cast %568 : vector<1x2x5x5xf32> to vector<2x5x5xf32>
    %570 = vector.broadcast %567 : f32 to vector<2x5x5xf32>
    %571 = arith.mulf %570, %569 : vector<2x5x5xf32>
    %572 = arith.addf %566, %571 : vector<2x5x5xf32>
    %c68 = arith.constant 68 : index
    %573 = memref.load %arg12[%c68] : memref<98xf32, #tpu.memory_space<smem>>
    %c1_411 = arith.constant 1 : index
    %c0_412 = arith.constant 0 : index
    %c2_413 = arith.constant 2 : index
    %c5_414 = arith.constant 5 : index
    %574 = vector.load %arg15[%c1_411, %c0_412, %c2_413, %c5_414] : memref<2x2x11x11xf32, #tpu.memory_space<vmem>>, vector<1x2x5x5xf32>
    %575 = vector.shape_cast %574 : vector<1x2x5x5xf32> to vector<2x5x5xf32>
    %576 = vector.broadcast %573 : f32 to vector<2x5x5xf32>
    %577 = arith.mulf %576, %575 : vector<2x5x5xf32>
    %578 = arith.addf %572, %577 : vector<2x5x5xf32>
    %c69 = arith.constant 69 : index
    %579 = memref.load %arg12[%c69] : memref<98xf32, #tpu.memory_space<smem>>
    %c1_415 = arith.constant 1 : index
    %c0_416 = arith.constant 0 : index
    %c2_417 = arith.constant 2 : index
    %c6_418 = arith.constant 6 : index
    %580 = vector.load %arg15[%c1_415, %c0_416, %c2_417, %c6_418] : memref<2x2x11x11xf32, #tpu.memory_space<vmem>>, vector<1x2x5x5xf32>
    %581 = vector.shape_cast %580 : vector<1x2x5x5xf32> to vector<2x5x5xf32>
    %582 = vector.broadcast %579 : f32 to vector<2x5x5xf32>
    %583 = arith.mulf %582, %581 : vector<2x5x5xf32>
    %584 = arith.addf %578, %583 : vector<2x5x5xf32>
    %c70 = arith.constant 70 : index
    %585 = memref.load %arg12[%c70] : memref<98xf32, #tpu.memory_space<smem>>
    %c1_419 = arith.constant 1 : index
    %c0_420 = arith.constant 0 : index
    %c3_421 = arith.constant 3 : index
    %c0_422 = arith.constant 0 : index
    %586 = vector.load %arg15[%c1_419, %c0_420, %c3_421, %c0_422] : memref<2x2x11x11xf32, #tpu.memory_space<vmem>>, vector<1x2x5x5xf32>
    %587 = vector.shape_cast %586 : vector<1x2x5x5xf32> to vector<2x5x5xf32>
    %588 = vector.broadcast %585 : f32 to vector<2x5x5xf32>
    %589 = arith.mulf %588, %587 : vector<2x5x5xf32>
    %590 = arith.addf %584, %589 : vector<2x5x5xf32>
    %c71 = arith.constant 71 : index
    %591 = memref.load %arg12[%c71] : memref<98xf32, #tpu.memory_space<smem>>
    %c1_423 = arith.constant 1 : index
    %c0_424 = arith.constant 0 : index
    %c3_425 = arith.constant 3 : index
    %c1_426 = arith.constant 1 : index
    %592 = vector.load %arg15[%c1_423, %c0_424, %c3_425, %c1_426] : memref<2x2x11x11xf32, #tpu.memory_space<vmem>>, vector<1x2x5x5xf32>
    %593 = vector.shape_cast %592 : vector<1x2x5x5xf32> to vector<2x5x5xf32>
    %594 = vector.broadcast %591 : f32 to vector<2x5x5xf32>
    %595 = arith.mulf %594, %593 : vector<2x5x5xf32>
    %596 = arith.addf %590, %595 : vector<2x5x5xf32>
    %c72 = arith.constant 72 : index
    %597 = memref.load %arg12[%c72] : memref<98xf32, #tpu.memory_space<smem>>
    %c1_427 = arith.constant 1 : index
    %c0_428 = arith.constant 0 : index
    %c3_429 = arith.constant 3 : index
    %c2_430 = arith.constant 2 : index
    %598 = vector.load %arg15[%c1_427, %c0_428, %c3_429, %c2_430] : memref<2x2x11x11xf32, #tpu.memory_space<vmem>>, vector<1x2x5x5xf32>
    %599 = vector.shape_cast %598 : vector<1x2x5x5xf32> to vector<2x5x5xf32>
    %600 = vector.broadcast %597 : f32 to vector<2x5x5xf32>
    %601 = arith.mulf %600, %599 : vector<2x5x5xf32>
    %602 = arith.addf %596, %601 : vector<2x5x5xf32>
    %c73 = arith.constant 73 : index
    %603 = memref.load %arg12[%c73] : memref<98xf32, #tpu.memory_space<smem>>
    %c1_431 = arith.constant 1 : index
    %c0_432 = arith.constant 0 : index
    %c3_433 = arith.constant 3 : index
    %c3_434 = arith.constant 3 : index
    %604 = vector.load %arg15[%c1_431, %c0_432, %c3_433, %c3_434] : memref<2x2x11x11xf32, #tpu.memory_space<vmem>>, vector<1x2x5x5xf32>
    %605 = vector.shape_cast %604 : vector<1x2x5x5xf32> to vector<2x5x5xf32>
    %606 = vector.broadcast %603 : f32 to vector<2x5x5xf32>
    %607 = arith.mulf %606, %605 : vector<2x5x5xf32>
    %608 = arith.addf %602, %607 : vector<2x5x5xf32>
    %c74 = arith.constant 74 : index
    %609 = memref.load %arg12[%c74] : memref<98xf32, #tpu.memory_space<smem>>
    %c1_435 = arith.constant 1 : index
    %c0_436 = arith.constant 0 : index
    %c3_437 = arith.constant 3 : index
    %c4_438 = arith.constant 4 : index
    %610 = vector.load %arg15[%c1_435, %c0_436, %c3_437, %c4_438] : memref<2x2x11x11xf32, #tpu.memory_space<vmem>>, vector<1x2x5x5xf32>
    %611 = vector.shape_cast %610 : vector<1x2x5x5xf32> to vector<2x5x5xf32>
    %612 = vector.broadcast %609 : f32 to vector<2x5x5xf32>
    %613 = arith.mulf %612, %611 : vector<2x5x5xf32>
    %614 = arith.addf %608, %613 : vector<2x5x5xf32>
    %c75 = arith.constant 75 : index
    %615 = memref.load %arg12[%c75] : memref<98xf32, #tpu.memory_space<smem>>
    %c1_439 = arith.constant 1 : index
    %c0_440 = arith.constant 0 : index
    %c3_441 = arith.constant 3 : index
    %c5_442 = arith.constant 5 : index
    %616 = vector.load %arg15[%c1_439, %c0_440, %c3_441, %c5_442] : memref<2x2x11x11xf32, #tpu.memory_space<vmem>>, vector<1x2x5x5xf32>
    %617 = vector.shape_cast %616 : vector<1x2x5x5xf32> to vector<2x5x5xf32>
    %618 = vector.broadcast %615 : f32 to vector<2x5x5xf32>
    %619 = arith.mulf %618, %617 : vector<2x5x5xf32>
    %620 = arith.addf %614, %619 : vector<2x5x5xf32>
    %c76 = arith.constant 76 : index
    %621 = memref.load %arg12[%c76] : memref<98xf32, #tpu.memory_space<smem>>
    %c1_443 = arith.constant 1 : index
    %c0_444 = arith.constant 0 : index
    %c3_445 = arith.constant 3 : index
    %c6_446 = arith.constant 6 : index
    %622 = vector.load %arg15[%c1_443, %c0_444, %c3_445, %c6_446] : memref<2x2x11x11xf32, #tpu.memory_space<vmem>>, vector<1x2x5x5xf32>
    %623 = vector.shape_cast %622 : vector<1x2x5x5xf32> to vector<2x5x5xf32>
    %624 = vector.broadcast %621 : f32 to vector<2x5x5xf32>
    %625 = arith.mulf %624, %623 : vector<2x5x5xf32>
    %626 = arith.addf %620, %625 : vector<2x5x5xf32>
    %c77 = arith.constant 77 : index
    %627 = memref.load %arg12[%c77] : memref<98xf32, #tpu.memory_space<smem>>
    %c1_447 = arith.constant 1 : index
    %c0_448 = arith.constant 0 : index
    %c4_449 = arith.constant 4 : index
    %c0_450 = arith.constant 0 : index
    %628 = vector.load %arg15[%c1_447, %c0_448, %c4_449, %c0_450] : memref<2x2x11x11xf32, #tpu.memory_space<vmem>>, vector<1x2x5x5xf32>
    %629 = vector.shape_cast %628 : vector<1x2x5x5xf32> to vector<2x5x5xf32>
    %630 = vector.broadcast %627 : f32 to vector<2x5x5xf32>
    %631 = arith.mulf %630, %629 : vector<2x5x5xf32>
    %632 = arith.addf %626, %631 : vector<2x5x5xf32>
    %c78 = arith.constant 78 : index
    %633 = memref.load %arg12[%c78] : memref<98xf32, #tpu.memory_space<smem>>
    %c1_451 = arith.constant 1 : index
    %c0_452 = arith.constant 0 : index
    %c4_453 = arith.constant 4 : index
    %c1_454 = arith.constant 1 : index
    %634 = vector.load %arg15[%c1_451, %c0_452, %c4_453, %c1_454] : memref<2x2x11x11xf32, #tpu.memory_space<vmem>>, vector<1x2x5x5xf32>
    %635 = vector.shape_cast %634 : vector<1x2x5x5xf32> to vector<2x5x5xf32>
    %636 = vector.broadcast %633 : f32 to vector<2x5x5xf32>
    %637 = arith.mulf %636, %635 : vector<2x5x5xf32>
    %638 = arith.addf %632, %637 : vector<2x5x5xf32>
    %c79 = arith.constant 79 : index
    %639 = memref.load %arg12[%c79] : memref<98xf32, #tpu.memory_space<smem>>
    %c1_455 = arith.constant 1 : index
    %c0_456 = arith.constant 0 : index
    %c4_457 = arith.constant 4 : index
    %c2_458 = arith.constant 2 : index
    %640 = vector.load %arg15[%c1_455, %c0_456, %c4_457, %c2_458] : memref<2x2x11x11xf32, #tpu.memory_space<vmem>>, vector<1x2x5x5xf32>
    %641 = vector.shape_cast %640 : vector<1x2x5x5xf32> to vector<2x5x5xf32>
    %642 = vector.broadcast %639 : f32 to vector<2x5x5xf32>
    %643 = arith.mulf %642, %641 : vector<2x5x5xf32>
    %644 = arith.addf %638, %643 : vector<2x5x5xf32>
    %c80 = arith.constant 80 : index
    %645 = memref.load %arg12[%c80] : memref<98xf32, #tpu.memory_space<smem>>
    %c1_459 = arith.constant 1 : index
    %c0_460 = arith.constant 0 : index
    %c4_461 = arith.constant 4 : index
    %c3_462 = arith.constant 3 : index
    %646 = vector.load %arg15[%c1_459, %c0_460, %c4_461, %c3_462] : memref<2x2x11x11xf32, #tpu.memory_space<vmem>>, vector<1x2x5x5xf32>
    %647 = vector.shape_cast %646 : vector<1x2x5x5xf32> to vector<2x5x5xf32>
    %648 = vector.broadcast %645 : f32 to vector<2x5x5xf32>
    %649 = arith.mulf %648, %647 : vector<2x5x5xf32>
    %650 = arith.addf %644, %649 : vector<2x5x5xf32>
    %c81 = arith.constant 81 : index
    %651 = memref.load %arg12[%c81] : memref<98xf32, #tpu.memory_space<smem>>
    %c1_463 = arith.constant 1 : index
    %c0_464 = arith.constant 0 : index
    %c4_465 = arith.constant 4 : index
    %c4_466 = arith.constant 4 : index
    %652 = vector.load %arg15[%c1_463, %c0_464, %c4_465, %c4_466] : memref<2x2x11x11xf32, #tpu.memory_space<vmem>>, vector<1x2x5x5xf32>
    %653 = vector.shape_cast %652 : vector<1x2x5x5xf32> to vector<2x5x5xf32>
    %654 = vector.broadcast %651 : f32 to vector<2x5x5xf32>
    %655 = arith.mulf %654, %653 : vector<2x5x5xf32>
    %656 = arith.addf %650, %655 : vector<2x5x5xf32>
    %c82 = arith.constant 82 : index
    %657 = memref.load %arg12[%c82] : memref<98xf32, #tpu.memory_space<smem>>
    %c1_467 = arith.constant 1 : index
    %c0_468 = arith.constant 0 : index
    %c4_469 = arith.constant 4 : index
    %c5_470 = arith.constant 5 : index
    %658 = vector.load %arg15[%c1_467, %c0_468, %c4_469, %c5_470] : memref<2x2x11x11xf32, #tpu.memory_space<vmem>>, vector<1x2x5x5xf32>
    %659 = vector.shape_cast %658 : vector<1x2x5x5xf32> to vector<2x5x5xf32>
    %660 = vector.broadcast %657 : f32 to vector<2x5x5xf32>
    %661 = arith.mulf %660, %659 : vector<2x5x5xf32>
    %662 = arith.addf %656, %661 : vector<2x5x5xf32>
    %c83 = arith.constant 83 : index
    %663 = memref.load %arg12[%c83] : memref<98xf32, #tpu.memory_space<smem>>
    %c1_471 = arith.constant 1 : index
    %c0_472 = arith.constant 0 : index
    %c4_473 = arith.constant 4 : index
    %c6_474 = arith.constant 6 : index
    %664 = vector.load %arg15[%c1_471, %c0_472, %c4_473, %c6_474] : memref<2x2x11x11xf32, #tpu.memory_space<vmem>>, vector<1x2x5x5xf32>
    %665 = vector.shape_cast %664 : vector<1x2x5x5xf32> to vector<2x5x5xf32>
    %666 = vector.broadcast %663 : f32 to vector<2x5x5xf32>
    %667 = arith.mulf %666, %665 : vector<2x5x5xf32>
    %668 = arith.addf %662, %667 : vector<2x5x5xf32>
    %c84 = arith.constant 84 : index
    %669 = memref.load %arg12[%c84] : memref<98xf32, #tpu.memory_space<smem>>
    %c1_475 = arith.constant 1 : index
    %c0_476 = arith.constant 0 : index
    %c5_477 = arith.constant 5 : index
    %c0_478 = arith.constant 0 : index
    %670 = vector.load %arg15[%c1_475, %c0_476, %c5_477, %c0_478] : memref<2x2x11x11xf32, #tpu.memory_space<vmem>>, vector<1x2x5x5xf32>
    %671 = vector.shape_cast %670 : vector<1x2x5x5xf32> to vector<2x5x5xf32>
    %672 = vector.broadcast %669 : f32 to vector<2x5x5xf32>
    %673 = arith.mulf %672, %671 : vector<2x5x5xf32>
    %674 = arith.addf %668, %673 : vector<2x5x5xf32>
    %c85 = arith.constant 85 : index
    %675 = memref.load %arg12[%c85] : memref<98xf32, #tpu.memory_space<smem>>
    %c1_479 = arith.constant 1 : index
    %c0_480 = arith.constant 0 : index
    %c5_481 = arith.constant 5 : index
    %c1_482 = arith.constant 1 : index
    %676 = vector.load %arg15[%c1_479, %c0_480, %c5_481, %c1_482] : memref<2x2x11x11xf32, #tpu.memory_space<vmem>>, vector<1x2x5x5xf32>
    %677 = vector.shape_cast %676 : vector<1x2x5x5xf32> to vector<2x5x5xf32>
    %678 = vector.broadcast %675 : f32 to vector<2x5x5xf32>
    %679 = arith.mulf %678, %677 : vector<2x5x5xf32>
    %680 = arith.addf %674, %679 : vector<2x5x5xf32>
    %c86 = arith.constant 86 : index
    %681 = memref.load %arg12[%c86] : memref<98xf32, #tpu.memory_space<smem>>
    %c1_483 = arith.constant 1 : index
    %c0_484 = arith.constant 0 : index
    %c5_485 = arith.constant 5 : index
    %c2_486 = arith.constant 2 : index
    %682 = vector.load %arg15[%c1_483, %c0_484, %c5_485, %c2_486] : memref<2x2x11x11xf32, #tpu.memory_space<vmem>>, vector<1x2x5x5xf32>
    %683 = vector.shape_cast %682 : vector<1x2x5x5xf32> to vector<2x5x5xf32>
    %684 = vector.broadcast %681 : f32 to vector<2x5x5xf32>
    %685 = arith.mulf %684, %683 : vector<2x5x5xf32>
    %686 = arith.addf %680, %685 : vector<2x5x5xf32>
    %c87 = arith.constant 87 : index
    %687 = memref.load %arg12[%c87] : memref<98xf32, #tpu.memory_space<smem>>
    %c1_487 = arith.constant 1 : index
    %c0_488 = arith.constant 0 : index
    %c5_489 = arith.constant 5 : index
    %c3_490 = arith.constant 3 : index
    %688 = vector.load %arg15[%c1_487, %c0_488, %c5_489, %c3_490] : memref<2x2x11x11xf32, #tpu.memory_space<vmem>>, vector<1x2x5x5xf32>
    %689 = vector.shape_cast %688 : vector<1x2x5x5xf32> to vector<2x5x5xf32>
    %690 = vector.broadcast %687 : f32 to vector<2x5x5xf32>
    %691 = arith.mulf %690, %689 : vector<2x5x5xf32>
    %692 = arith.addf %686, %691 : vector<2x5x5xf32>
    %c88 = arith.constant 88 : index
    %693 = memref.load %arg12[%c88] : memref<98xf32, #tpu.memory_space<smem>>
    %c1_491 = arith.constant 1 : index
    %c0_492 = arith.constant 0 : index
    %c5_493 = arith.constant 5 : index
    %c4_494 = arith.constant 4 : index
    %694 = vector.load %arg15[%c1_491, %c0_492, %c5_493, %c4_494] : memref<2x2x11x11xf32, #tpu.memory_space<vmem>>, vector<1x2x5x5xf32>
    %695 = vector.shape_cast %694 : vector<1x2x5x5xf32> to vector<2x5x5xf32>
    %696 = vector.broadcast %693 : f32 to vector<2x5x5xf32>
    %697 = arith.mulf %696, %695 : vector<2x5x5xf32>
    %698 = arith.addf %692, %697 : vector<2x5x5xf32>
    %c89 = arith.constant 89 : index
    %699 = memref.load %arg12[%c89] : memref<98xf32, #tpu.memory_space<smem>>
    %c1_495 = arith.constant 1 : index
    %c0_496 = arith.constant 0 : index
    %c5_497 = arith.constant 5 : index
    %c5_498 = arith.constant 5 : index
    %700 = vector.load %arg15[%c1_495, %c0_496, %c5_497, %c5_498] : memref<2x2x11x11xf32, #tpu.memory_space<vmem>>, vector<1x2x5x5xf32>
    %701 = vector.shape_cast %700 : vector<1x2x5x5xf32> to vector<2x5x5xf32>
    %702 = vector.broadcast %699 : f32 to vector<2x5x5xf32>
    %703 = arith.mulf %702, %701 : vector<2x5x5xf32>
    %704 = arith.addf %698, %703 : vector<2x5x5xf32>
    %c90 = arith.constant 90 : index
    %705 = memref.load %arg12[%c90] : memref<98xf32, #tpu.memory_space<smem>>
    %c1_499 = arith.constant 1 : index
    %c0_500 = arith.constant 0 : index
    %c5_501 = arith.constant 5 : index
    %c6_502 = arith.constant 6 : index
    %706 = vector.load %arg15[%c1_499, %c0_500, %c5_501, %c6_502] : memref<2x2x11x11xf32, #tpu.memory_space<vmem>>, vector<1x2x5x5xf32>
    %707 = vector.shape_cast %706 : vector<1x2x5x5xf32> to vector<2x5x5xf32>
    %708 = vector.broadcast %705 : f32 to vector<2x5x5xf32>
    %709 = arith.mulf %708, %707 : vector<2x5x5xf32>
    %710 = arith.addf %704, %709 : vector<2x5x5xf32>
    %c91 = arith.constant 91 : index
    %711 = memref.load %arg12[%c91] : memref<98xf32, #tpu.memory_space<smem>>
    %c1_503 = arith.constant 1 : index
    %c0_504 = arith.constant 0 : index
    %c6_505 = arith.constant 6 : index
    %c0_506 = arith.constant 0 : index
    %712 = vector.load %arg15[%c1_503, %c0_504, %c6_505, %c0_506] : memref<2x2x11x11xf32, #tpu.memory_space<vmem>>, vector<1x2x5x5xf32>
    %713 = vector.shape_cast %712 : vector<1x2x5x5xf32> to vector<2x5x5xf32>
    %714 = vector.broadcast %711 : f32 to vector<2x5x5xf32>
    %715 = arith.mulf %714, %713 : vector<2x5x5xf32>
    %716 = arith.addf %710, %715 : vector<2x5x5xf32>
    %c92 = arith.constant 92 : index
    %717 = memref.load %arg12[%c92] : memref<98xf32, #tpu.memory_space<smem>>
    %c1_507 = arith.constant 1 : index
    %c0_508 = arith.constant 0 : index
    %c6_509 = arith.constant 6 : index
    %c1_510 = arith.constant 1 : index
    %718 = vector.load %arg15[%c1_507, %c0_508, %c6_509, %c1_510] : memref<2x2x11x11xf32, #tpu.memory_space<vmem>>, vector<1x2x5x5xf32>
    %719 = vector.shape_cast %718 : vector<1x2x5x5xf32> to vector<2x5x5xf32>
    %720 = vector.broadcast %717 : f32 to vector<2x5x5xf32>
    %721 = arith.mulf %720, %719 : vector<2x5x5xf32>
    %722 = arith.addf %716, %721 : vector<2x5x5xf32>
    %c93 = arith.constant 93 : index
    %723 = memref.load %arg12[%c93] : memref<98xf32, #tpu.memory_space<smem>>
    %c1_511 = arith.constant 1 : index
    %c0_512 = arith.constant 0 : index
    %c6_513 = arith.constant 6 : index
    %c2_514 = arith.constant 2 : index
    %724 = vector.load %arg15[%c1_511, %c0_512, %c6_513, %c2_514] : memref<2x2x11x11xf32, #tpu.memory_space<vmem>>, vector<1x2x5x5xf32>
    %725 = vector.shape_cast %724 : vector<1x2x5x5xf32> to vector<2x5x5xf32>
    %726 = vector.broadcast %723 : f32 to vector<2x5x5xf32>
    %727 = arith.mulf %726, %725 : vector<2x5x5xf32>
    %728 = arith.addf %722, %727 : vector<2x5x5xf32>
    %c94 = arith.constant 94 : index
    %729 = memref.load %arg12[%c94] : memref<98xf32, #tpu.memory_space<smem>>
    %c1_515 = arith.constant 1 : index
    %c0_516 = arith.constant 0 : index
    %c6_517 = arith.constant 6 : index
    %c3_518 = arith.constant 3 : index
    %730 = vector.load %arg15[%c1_515, %c0_516, %c6_517, %c3_518] : memref<2x2x11x11xf32, #tpu.memory_space<vmem>>, vector<1x2x5x5xf32>
    %731 = vector.shape_cast %730 : vector<1x2x5x5xf32> to vector<2x5x5xf32>
    %732 = vector.broadcast %729 : f32 to vector<2x5x5xf32>
    %733 = arith.mulf %732, %731 : vector<2x5x5xf32>
    %734 = arith.addf %728, %733 : vector<2x5x5xf32>
    %c95 = arith.constant 95 : index
    %735 = memref.load %arg12[%c95] : memref<98xf32, #tpu.memory_space<smem>>
    %c1_519 = arith.constant 1 : index
    %c0_520 = arith.constant 0 : index
    %c6_521 = arith.constant 6 : index
    %c4_522 = arith.constant 4 : index
    %736 = vector.load %arg15[%c1_519, %c0_520, %c6_521, %c4_522] : memref<2x2x11x11xf32, #tpu.memory_space<vmem>>, vector<1x2x5x5xf32>
    %737 = vector.shape_cast %736 : vector<1x2x5x5xf32> to vector<2x5x5xf32>
    %738 = vector.broadcast %735 : f32 to vector<2x5x5xf32>
    %739 = arith.mulf %738, %737 : vector<2x5x5xf32>
    %740 = arith.addf %734, %739 : vector<2x5x5xf32>
    %c96 = arith.constant 96 : index
    %741 = memref.load %arg12[%c96] : memref<98xf32, #tpu.memory_space<smem>>
    %c1_523 = arith.constant 1 : index
    %c0_524 = arith.constant 0 : index
    %c6_525 = arith.constant 6 : index
    %c5_526 = arith.constant 5 : index
    %742 = vector.load %arg15[%c1_523, %c0_524, %c6_525, %c5_526] : memref<2x2x11x11xf32, #tpu.memory_space<vmem>>, vector<1x2x5x5xf32>
    %743 = vector.shape_cast %742 : vector<1x2x5x5xf32> to vector<2x5x5xf32>
    %744 = vector.broadcast %741 : f32 to vector<2x5x5xf32>
    %745 = arith.mulf %744, %743 : vector<2x5x5xf32>
    %746 = arith.addf %740, %745 : vector<2x5x5xf32>
    %c97 = arith.constant 97 : index
    %747 = memref.load %arg12[%c97] : memref<98xf32, #tpu.memory_space<smem>>
    %c1_527 = arith.constant 1 : index
    %c0_528 = arith.constant 0 : index
    %c6_529 = arith.constant 6 : index
    %c6_530 = arith.constant 6 : index
    %748 = vector.load %arg15[%c1_527, %c0_528, %c6_529, %c6_530] : memref<2x2x11x11xf32, #tpu.memory_space<vmem>>, vector<1x2x5x5xf32>
    %749 = vector.shape_cast %748 : vector<1x2x5x5xf32> to vector<2x5x5xf32>
    %750 = vector.broadcast %747 : f32 to vector<2x5x5xf32>
    %751 = arith.mulf %750, %749 : vector<2x5x5xf32>
    %752 = arith.addf %746, %751 : vector<2x5x5xf32>
    %753 = arith.negf %752 : vector<2x5x5xf32>
    %754 = math.exp %753 : vector<2x5x5xf32>
    %cst_531 = arith.constant 1.000000e+00 : f32
    %755 = vector.broadcast %cst_531 : f32 to vector<2x5x5xf32>
    %756 = arith.addf %755, %754 : vector<2x5x5xf32>
    %757 = arith.divf %755, %756 : vector<2x5x5xf32>
    %c0_532 = arith.constant 0 : index
    %c0_533 = arith.constant 0 : index
    %c0_534 = arith.constant 0 : index
    %758 = vector.load %arg13[%c0_532, %c0_533, %c0_534] : memref<2x5x5xf32, #tpu.memory_space<vmem>>, vector<2x5x5xf32>
    tpu.vector_store %arg13[%c0_532, %c0_533, %c0_534], %757 {strides = array<i32>} : memref<2x5x5xf32, #tpu.memory_space<vmem>>, vector<2x5x5xf32>,
    return
  }
}

</mosaic_0001>

<llo_original>
// kernel: srm_pixel_attention.1
$region0: #{srm_pixel_attention.1}
  #allocation0 [shape = 'u32[]', space=smem, size = 0x4, offset = 0x4, fixed_abs, tag = 'smem constant byte address 0x4 - core index']
  #allocation1 [shape = 'u32[72,128]{1,0:T(1,128)}', space=vmem, size = 0x9000, scoped, tag = 'internal scratch']
  #allocation2 [shape = 'bf16[146,32]{1,0:T(8,128)(2,1)}', space=vmem, size = 0x9800, scoped, tag = 'scratch operand']
  #allocation3 [shape = 'f32[2,2,11,11]{3,2,1,0:T(8,128)}', space=vmem, size = 0x8000, scoped, tag = 'scratch operand']
  %s0 = inlined_call_operand.vmem [shape: bf16[138,16], index: 0, kind: input, shape index: {}]
  %s1 = inlined_call_operand.vmem [shape: bf16[4,16,32], index: 1, kind: input, shape index: {}]
  %s2 = inlined_call_operand.vmem [shape: bf16[9,32,64], index: 2, kind: input, shape index: {}]
  %s3 = inlined_call_operand.vmem [shape: f32[1,32], index: 3, kind: input, shape index: {}]
  %s4 = inlined_call_operand.vmem [shape: f32[1,32], index: 4, kind: input, shape index: {}]
  %s5 = inlined_call_operand.vmem [shape: f32[1,64], index: 5, kind: input, shape index: {}]
  %s6 = inlined_call_operand.vmem [shape: f32[1,64], index: 6, kind: input, shape index: {}]
  %s7 = inlined_call_operand.vmem [shape: f32[16,128], index: 7, kind: input, shape index: {}]
  %s8 = inlined_call_operand.vmem [shape: f32[128,16], index: 8, kind: input, shape index: {}]
  %s9 = inlined_call_operand.vmem [shape: f32[128,16], index: 9, kind: input, shape index: {}]
  %s10 = inlined_call_operand.vmem [shape: f32[128,1], index: 10, kind: input, shape index: {}]
  %s11 = inlined_call_operand.vmem [shape: f32[128,1], index: 11, kind: input, shape index: {}]
  %s12 = inlined_call_operand.vmem [shape: f32[98], index: 12, kind: input, shape index: {}]
  %s13 = inlined_call_operand.vmem [shape: f32[2,5,5], index: 13, kind: output, shape index: {}]
  %s14 = sld [smem:[#allocation0]]
  $region66: #{srm_pixel_attention.1} parent=0
    _
  %s16 = ssub.s32 1, %s14
  %s17 = scalar_select 0, %s16, %s14
  $region1: #{srm_pixel_attention.1} parent=0
    #allocation4 [shape = 'u8[512]{0}', space=smem, size = 0x200, scoped, tag = 'input window, operand 12, single buffered']
    #allocation5 [shape = 's32[1]{0}', space=sflag, size = 0x4, scoped, tag = 'scoped memory for srm_pixel_attention.1']
    %18 = vsyncpa [#allocation5], 0
    // Predicated region
    $region2: #{srm_pixel_attention.1} parent=1 // pred_check
      _
    $region3: #{srm_pixel_attention.1} parent=1 // pred_check_branch
      %20 = sbr.rel (0) target = $region5
    $region4: #{srm_pixel_attention.1} parent=1 // pred_region
      _
    $region5: #{srm_pixel_attention.1} parent=1 // pred_fallthru
      _
    // Predicated region
    $region6: #{srm_pixel_attention.1} parent=1 // pred_check
      _
    $region7: #{srm_pixel_attention.1} parent=1 // pred_check_branch
      %22 = sbr.rel (0) target = $region9
    $region8: #{srm_pixel_attention.1} parent=1 // pred_region
      _
    $region9: #{srm_pixel_attention.1} parent=1 // pred_fallthru
      _
    // Predicated region
    $region10: #{srm_pixel_attention.1} parent=1 // pred_check
      _
    $region11: #{srm_pixel_attention.1} parent=1 // pred_check_branch
      %24 = sbr.rel (0) target = $region13
    $region12: #{srm_pixel_attention.1} parent=1 // pred_region
      _
    $region13: #{srm_pixel_attention.1} parent=1 // pred_fallthru
      _
    // Predicated region
    $region14: #{srm_pixel_attention.1} parent=1 // pred_check
      _
    $region15: #{srm_pixel_attention.1} parent=1 // pred_check_branch
      %26 = sbr.rel (0) target = $region17
    $region16: #{srm_pixel_attention.1} parent=1 // pred_region
      _
    $region17: #{srm_pixel_attention.1} parent=1 // pred_fallthru
      _
    // Predicated region
    $region18: #{srm_pixel_attention.1} parent=1 // pred_check
      _
    $region19: #{srm_pixel_attention.1} parent=1 // pred_check_branch
      %28 = sbr.rel (0) target = $region21
    $region20: #{srm_pixel_attention.1} parent=1 // pred_region
      _
    $region21: #{srm_pixel_attention.1} parent=1 // pred_fallthru
      _
    // Predicated region
    $region22: #{srm_pixel_attention.1} parent=1 // pred_check
      _
    $region23: #{srm_pixel_attention.1} parent=1 // pred_check_branch
      %30 = sbr.rel (0) target = $region25
    $region24: #{srm_pixel_attention.1} parent=1 // pred_region
      _
    $region25: #{srm_pixel_attention.1} parent=1 // pred_fallthru
      _
    // Predicated region
    $region26: #{srm_pixel_attention.1} parent=1 // pred_check
      _
    $region27: #{srm_pixel_attention.1} parent=1 // pred_check_branch
      %32 = sbr.rel (0) target = $region29
    $region28: #{srm_pixel_attention.1} parent=1 // pred_region
      _
    $region29: #{srm_pixel_attention.1} parent=1 // pred_fallthru
      _
    // Predicated region
    $region30: #{srm_pixel_attention.1} parent=1 // pred_check
      _
    $region31: #{srm_pixel_attention.1} parent=1 // pred_check_branch
      %34 = sbr.rel (0) target = $region33
    $region32: #{srm_pixel_attention.1} parent=1 // pred_region
      _
    $region33: #{srm_pixel_attention.1} parent=1 // pred_fallthru
      _
    // Predicated region
    $region34: #{srm_pixel_attention.1} parent=1 // pred_check
      _
    $region35: #{srm_pixel_attention.1} parent=1 // pred_check_branch
      %36 = sbr.rel (0) target = $region37
    $region36: #{srm_pixel_attention.1} parent=1 // pred_region
      _
    $region37: #{srm_pixel_attention.1} parent=1 // pred_fallthru
      _
    // Predicated region
    $region38: #{srm_pixel_attention.1} parent=1 // pred_check
      _
    $region39: #{srm_pixel_attention.1} parent=1 // pred_check_branch
      %38 = sbr.rel (0) target = $region41
    $region40: #{srm_pixel_attention.1} parent=1 // pred_region
      _
    $region41: #{srm_pixel_attention.1} parent=1 // pred_fallthru
      _
    // Predicated region
    $region42: #{srm_pixel_attention.1} parent=1 // pred_check
      _
    $region43: #{srm_pixel_attention.1} parent=1 // pred_check_branch
      %40 = sbr.rel (0) target = $region45
    $region44: #{srm_pixel_attention.1} parent=1 // pred_region
      _
    $region45: #{srm_pixel_attention.1} parent=1 // pred_fallthru
      _
    // Predicated region
    $region46: #{srm_pixel_attention.1} parent=1 // pred_check
      _
    $region47: #{srm_pixel_attention.1} parent=1 // pred_check_branch
      %42 = sbr.rel (0) target = $region49
    $region48: #{srm_pixel_attention.1} parent=1 // pred_region
      _
    $region49: #{srm_pixel_attention.1} parent=1 // pred_fallthru
      _
    // Predicated region
    $region50: #{srm_pixel_attention.1} parent=1 // pred_check
      _
    $region51: #{srm_pixel_attention.1} parent=1 // pred_check_branch
      %44 = sbr.rel (0) target = $region53
    $region52: #{srm_pixel_attention.1} parent=1 // pred_region
      %46 = vsyncadd [#allocation5], 0
      %s48 = sshll.u32 %s12, 4
      %s49 = int_to_ptr.vmem [resolvable:$true] %s48
      %51 = dma.vmem_to_smem %s49, 16, [#allocation4], [#allocation5]
    $region53: #{srm_pixel_attention.1} parent=1 // pred_fallthru
      _
    // Predicated region
    $region54: #{srm_pixel_attention.1} parent=1 // pred_check
      _
    $region55: #{srm_pixel_attention.1} parent=1 // pred_check_branch
      %53 = sbr.rel (0) target = $region57
    $region56: #{srm_pixel_attention.1} parent=1 // pred_region
      %55 = dma.done [#allocation5], 16
    $region57: #{srm_pixel_attention.1} parent=1 // pred_fallthru
      _
    %56 = sfence
    %v58 = vld [vmem:[%s0] sm:$0xf]
    %v59 = vld [vmem:[%s0 + $0x4] sm:$0xf]
    %v60 = vld [vmem:[%s0 + $0x8] sm:$0xf]
    %v61 = vld [vmem:[%s0 + $0xc] sm:$0xf]
    %v62 = vld [vmem:[%s0 + $0x10] sm:$0xf]
    %v63 = vld [vmem:[%s0 + $0x14] sm:$0xf]
    %v64 = vld [vmem:[%s0 + $0x18] sm:$0xf]
    %v65 = vld [vmem:[%s0 + $0x1c] sm:$0xf]
    %v66 = vld [vmem:[%s0 + $0x20] sm:$0xf]
    %v67 = vld [vmem:[%s0 + $0x24] sm:$0xf]
    %v68 = vld [vmem:[%s0 + $0x28] sm:$0xf]
    %v69 = vld [vmem:[%s0 + $0x2c] sm:$0xf]
    %v70 = vld [vmem:[%s0 + $0x30] sm:$0xf]
    %v71 = vld [vmem:[%s0 + $0x34] sm:$0xf]
    %v72 = vld [vmem:[%s0 + $0x38] sm:$0xf]
    %v73 = vld [vmem:[%s0 + $0x3c] sm:$0xf]
    %v74 = vld [vmem:[%s1] sm:$0xf]
    %v75 = vld [vmem:[%s1 + $0x4] sm:$0xf]
    %v76 = vld [vmem:[%s0 + $0x40] sm:$0x1]
    %s77 = scalar_lea.vmem %s1, 8
    %v78 = vld [vmem:[%s77] sm:$0xf]
    %v79 = vld [vmem:[%s77 + $0x4] sm:$0xf]
    %v97 = vunpack.c.l.b16 %v58
    %v98 = vunpack.c.l.b16 %v59
    %v99 = vunpack.c.l.b16 %v60
    %v100 = vunpack.c.l.b16 %v61
    %v101 = vunpack.c.l.b16 %v62
    %v102 = vunpack.c.l.b16 %v63
    %v103 = vunpack.c.l.b16 %v64
    %v104 = vunpack.c.l.b16 %v65
    %v105 = vunpack.c.l.b16 %v66
    %v106 = vunpack.c.l.b16 %v67
    %v107 = vunpack.c.l.b16 %v68
    %v108 = vunpack.c.l.b16 %v69
    %v109 = vunpack.c.l.b16 %v70
    %v110 = vunpack.c.l.b16 %v71
    %v111 = vunpack.c.l.b16 %v72
    %v112 = vunpack.c.l.b16 %v73
    %v113 = vunpack.c.l.b16 %v76
    %v114 = vpack.c.b16 %v98, %v97
    %v115 = vpack.c.b16 %v100, %v99
    %v116 = vpack.c.b16 %v102, %v101
    %v117 = vpack.c.b16 %v104, %v103
    %v118 = vpack.c.b16 %v106, %v105
    %v119 = vpack.c.b16 %v108, %v107
    %v120 = vpack.c.b16 %v110, %v109
    %v121 = vpack.c.b16 %v112, %v111
    %v122 = vpack.c.b16 %v113, %v113
    %vm123 = vsmask.f32 7424
    %v125 = vshrl.u32 %v114, 16
    %v127 = vshll.u32 %v114, 16
    %v129 = vrot.slane %v127, 1
    %v130 = vor.u32 %v125, %v129
    %v132 = vshll.u32 %v115, 16
    %v134 = vrot.slane %v132, 1
    %v135 = vsel %vm123, %v130, %v134
    %v136 = vshrl.u32 %v115, 16
    %v138 = vor.u32 %v136, %v134
    %v140 = vshll.u32 %v116, 16
    %v142 = vrot.slane %v140, 1
    %v143 = vsel %vm123, %v138, %v142
    %v144 = vshrl.u32 %v116, 16
    %v146 = vor.u32 %v144, %v142
    %v148 = vshll.u32 %v117, 16
    %v150 = vrot.slane %v148, 1
    %v151 = vsel %vm123, %v146, %v150
    %v152 = vshrl.u32 %v117, 16
    %v154 = vor.u32 %v152, %v150
    %v156 = vshll.u32 %v118, 16
    %v158 = vrot.slane %v156, 1
    %v159 = vsel %vm123, %v154, %v158
    %v160 = vshrl.u32 %v118, 16
    %v162 = vor.u32 %v160, %v158
    %v164 = vshll.u32 %v119, 16
    %v166 = vrot.slane %v164, 1
    %v167 = vsel %vm123, %v162, %v166
    %v168 = vshrl.u32 %v119, 16
    %v170 = vor.u32 %v168, %v166
    %v172 = vshll.u32 %v120, 16
    %v174 = vrot.slane %v172, 1
    %v175 = vsel %vm123, %v170, %v174
    %v176 = vshrl.u32 %v120, 16
    %v178 = vor.u32 %v176, %v174
    %v180 = vshll.u32 %v121, 16
    %v182 = vrot.slane %v180, 1
    %v183 = vsel %vm123, %v178, %v182
    %v184 = vshrl.u32 %v121, 16
    %v186 = vor.u32 %v184, %v182
    %v188 = vshll.u32 %v122, 16
    %v190 = vrot.slane %v188, 1
    %v191 = vsel %vm123, %v186, %v190
    %v194 = vunpack.c.l.b16 %v78
    %v195 = vunpack.c.l.b16 %v79
    %v196 = vpack.c.b16 %v195, %v194
    %vm198 = vcmask 130048
    %v200 = vsel %vm198, %v135, 0
    %v203 = vsel %vm198, %v143, 0
    %v206 = vsel %vm198, %v151, 0
    %v209 = vsel %vm198, %v159, 0
    %v212 = vsel %vm198, %v167, 0
    %v215 = vsel %vm198, %v175, 0
    %v218 = vsel %vm198, %v183, 0
    %v221 = vsel %vm198, %v191, 0
    %223 = vmatpush.bf16.msra.mxu0 0
    %224 = vmatpush.bf16.msra.mxu0 0
    %225 = vmatpush.bf16.msra.mxu0 0
    %226 = vmatpush.bf16.msra.mxu0 0
    %227 = vmatpush.bf16.msra.mxu0 0
    %228 = vmatpush.bf16.msra.mxu0 0
    %229 = vmatpush.bf16.msra.mxu0 0
    %230 = vmatpush.bf16.msra.mxu0 %v196
    %231 = vmatmul.bf16.gmra.mxu0 %v200
    %v232 = vpop.f32.mrf.mxu0
    %v233 = vadd.f32 0.0, %v232
    %v234 = vpop.f32.mrf.mxu0
    %v235 = vadd.f32 0.0, %v234
    %236 = vmatmul.bf16.gmra.mxu0 %v203
    %v237 = vpop.f32.mrf.mxu0
    %v238 = vadd.f32 0.0, %v237
    %v239 = vpop.f32.mrf.mxu0
    %v240 = vadd.f32 0.0, %v239
    %241 = vmatmul.bf16.gmra.mxu0 %v206
    %v242 = vpop.f32.mrf.mxu0
    %v243 = vadd.f32 0.0, %v242
    %v244 = vpop.f32.mrf.mxu0
    %v245 = vadd.f32 0.0, %v244
    %246 = vmatmul.bf16.gmra.mxu0 %v209
    %v247 = vpop.f32.mrf.mxu0
    %v248 = vadd.f32 0.0, %v247
    %v249 = vpop.f32.mrf.mxu0
    %v250 = vadd.f32 0.0, %v249
    %251 = vmatmul.bf16.gmra.mxu0 %v212
    %v252 = vpop.f32.mrf.mxu0
    %v253 = vadd.f32 0.0, %v252
    %v254 = vpop.f32.mrf.mxu0
    %v255 = vadd.f32 0.0, %v254
    %256 = vmatmul.bf16.gmra.mxu0 %v215
    %v257 = vpop.f32.mrf.mxu0
    %v258 = vadd.f32 0.0, %v257
    %v259 = vpop.f32.mrf.mxu0
    %v260 = vadd.f32 0.0, %v259
    %261 = vmatmul.bf16.gmra.mxu0 %v218
    %v262 = vpop.f32.mrf.mxu0
    %v263 = vadd.f32 0.0, %v262
    %v264 = vpop.f32.mrf.mxu0
    %v265 = vadd.f32 0.0, %v264
    %266 = vmatmul.bf16.gmra.mxu0 %v221
    %v267 = vpop.f32.mrf.mxu0
    %v268 = vadd.f32 0.0, %v267
    %v269 = vpop.f32.mrf.mxu0
    %v270 = vadd.f32 0.0, %v269
    %271 = vdwg.mxu0
    %v274 = vunpack.c.l.b16 %v74
    %v275 = vunpack.c.l.b16 %v75
    %v276 = vpack.c.b16 %v275, %v274
    %v278 = vsel %vm198, %v114, 0
    %v280 = vsel %vm198, %v115, 0
    %v282 = vsel %vm198, %v116, 0
    %v284 = vsel %vm198, %v117, 0
    %v286 = vsel %vm198, %v118, 0
    %v288 = vsel %vm198, %v119, 0
    %v290 = vsel %vm198, %v120, 0
    %v292 = vsel %vm198, %v121, 0
    %294 = vmatpush.bf16.msra.mxu0 0
    %295 = vmatpush.bf16.msra.mxu0 0
    %296 = vmatpush.bf16.msra.mxu0 0
    %297 = vmatpush.bf16.msra.mxu0 0
    %298 = vmatpush.bf16.msra.mxu0 0
    %299 = vmatpush.bf16.msra.mxu0 0
    %300 = vmatpush.bf16.msra.mxu0 0
    %301 = vmatpush.bf16.msra.mxu0 %v276
    %302 = vmatmul.bf16.gmra.mxu0 %v278
    %v303 = vpop.f32.mrf.mxu0
    %v304 = vadd.f32 %v233, %v303
    %v305 = vpop.f32.mrf.mxu0
    %v306 = vadd.f32 %v235, %v305
    %307 = vmatmul.bf16.gmra.mxu0 %v280
    %v308 = vpop.f32.mrf.mxu0
    %v309 = vadd.f32 %v238, %v308
    %v310 = vpop.f32.mrf.mxu0
    %v311 = vadd.f32 %v240, %v310
    %312 = vmatmul.bf16.gmra.mxu0 %v282
    %v313 = vpop.f32.mrf.mxu0
    %v314 = vadd.f32 %v243, %v313
    %v315 = vpop.f32.mrf.mxu0
    %v316 = vadd.f32 %v245, %v315
    %317 = vmatmul.bf16.gmra.mxu0 %v284
    %v318 = vpop.f32.mrf.mxu0
    %v319 = vadd.f32 %v248, %v318
    %v320 = vpop.f32.mrf.mxu0
    %v321 = vadd.f32 %v250, %v320
    %322 = vmatmul.bf16.gmra.mxu0 %v286
    %v323 = vpop.f32.mrf.mxu0
    %v324 = vadd.f32 %v253, %v323
    %v325 = vpop.f32.mrf.mxu0
    %v326 = vadd.f32 %v255, %v325
    %327 = vmatmul.bf16.gmra.mxu0 %v288
    %v328 = vpop.f32.mrf.mxu0
    %v329 = vadd.f32 %v258, %v328
    %v330 = vpop.f32.mrf.mxu0
    %v331 = vadd.f32 %v260, %v330
    %332 = vmatmul.bf16.gmra.mxu0 %v290
    %v333 = vpop.f32.mrf.mxu0
    %v334 = vadd.f32 %v263, %v333
    %v335 = vpop.f32.mrf.mxu0
    %v336 = vadd.f32 %v265, %v335
    %337 = vmatmul.bf16.gmra.mxu0 %v292
    %v338 = vpop.f32.mrf.mxu0
    %v339 = vadd.f32 %v268, %v338
    %v340 = vpop.f32.mrf.mxu0
    %v341 = vadd.f32 %v270, %v340
    %342 = vdwg.mxu0
    %v343 = vld [vmem:[%s0 + $0x40] sm:$0xf]
    %s344 = scalar_lea.vmem %s1, 16
    %v345 = vld [vmem:[%s344] sm:$0xf]
    %v346 = vld [vmem:[%s344 + $0x4] sm:$0xf]
    %v348 = vunpack.c.l.b16 %v343
    %v349 = vpack.c.b16 %v99, %v98
    %v350 = vpack.c.b16 %v101, %v100
    %v351 = vpack.c.b16 %v103, %v102
    %v352 = vpack.c.b16 %v105, %v104
    %v353 = vpack.c.b16 %v107, %v106
    %v354 = vpack.c.b16 %v109, %v108
    %v355 = vpack.c.b16 %v111, %v110
    %v356 = vpack.c.b16 %v348, %v112
    %v359 = vunpack.c.l.b16 %v345
    %v360 = vunpack.c.l.b16 %v346
    %v361 = vpack.c.b16 %v360, %v359
    %v364 = vsel %vm198, %v349, 0
    %v367 = vsel %vm198, %v350, 0
    %v370 = vsel %vm198, %v351, 0
    %v373 = vsel %vm198, %v352, 0
    %v376 = vsel %vm198, %v353, 0
    %v379 = vsel %vm198, %v354, 0
    %v382 = vsel %vm198, %v355, 0
    %v385 = vsel %vm198, %v356, 0
    %387 = vmatpush.bf16.msra.mxu0 0
    %388 = vmatpush.bf16.msra.mxu0 0
    %389 = vmatpush.bf16.msra.mxu0 0
    %390 = vmatpush.bf16.msra.mxu0 0
    %391 = vmatpush.bf16.msra.mxu0 0
    %392 = vmatpush.bf16.msra.mxu0 0
    %393 = vmatpush.bf16.msra.mxu0 0
    %394 = vmatpush.bf16.msra.mxu0 %v361
    %395 = vmatmul.bf16.gmra.mxu0 %v364
    %v396 = vpop.f32.mrf.mxu0
    %v397 = vadd.f32 0.0, %v396
    %v398 = vpop.f32.mrf.mxu0
    %v399 = vadd.f32 0.0, %v398
    %400 = vmatmul.bf16.gmra.mxu0 %v367
    %v401 = vpop.f32.mrf.mxu0
    %v402 = vadd.f32 0.0, %v401
    %v403 = vpop.f32.mrf.mxu0
    %v404 = vadd.f32 0.0, %v403
    %405 = vmatmul.bf16.gmra.mxu0 %v370
    %v406 = vpop.f32.mrf.mxu0
    %v407 = vadd.f32 0.0, %v406
    %v408 = vpop.f32.mrf.mxu0
    %v409 = vadd.f32 0.0, %v408
    %410 = vmatmul.bf16.gmra.mxu0 %v373
    %v411 = vpop.f32.mrf.mxu0
    %v412 = vadd.f32 0.0, %v411
    %v413 = vpop.f32.mrf.mxu0
    %v414 = vadd.f32 0.0, %v413
    %415 = vmatmul.bf16.gmra.mxu0 %v376
    %v416 = vpop.f32.mrf.mxu0
    %v417 = vadd.f32 0.0, %v416
    %v418 = vpop.f32.mrf.mxu0
    %v419 = vadd.f32 0.0, %v418
    %420 = vmatmul.bf16.gmra.mxu0 %v379
    %v421 = vpop.f32.mrf.mxu0
    %v422 = vadd.f32 0.0, %v421
    %v423 = vpop.f32.mrf.mxu0
    %v424 = vadd.f32 0.0, %v423
    %425 = vmatmul.bf16.gmra.mxu0 %v382
    %v426 = vpop.f32.mrf.mxu0
    %v427 = vadd.f32 0.0, %v426
    %v428 = vpop.f32.mrf.mxu0
    %v429 = vadd.f32 0.0, %v428
    %430 = vmatmul.bf16.gmra.mxu0 %v385
    %v431 = vpop.f32.mrf.mxu0
    %v432 = vadd.f32 0.0, %v431
    %v433 = vpop.f32.mrf.mxu0
    %v434 = vadd.f32 0.0, %v433
    %435 = vdwg.mxu0
    %v436 = vadd.f32 %v304, %v397
    %v437 = vadd.f32 %v306, %v399
    %v438 = vadd.f32 %v309, %v402
    %v439 = vadd.f32 %v311, %v404
    %v440 = vadd.f32 %v314, %v407
    %v441 = vadd.f32 %v316, %v409
    %v442 = vadd.f32 %v319, %v412
    %v443 = vadd.f32 %v321, %v414
    %v444 = vadd.f32 %v324, %v417
    %v445 = vadd.f32 %v326, %v419
    %v446 = vadd.f32 %v329, %v422
    %v447 = vadd.f32 %v331, %v424
    %v448 = vadd.f32 %v334, %v427
    %v449 = vadd.f32 %v336, %v429
    %v450 = vadd.f32 %v339, %v432
    %v451 = vadd.f32 %v341, %v434
    %v452 = vld [vmem:[%s0 + $0x4] sm:$0xf]
    %v453 = vld [vmem:[%s0 + $0x8] sm:$0xf]
    %v454 = vld [vmem:[%s0 + $0xc] sm:$0xf]
    %v455 = vld [vmem:[%s0 + $0x10] sm:$0xf]
    %v456 = vld [vmem:[%s0 + $0x14] sm:$0xf]
    %v457 = vld [vmem:[%s0 + $0x18] sm:$0xf]
    %v458 = vld [vmem:[%s0 + $0x1c] sm:$0xf]
    %v459 = vld [vmem:[%s0 + $0x20] sm:$0xf]
    %v460 = vld [vmem:[%s0 + $0x24] sm:$0xf]
    %v461 = vld [vmem:[%s0 + $0x28] sm:$0xf]
    %v462 = vld [vmem:[%s0 + $0x2c] sm:$0xf]
    %v463 = vld [vmem:[%s0 + $0x30] sm:$0xf]
    %v464 = vld [vmem:[%s0 + $0x34] sm:$0xf]
    %v465 = vld [vmem:[%s0 + $0x38] sm:$0xf]
    %v466 = vld [vmem:[%s0 + $0x3c] sm:$0xf]
    %v467 = vld [vmem:[%s0 + $0x40] sm:$0xf]
    %v468 = vld [vmem:[%s0 + $0x44] sm:$0x1]
    %s469 = scalar_lea.vmem %s1, 24
    %v470 = vld [vmem:[%s469] sm:$0xf]
    %v471 = vld [vmem:[%s469 + $0x4] sm:$0xf]
    %v489 = vunpack.c.l.b16 %v452
    %v490 = vunpack.c.l.b16 %v453
    %v491 = vunpack.c.l.b16 %v454
    %v492 = vunpack.c.l.b16 %v455
    %v493 = vunpack.c.l.b16 %v456
    %v494 = vunpack.c.l.b16 %v457
    %v495 = vunpack.c.l.b16 %v458
    %v496 = vunpack.c.l.b16 %v459
    %v497 = vunpack.c.l.b16 %v460
    %v498 = vunpack.c.l.b16 %v461
    %v499 = vunpack.c.l.b16 %v462
    %v500 = vunpack.c.l.b16 %v463
    %v501 = vunpack.c.l.b16 %v464
    %v502 = vunpack.c.l.b16 %v465
    %v503 = vunpack.c.l.b16 %v466
    %v504 = vunpack.c.l.b16 %v467
    %v505 = vunpack.c.l.b16 %v468
    %v506 = vpack.c.b16 %v490, %v489
    %v507 = vpack.c.b16 %v492, %v491
    %v508 = vpack.c.b16 %v494, %v493
    %v509 = vpack.c.b16 %v496, %v495
    %v510 = vpack.c.b16 %v498, %v497
    %v511 = vpack.c.b16 %v500, %v499
    %v512 = vpack.c.b16 %v502, %v501
    %v513 = vpack.c.b16 %v504, %v503
    %v514 = vpack.c.b16 %v505, %v505
    %v516 = vshrl.u32 %v506, 16
    %v518 = vshll.u32 %v506, 16
    %v520 = vrot.slane %v518, 1
    %v521 = vor.u32 %v516, %v520
    %v523 = vshll.u32 %v507, 16
    %v525 = vrot.slane %v523, 1
    %v526 = vsel %vm123, %v521, %v525
    %v527 = vshrl.u32 %v507, 16
    %v529 = vor.u32 %v527, %v525
    %v531 = vshll.u32 %v508, 16
    %v533 = vrot.slane %v531, 1
    %v534 = vsel %vm123, %v529, %v533
    %v535 = vshrl.u32 %v508, 16
    %v537 = vor.u32 %v535, %v533
    %v539 = vshll.u32 %v509, 16
    %v541 = vrot.slane %v539, 1
    %v542 = vsel %vm123, %v537, %v541
    %v543 = vshrl.u32 %v509, 16
    %v545 = vor.u32 %v543, %v541
    %v547 = vshll.u32 %v510, 16
    %v549 = vrot.slane %v547, 1
    %v550 = vsel %vm123, %v545, %v549
    %v551 = vshrl.u32 %v510, 16
    %v553 = vor.u32 %v551, %v549
    %v555 = vshll.u32 %v511, 16
    %v557 = vrot.slane %v555, 1
    %v558 = vsel %vm123, %v553, %v557
    %v559 = vshrl.u32 %v511, 16
    %v561 = vor.u32 %v559, %v557
    %v563 = vshll.u32 %v512, 16
    %v565 = vrot.slane %v563, 1
    %v566 = vsel %vm123, %v561, %v565
    %v567 = vshrl.u32 %v512, 16
    %v569 = vor.u32 %v567, %v565
    %v571 = vshll.u32 %v513, 16
    %v573 = vrot.slane %v571, 1
    %v574 = vsel %vm123, %v569, %v573
    %v575 = vshrl.u32 %v513, 16
    %v577 = vor.u32 %v575, %v573
    %v579 = vshll.u32 %v514, 16
    %v581 = vrot.slane %v579, 1
    %v582 = vsel %vm123, %v577, %v581
    %v585 = vunpack.c.l.b16 %v470
    %v586 = vunpack.c.l.b16 %v471
    %v587 = vpack.c.b16 %v586, %v585
    %v590 = vsel %vm198, %v526, 0
    %v593 = vsel %vm198, %v534, 0
    %v596 = vsel %vm198, %v542, 0
    %v599 = vsel %vm198, %v550, 0
    %v602 = vsel %vm198, %v558, 0
    %v605 = vsel %vm198, %v566, 0
    %v608 = vsel %vm198, %v574, 0
    %v611 = vsel %vm198, %v582, 0
    %613 = vmatpush.bf16.msra.mxu0 0
    %614 = vmatpush.bf16.msra.mxu0 0
    %615 = vmatpush.bf16.msra.mxu0 0
    %616 = vmatpush.bf16.msra.mxu0 0
    %617 = vmatpush.bf16.msra.mxu0 0
    %618 = vmatpush.bf16.msra.mxu0 0
    %619 = vmatpush.bf16.msra.mxu0 0
    %620 = vmatpush.bf16.msra.mxu0 %v587
    %621 = vmatmul.bf16.gmra.mxu0 %v590
    %v622 = vpop.f32.mrf.mxu0
    %v623 = vadd.f32 0.0, %v622
    %v624 = vpop.f32.mrf.mxu0
    %v625 = vadd.f32 0.0, %v624
    %626 = vmatmul.bf16.gmra.mxu0 %v593
    %v627 = vpop.f32.mrf.mxu0
    %v628 = vadd.f32 0.0, %v627
    %v629 = vpop.f32.mrf.mxu0
    %v630 = vadd.f32 0.0, %v629
    %631 = vmatmul.bf16.gmra.mxu0 %v596
    %v632 = vpop.f32.mrf.mxu0
    %v633 = vadd.f32 0.0, %v632
    %v634 = vpop.f32.mrf.mxu0
    %v635 = vadd.f32 0.0, %v634
    %636 = vmatmul.bf16.gmra.mxu0 %v599
    %v637 = vpop.f32.mrf.mxu0
    %v638 = vadd.f32 0.0, %v637
    %v639 = vpop.f32.mrf.mxu0
    %v640 = vadd.f32 0.0, %v639
    %641 = vmatmul.bf16.gmra.mxu0 %v602
    %v642 = vpop.f32.mrf.mxu0
    %v643 = vadd.f32 0.0, %v642
    %v644 = vpop.f32.mrf.mxu0
    %v645 = vadd.f32 0.0, %v644
    %646 = vmatmul.bf16.gmra.mxu0 %v605
    %v647 = vpop.f32.mrf.mxu0
    %v648 = vadd.f32 0.0, %v647
    %v649 = vpop.f32.mrf.mxu0
    %v650 = vadd.f32 0.0, %v649
    %651 = vmatmul.bf16.gmra.mxu0 %v608
    %v652 = vpop.f32.mrf.mxu0
    %v653 = vadd.f32 0.0, %v652
    %v654 = vpop.f32.mrf.mxu0
    %v655 = vadd.f32 0.0, %v654
    %656 = vmatmul.bf16.gmra.mxu0 %v611
    %v657 = vpop.f32.mrf.mxu0
    %v658 = vadd.f32 0.0, %v657
    %v659 = vpop.f32.mrf.mxu0
    %v660 = vadd.f32 0.0, %v659
    %661 = vdwg.mxu0
    %v662 = vadd.f32 %v436, %v623
    %v663 = vadd.f32 %v437, %v625
    %v664 = vadd.f32 %v438, %v628
    %v665 = vadd.f32 %v439, %v630
    %v666 = vadd.f32 %v440, %v633
    %v667 = vadd.f32 %v441, %v635
    %v668 = vadd.f32 %v442, %v638
    %v669 = vadd.f32 %v443, %v640
    %v670 = vadd.f32 %v444, %v643
    %v671 = vadd.f32 %v445, %v645
    %v672 = vadd.f32 %v446, %v648
    %v673 = vadd.f32 %v447, %v650
    %v674 = vadd.f32 %v448, %v653
    %v675 = vadd.f32 %v449, %v655
    %v676 = vadd.f32 %v450, %v658
    %v677 = vadd.f32 %v451, %v660
    %v678 = vld [vmem:[%s10] sm:$0xff]
    %v679 = vld [vmem:[%s10 + $0x8] sm:$0xff]
    %v680 = vld [vmem:[%s10 + $0x10] sm:$0xff]
    %v681 = vld [vmem:[%s10 + $0x18] sm:$0xff]
    %v682 = vld [vmem:[%s10 + $0x20] sm:$0xff]
    %v683 = vld [vmem:[%s10 + $0x28] sm:$0xff]
    %v684 = vld [vmem:[%s10 + $0x30] sm:$0xff]
    %v685 = vld [vmem:[%s10 + $0x38] sm:$0xff]
    %v686 = vld [vmem:[%s10 + $0x40] sm:$0xff]
    %v687 = vld [vmem:[%s10 + $0x48] sm:$0xff]
    %v688 = vld [vmem:[%s10 + $0x50] sm:$0xff]
    %v689 = vld [vmem:[%s10 + $0x58] sm:$0xff]
    %v690 = vld [vmem:[%s10 + $0x60] sm:$0xff]
    %v691 = vld [vmem:[%s10 + $0x68] sm:$0xff]
    %v692 = vld [vmem:[%s10 + $0x70] sm:$0xff]
    %v693 = vld [vmem:[%s10 + $0x78] sm:$0xff]
    %695 = vset.pattern.permute.xlu0 0
    %696 = vperm.xlu0 %695, %v678
    %v697 = vpop.permute.xlu0 %696
    %700 = vset.pattern.permute.xlu0 0
    %701 = vperm.xlu0 %700, %v679
    %v702 = vpop.permute.xlu0 %701
    %705 = vset.pattern.permute.xlu0 0
    %706 = vperm.xlu0 %705, %v680
    %v707 = vpop.permute.xlu0 %706
    %710 = vset.pattern.permute.xlu0 0
    %711 = vperm.xlu0 %710, %v681
    %v712 = vpop.permute.xlu0 %711
    %715 = vset.pattern.permute.xlu0 0
    %716 = vperm.xlu0 %715, %v682
    %v717 = vpop.permute.xlu0 %716
    %720 = vset.pattern.permute.xlu0 0
    %721 = vperm.xlu0 %720, %v683
    %v722 = vpop.permute.xlu0 %721
    %725 = vset.pattern.permute.xlu0 0
    %726 = vperm.xlu0 %725, %v684
    %v727 = vpop.permute.xlu0 %726
    %730 = vset.pattern.permute.xlu0 0
    %731 = vperm.xlu0 %730, %v685
    %v732 = vpop.permute.xlu0 %731
    %735 = vset.pattern.permute.xlu0 0
    %736 = vperm.xlu0 %735, %v686
    %v737 = vpop.permute.xlu0 %736
    %740 = vset.pattern.permute.xlu0 0
    %741 = vperm.xlu0 %740, %v687
    %v742 = vpop.permute.xlu0 %741
    %745 = vset.pattern.permute.xlu0 0
    %746 = vperm.xlu0 %745, %v688
    %v747 = vpop.permute.xlu0 %746
    %750 = vset.pattern.permute.xlu0 0
    %751 = vperm.xlu0 %750, %v689
    %v752 = vpop.permute.xlu0 %751
    %755 = vset.pattern.permute.xlu0 0
    %756 = vperm.xlu0 %755, %v690
    %v757 = vpop.permute.xlu0 %756
    %760 = vset.pattern.permute.xlu0 0
    %761 = vperm.xlu0 %760, %v691
    %v762 = vpop.permute.xlu0 %761
    %765 = vset.pattern.permute.xlu0 0
    %766 = vperm.xlu0 %765, %v692
    %v767 = vpop.permute.xlu0 %766
    %770 = vset.pattern.permute.xlu0 0
    %771 = vperm.xlu0 %770, %v693
    %v772 = vpop.permute.xlu0 %771
    %v774 = vmul.f32 %v662, %v697
    %v775 = vmul.f32 %v663, %v702
    %v776 = vmul.f32 %v664, %v707
    %v777 = vmul.f32 %v665, %v712
    %v778 = vmul.f32 %v666, %v717
    %v779 = vmul.f32 %v667, %v722
    %v780 = vmul.f32 %v668, %v727
    %v781 = vmul.f32 %v669, %v732
    %v782 = vmul.f32 %v670, %v737
    %v783 = vmul.f32 %v671, %v742
    %v784 = vmul.f32 %v672, %v747
    %v785 = vmul.f32 %v673, %v752
    %v786 = vmul.f32 %v674, %v757
    %v787 = vmul.f32 %v675, %v762
    %v788 = vmul.f32 %v676, %v767
    %v789 = vmul.f32 %v677, %v772
    %vm790 = vcmask 261120
    %v791 = vsel %vm790, %v774, 0.0
    %v792 = vsel %vm790, %v775, 0.0
    %v793 = vadd.f32 %v791, %v792
    %v794 = vsel %vm790, %v776, 0.0
    %v795 = vadd.f32 %v793, %v794
    %v796 = vsel %vm790, %v777, 0.0
    %v797 = vadd.f32 %v795, %v796
    %v798 = vsel %vm790, %v778, 0.0
    %v799 = vadd.f32 %v797, %v798
    %v800 = vsel %vm790, %v779, 0.0
    %v801 = vadd.f32 %v799, %v800
    %v802 = vsel %vm790, %v780, 0.0
    %v803 = vadd.f32 %v801, %v802
    %v804 = vsel %vm790, %v781, 0.0
    %v805 = vadd.f32 %v803, %v804
    %v806 = vsel %vm790, %v782, 0.0
    %v807 = vadd.f32 %v805, %v806
    %v808 = vsel %vm790, %v783, 0.0
    %v809 = vadd.f32 %v807, %v808
    %v810 = vsel %vm790, %v784, 0.0
    %v811 = vadd.f32 %v809, %v810
    %v812 = vsel %vm790, %v785, 0.0
    %v813 = vadd.f32 %v811, %v812
    %v814 = vsel %vm790, %v786, 0.0
    %v815 = vadd.f32 %v813, %v814
    %v816 = vsel %vm790, %v787, 0.0
    %v817 = vadd.f32 %v815, %v816
    %v818 = vsel %vm790, %v788, 0.0
    %v819 = vadd.f32 %v817, %v818
    %v820 = vsel %vm790, %v789, 0.0
    %v821 = vadd.f32 %v819, %v820
    %v822 = vrot.slane %v821, 4
    %v823 = vadd.f32 %v821, %v822
    %v824 = vrot.slane %v823, 2
    %v825 = vadd.f32 %v823, %v824
    %v826 = vrot.slane %v825, 1
    %v827 = vadd.f32 %v825, %v826
    %v828 = vrcp.pop 98.0
    %v829 = vmul.f32 98.0, %v828
    %v830 = vsub.f32 1.0, %v829
    %v831 = vmul.f32 %v828, %v830
    %v832 = vadd.f32 %v828, %v831
    %vm833 = vweird.f32 %v828
    %v834 = vsel %vm833, %v828, %v832
    %v835 = vmul.f32 %v827, %v834
    %v836 = vsub.f32 %v662, %v835
    %v837 = vsub.f32 %v663, %v835
    %v838 = vsub.f32 %v664, %v835
    %v839 = vsub.f32 %v665, %v835
    %v840 = vsub.f32 %v666, %v835
    %v841 = vsub.f32 %v667, %v835
    %v842 = vsub.f32 %v668, %v835
    %v843 = vsub.f32 %v669, %v835
    %v844 = vsub.f32 %v670, %v835
    %v845 = vsub.f32 %v671, %v835
    %v846 = vsub.f32 %v672, %v835
    %v847 = vsub.f32 %v673, %v835
    %v848 = vsub.f32 %v674, %v835
    %v849 = vsub.f32 %v675, %v835
    %v850 = vsub.f32 %v676, %v835
    %v851 = vsub.f32 %v677, %v835
    %v852 = vmul.f32 %v836, %v697
    %v853 = vmul.f32 %v837, %v702
    %v854 = vmul.f32 %v838, %v707
    %v855 = vmul.f32 %v839, %v712
    %v856 = vmul.f32 %v840, %v717
    %v857 = vmul.f32 %v841, %v722
    %v858 = vmul.f32 %v842, %v727
    %v859 = vmul.f32 %v843, %v732
    %v860 = vmul.f32 %v844, %v737
    %v861 = vmul.f32 %v845, %v742
    %v862 = vmul.f32 %v846, %v747
    %v863 = vmul.f32 %v847, %v752
    %v864 = vmul.f32 %v848, %v757
    %v865 = vmul.f32 %v849, %v762
    %v866 = vmul.f32 %v850, %v767
    %v867 = vmul.f32 %v851, %v772
    %v868 = vmul.f32 %v852, %v852
    %v869 = vmul.f32 %v853, %v853
    %v870 = vmul.f32 %v854, %v854
    %v871 = vmul.f32 %v855, %v855
    %v872 = vmul.f32 %v856, %v856
    %v873 = vmul.f32 %v857, %v857
    %v874 = vmul.f32 %v858, %v858
    %v875 = vmul.f32 %v859, %v859
    %v876 = vmul.f32 %v860, %v860
    %v877 = vmul.f32 %v861, %v861
    %v878 = vmul.f32 %v862, %v862
    %v879 = vmul.f32 %v863, %v863
    %v880 = vmul.f32 %v864, %v864
    %v881 = vmul.f32 %v865, %v865
    %v882 = vmul.f32 %v866, %v866
    %v883 = vmul.f32 %v867, %v867
    %v884 = vsel %vm790, %v868, 0.0
    %v885 = vsel %vm790, %v869, 0.0
    %v886 = vadd.f32 %v884, %v885
    %v887 = vsel %vm790, %v870, 0.0
    %v888 = vadd.f32 %v886, %v887
    %v889 = vsel %vm790, %v871, 0.0
    %v890 = vadd.f32 %v888, %v889
    %v891 = vsel %vm790, %v872, 0.0
    %v892 = vadd.f32 %v890, %v891
    %v893 = vsel %vm790, %v873, 0.0
    %v894 = vadd.f32 %v892, %v893
    %v895 = vsel %vm790, %v874, 0.0
    %v896 = vadd.f32 %v894, %v895
    %v897 = vsel %vm790, %v875, 0.0
    %v898 = vadd.f32 %v896, %v897
    %v899 = vsel %vm790, %v876, 0.0
    %v900 = vadd.f32 %v898, %v899
    %v901 = vsel %vm790, %v877, 0.0
    %v902 = vadd.f32 %v900, %v901
    %v903 = vsel %vm790, %v878, 0.0
    %v904 = vadd.f32 %v902, %v903
    %v905 = vsel %vm790, %v879, 0.0
    %v906 = vadd.f32 %v904, %v905
    %v907 = vsel %vm790, %v880, 0.0
    %v908 = vadd.f32 %v906, %v907
    %v909 = vsel %vm790, %v881, 0.0
    %v910 = vadd.f32 %v908, %v909
    %v911 = vsel %vm790, %v882, 0.0
    %v912 = vadd.f32 %v910, %v911
    %v913 = vsel %vm790, %v883, 0.0
    %v914 = vadd.f32 %v912, %v913
    %v915 = vrot.slane %v914, 4
    %v916 = vadd.f32 %v914, %v915
    %v917 = vrot.slane %v916, 2
    %v918 = vadd.f32 %v916, %v917
    %v919 = vrot.slane %v918, 1
    %v920 = vadd.f32 %v918, %v919
    %v921 = vmul.f32 %v920, %v834
    %v922 = vadd.f32 %v921, 1e-05
    %v923 = vrsqrt.pop %v922
    %v924 = vmul.f32 %v923, %v922
    %v925 = vmul.f32 %v924, %v923
    %v926 = vmul.f32 0.5, %v925
    %v927 = vsub.f32 1.5, %v926
    %v928 = vmul.f32 %v923, %v927
    %vm929 = vweird.f32 %v922
    %vm930 = vweird.f32 %v923
    %vm931 = vmor %vm929, %vm930
    %v932 = vsel %vm931, %v923, %v928
    %v933 = vld [vmem:[%s3] sm:$0x1]
    %v934 = vmul.f32 %v932, %v933
    %v935 = vld [vmem:[%s4] sm:$0x1]
    %v936 = vmul.f32 %v835, %v934
    %v937 = vsub.f32 %v935, %v936
    %v938 = vperm.slane %v934, 0
    %v939 = vmul.f32 %v662, %v938
    %v940 = vmul.f32 %v663, %v938
    %v941 = vmul.f32 %v664, %v938
    %v942 = vmul.f32 %v665, %v938
    %v943 = vmul.f32 %v666, %v938
    %v944 = vmul.f32 %v667, %v938
    %v945 = vmul.f32 %v668, %v938
    %v946 = vmul.f32 %v669, %v938
    %v947 = vmul.f32 %v670, %v938
    %v948 = vmul.f32 %v671, %v938
    %v949 = vmul.f32 %v672, %v938
    %v950 = vmul.f32 %v673, %v938
    %v951 = vmul.f32 %v674, %v938
    %v952 = vmul.f32 %v675, %v938
    %v953 = vmul.f32 %v676, %v938
    %v954 = vmul.f32 %v677, %v938
    %v956 = vperm.slane %v937, 0
    %v958 = vadd.f32 %v939, %v956
    %v959 = vadd.f32 %v940, %v956
    %v960 = vadd.f32 %v941, %v956
    %v961 = vadd.f32 %v942, %v956
    %v962 = vadd.f32 %v943, %v956
    %v963 = vadd.f32 %v944, %v956
    %v964 = vadd.f32 %v945, %v956
    %v965 = vadd.f32 %v946, %v956
    %v966 = vadd.f32 %v947, %v956
    %v967 = vadd.f32 %v948, %v956
    %v968 = vadd.f32 %v949, %v956
    %v969 = vadd.f32 %v950, %v956
    %v970 = vadd.f32 %v951, %v956
    %v971 = vadd.f32 %v952, %v956
    %v972 = vadd.f32 %v953, %v956
    %v973 = vadd.f32 %v954, %v956
    %v974 = vmax.f32 %v958, 0.0
    %v975 = vmax.f32 %v959, 0.0
    %v976 = vmax.f32 %v960, 0.0
    %v977 = vmax.f32 %v961, 0.0
    %v978 = vmax.f32 %v962, 0.0
    %v979 = vmax.f32 %v963, 0.0
    %v980 = vmax.f32 %v964, 0.0
    %v981 = vmax.f32 %v965, 0.0
    %v982 = vmax.f32 %v966, 0.0
    %v983 = vmax.f32 %v967, 0.0
    %v984 = vmax.f32 %v968, 0.0
    %v985 = vmax.f32 %v969, 0.0
    %v986 = vmax.f32 %v970, 0.0
    %v987 = vmax.f32 %v971, 0.0
    %v988 = vmax.f32 %v972, 0.0
    %v989 = vmax.f32 %v973, 0.0
    %v990 = vpack.c.bf16 %v974, %v974
    %v991 = vpack.c.bf16 %v975, %v975
    %v992 = vpack.c.bf16 %v976, %v976
    %v993 = vpack.c.bf16 %v977, %v977
    %v994 = vpack.c.bf16 %v978, %v978
    %v995 = vpack.c.bf16 %v979, %v979
    %v996 = vpack.c.bf16 %v980, %v980
    %v997 = vpack.c.bf16 %v981, %v981
    %v998 = vpack.c.bf16 %v982, %v982
    %v999 = vpack.c.bf16 %v983, %v983
    %v1000 = vpack.c.bf16 %v984, %v984
    %v1001 = vpack.c.bf16 %v985, %v985
    %v1002 = vpack.c.bf16 %v986, %v986
    %v1003 = vpack.c.bf16 %v987, %v987
    %v1004 = vpack.c.bf16 %v988, %v988
    %v1005 = vpack.c.bf16 %v989, %v989
    %vm1006 = vcmask 257024
    %1007 = vst.msk [vmem:[#allocation2] sm:$0xf] %vm1006, %v990
    %1008 = vst.msk [vmem:[#allocation2 + $0x4] sm:$0xf] %vm1006, %v991
    %1009 = vst.msk [vmem:[#allocation2 + $0x8] sm:$0xf] %vm1006, %v992
    %1010 = vst.msk [vmem:[#allocation2 + $0xc] sm:$0xf] %vm1006, %v993
    %1011 = vst.msk [vmem:[#allocation2 + $0x10] sm:$0xf] %vm1006, %v994
    %1012 = vst.msk [vmem:[#allocation2 + $0x14] sm:$0xf] %vm1006, %v995
    %1013 = vst.msk [vmem:[#allocation2 + $0x18] sm:$0xf] %vm1006, %v996
    %1014 = vst.msk [vmem:[#allocation2 + $0x1c] sm:$0xf] %vm1006, %v997
    %1015 = vst.msk [vmem:[#allocation2 + $0x20] sm:$0xf] %vm1006, %v998
    %1016 = vst.msk [vmem:[#allocation2 + $0x24] sm:$0xf] %vm1006, %v999
    %1017 = vst.msk [vmem:[#allocation2 + $0x28] sm:$0xf] %vm1006, %v1000
    %1018 = vst.msk [vmem:[#allocation2 + $0x2c] sm:$0xf] %vm1006, %v1001
    %1019 = vst.msk [vmem:[#allocation2 + $0x30] sm:$0xf] %vm1006, %v1002
    %1020 = vst.msk [vmem:[#allocation2 + $0x34] sm:$0xf] %vm1006, %v1003
    %1021 = vst.msk [vmem:[#allocation2 + $0x38] sm:$0xf] %vm1006, %v1004
    %1022 = vst.msk [vmem:[#allocation2 + $0x3c] sm:$0xf] %vm1006, %v1005
    %1023 = vst.msk [vmem:[#allocation2 + $0x40] sm:$0xf] %vm1006, 0
    %1024 = vst.msk [vmem:[#allocation2 + $0x44] sm:$0xf] %vm1006, 0
    %vm1025 = vcmask 253952
    %1026 = vst.msk [vmem:[#allocation2 + $0x48] sm:$0x1] %vm1025, 0
    %v1027 = vld [vmem:[#allocation2] sm:$0xf]
    %v1028 = vld [vmem:[#allocation2 + $0x4] sm:$0xf]
    %v1029 = vld [vmem:[#allocation2 + $0x8] sm:$0xf]
    %v1030 = vld [vmem:[#allocation2 + $0xc] sm:$0xf]
    %v1031 = vld [vmem:[#allocation2 + $0x10] sm:$0xf]
    %v1032 = vld [vmem:[#allocation2 + $0x14] sm:$0xf]
    %v1033 = vld [vmem:[#allocation2 + $0x18] sm:$0xf]
    %v1034 = vld [vmem:[#allocation2 + $0x1c] sm:$0xf]
    %v1035 = vld [vmem:[#allocation2 + $0x20] sm:$0xf]
    %v1036 = vld [vmem:[#allocation2 + $0x24] sm:$0xf]
    %v1037 = vld [vmem:[#allocation2 + $0x28] sm:$0xf]
    %v1038 = vld [vmem:[#allocation2 + $0x2c] sm:$0xf]
    %v1039 = vld [vmem:[#allocation2 + $0x30] sm:$0xf]
    %v1040 = vld [vmem:[#allocation2 + $0x34] sm:$0xf]
    %v1041 = vld [vmem:[#allocation2 + $0x38] sm:$0xf]
    %v1042 = vld [vmem:[#allocation2 + $0x3c] sm:$0xf]
    %v1043 = vld [vmem:[%s2] sm:$0xf]
    %v1044 = vld [vmem:[%s2 + $0x4] sm:$0xf]
    %v1045 = vld [vmem:[%s2 + $0x8] sm:$0xf]
    %v1046 = vld [vmem:[%s2 + $0xc] sm:$0xf]
    %v1047 = vld [vmem:[#allocation2 + $0x40] sm:$0x1]
    %s1048 = scalar_lea.vmem %s2, 16
    %v1049 = vld [vmem:[%s1048] sm:$0xf]
    %v1050 = vld [vmem:[%s1048 + $0x4] sm:$0xf]
    %v1051 = vld [vmem:[%s1048 + $0x8] sm:$0xf]
    %v1052 = vld [vmem:[%s1048 + $0xc] sm:$0xf]
    %v1070 = vunpack.c.l.b16 %v1027
    %v1071 = vunpack.c.l.b16 %v1028
    %v1072 = vunpack.c.l.b16 %v1029
    %v1073 = vunpack.c.l.b16 %v1030
    %v1074 = vunpack.c.l.b16 %v1031
    %v1075 = vunpack.c.l.b16 %v1032
    %v1076 = vunpack.c.l.b16 %v1033
    %v1077 = vunpack.c.l.b16 %v1034
    %v1078 = vunpack.c.l.b16 %v1035
    %v1079 = vunpack.c.l.b16 %v1036
    %v1080 = vunpack.c.l.b16 %v1037
    %v1081 = vunpack.c.l.b16 %v1038
    %v1082 = vunpack.c.l.b16 %v1039
    %v1083 = vunpack.c.l.b16 %v1040
    %v1084 = vunpack.c.l.b16 %v1041
    %v1085 = vunpack.c.l.b16 %v1042
    %v1086 = vunpack.c.l.b16 %v1047
    %v1087 = vpack.c.b16 %v1071, %v1070
    %v1088 = vpack.c.b16 %v1073, %v1072
    %v1089 = vpack.c.b16 %v1075, %v1074
    %v1090 = vpack.c.b16 %v1077, %v1076
    %v1091 = vpack.c.b16 %v1079, %v1078
    %v1092 = vpack.c.b16 %v1081, %v1080
    %v1093 = vpack.c.b16 %v1083, %v1082
    %v1094 = vpack.c.b16 %v1085, %v1084
    %v1095 = vpack.c.b16 %v1086, %v1086
    %v1097 = vshrl.u32 %v1087, 16
    %v1099 = vshll.u32 %v1087, 16
    %v1101 = vrot.slane %v1099, 1
    %v1102 = vor.u32 %v1097, %v1101
    %v1104 = vshll.u32 %v1088, 16
    %v1106 = vrot.slane %v1104, 1
    %v1107 = vsel %vm123, %v1102, %v1106
    %v1108 = vshrl.u32 %v1088, 16
    %v1110 = vor.u32 %v1108, %v1106
    %v1112 = vshll.u32 %v1089, 16
    %v1114 = vrot.slane %v1112, 1
    %v1115 = vsel %vm123, %v1110, %v1114
    %v1116 = vshrl.u32 %v1089, 16
    %v1118 = vor.u32 %v1116, %v1114
    %v1120 = vshll.u32 %v1090, 16
    %v1122 = vrot.slane %v1120, 1
    %v1123 = vsel %vm123, %v1118, %v1122
    %v1124 = vshrl.u32 %v1090, 16
    %v1126 = vor.u32 %v1124, %v1122
    %v1128 = vshll.u32 %v1091, 16
    %v1130 = vrot.slane %v1128, 1
    %v1131 = vsel %vm123, %v1126, %v1130
    %v1132 = vshrl.u32 %v1091, 16
    %v1134 = vor.u32 %v1132, %v1130
    %v1136 = vshll.u32 %v1092, 16
    %v1138 = vrot.slane %v1136, 1
    %v1139 = vsel %vm123, %v1134, %v1138
    %v1140 = vshrl.u32 %v1092, 16
    %v1142 = vor.u32 %v1140, %v1138
    %v1144 = vshll.u32 %v1093, 16
    %v1146 = vrot.slane %v1144, 1
    %v1147 = vsel %vm123, %v1142, %v1146
    %v1148 = vshrl.u32 %v1093, 16
    %v1150 = vor.u32 %v1148, %v1146
    %v1152 = vshll.u32 %v1094, 16
    %v1154 = vrot.slane %v1152, 1
    %v1155 = vsel %vm123, %v1150, %v1154
    %v1156 = vshrl.u32 %v1094, 16
    %v1158 = vor.u32 %v1156, %v1154
    %v1160 = vshll.u32 %v1095, 16
    %v1162 = vrot.slane %v1160, 1
    %v1163 = vsel %vm123, %v1158, %v1162
    %v1168 = vunpack.c.l.b16 %v1049
    %v1169 = vunpack.c.l.b16 %v1050
    %v1170 = vunpack.c.l.b16 %v1051
    %v1171 = vunpack.c.l.b16 %v1052
    %v1172 = vpack.c.b16 %v1169, %v1168
    %v1173 = vpack.c.b16 %v1171, %v1170
    %v1177 = vsel %vm790, %v1107, 0
    %v1180 = vsel %vm790, %v1115, 0
    %v1183 = vsel %vm790, %v1123, 0
    %v1186 = vsel %vm790, %v1131, 0
    %v1189 = vsel %vm790, %v1139, 0
    %v1192 = vsel %vm790, %v1147, 0
    %v1195 = vsel %vm790, %v1155, 0
    %v1198 = vsel %vm790, %v1163, 0
    %1200 = vmatpush.bf16.msra.mxu0 0
    %1201 = vmatpush.bf16.msra.mxu0 0
    %1202 = vmatpush.bf16.msra.mxu0 0
    %1203 = vmatpush.bf16.msra.mxu0 0
    %1204 = vmatpush.bf16.msra.mxu0 0
    %1205 = vmatpush.bf16.msra.mxu0 0
    %1206 = vmatpush.bf16.msra.mxu0 %v1173
    %1207 = vmatpush.bf16.msra.mxu0 %v1172
    %1208 = vmatmul.bf16.gmra.mxu0 %v1177
    %v1209 = vpop.f32.mrf.mxu0
    %v1210 = vadd.f32 0.0, %v1209
    %v1211 = vpop.f32.mrf.mxu0
    %v1212 = vadd.f32 0.0, %v1211
    %1213 = vmatmul.bf16.gmra.mxu0 %v1180
    %v1214 = vpop.f32.mrf.mxu0
    %v1215 = vadd.f32 0.0, %v1214
    %v1216 = vpop.f32.mrf.mxu0
    %v1217 = vadd.f32 0.0, %v1216
    %1218 = vmatmul.bf16.gmra.mxu0 %v1183
    %v1219 = vpop.f32.mrf.mxu0
    %v1220 = vadd.f32 0.0, %v1219
    %v1221 = vpop.f32.mrf.mxu0
    %v1222 = vadd.f32 0.0, %v1221
    %1223 = vmatmul.bf16.gmra.mxu0 %v1186
    %v1224 = vpop.f32.mrf.mxu0
    %v1225 = vadd.f32 0.0, %v1224
    %v1226 = vpop.f32.mrf.mxu0
    %v1227 = vadd.f32 0.0, %v1226
    %1228 = vmatmul.bf16.gmra.mxu0 %v1189
    %v1229 = vpop.f32.mrf.mxu0
    %v1230 = vadd.f32 0.0, %v1229
    %v1231 = vpop.f32.mrf.mxu0
    %v1232 = vadd.f32 0.0, %v1231
    %1233 = vmatmul.bf16.gmra.mxu0 %v1192
    %v1234 = vpop.f32.mrf.mxu0
    %v1235 = vadd.f32 0.0, %v1234
    %v1236 = vpop.f32.mrf.mxu0
    %v1237 = vadd.f32 0.0, %v1236
    %1238 = vmatmul.bf16.gmra.mxu0 %v1195
    %v1239 = vpop.f32.mrf.mxu0
    %v1240 = vadd.f32 0.0, %v1239
    %v1241 = vpop.f32.mrf.mxu0
    %v1242 = vadd.f32 0.0, %v1241
    %1243 = vmatmul.bf16.gmra.mxu0 %v1198
    %v1244 = vpop.f32.mrf.mxu0
    %v1245 = vadd.f32 0.0, %v1244
    %v1246 = vpop.f32.mrf.mxu0
    %v1247 = vadd.f32 0.0, %v1246
    %1248 = vdwg.mxu0
    %v1253 = vunpack.c.l.b16 %v1043
    %v1254 = vunpack.c.l.b16 %v1044
    %v1255 = vunpack.c.l.b16 %v1045
    %v1256 = vunpack.c.l.b16 %v1046
    %v1257 = vpack.c.b16 %v1254, %v1253
    %v1258 = vpack.c.b16 %v1256, %v1255
    %v1261 = vsel %vm790, %v1087, 0
    %v1263 = vsel %vm790, %v1088, 0
    %v1265 = vsel %vm790, %v1089, 0
    %v1267 = vsel %vm790, %v1090, 0
    %v1269 = vsel %vm790, %v1091, 0
    %v1271 = vsel %vm790, %v1092, 0
    %v1273 = vsel %vm790, %v1093, 0
    %v1275 = vsel %vm790, %v1094, 0
    %1277 = vmatpush.bf16.msra.mxu0 0
    %1278 = vmatpush.bf16.msra.mxu0 0
    %1279 = vmatpush.bf16.msra.mxu0 0
    %1280 = vmatpush.bf16.msra.mxu0 0
    %1281 = vmatpush.bf16.msra.mxu0 0
    %1282 = vmatpush.bf16.msra.mxu0 0
    %1283 = vmatpush.bf16.msra.mxu0 %v1258
    %1284 = vmatpush.bf16.msra.mxu0 %v1257
    %1285 = vmatmul.bf16.gmra.mxu0 %v1261
    %v1286 = vpop.f32.mrf.mxu0
    %v1287 = vadd.f32 %v1210, %v1286
    %v1288 = vpop.f32.mrf.mxu0
    %v1289 = vadd.f32 %v1212, %v1288
    %1290 = vmatmul.bf16.gmra.mxu0 %v1263
    %v1291 = vpop.f32.mrf.mxu0
    %v1292 = vadd.f32 %v1215, %v1291
    %v1293 = vpop.f32.mrf.mxu0
    %v1294 = vadd.f32 %v1217, %v1293
    %1295 = vmatmul.bf16.gmra.mxu0 %v1265
    %v1296 = vpop.f32.mrf.mxu0
    %v1297 = vadd.f32 %v1220, %v1296
    %v1298 = vpop.f32.mrf.mxu0
    %v1299 = vadd.f32 %v1222, %v1298
    %1300 = vmatmul.bf16.gmra.mxu0 %v1267
    %v1301 = vpop.f32.mrf.mxu0
    %v1302 = vadd.f32 %v1225, %v1301
    %v1303 = vpop.f32.mrf.mxu0
    %v1304 = vadd.f32 %v1227, %v1303
    %1305 = vmatmul.bf16.gmra.mxu0 %v1269
    %v1306 = vpop.f32.mrf.mxu0
    %v1307 = vadd.f32 %v1230, %v1306
    %v1308 = vpop.f32.mrf.mxu0
    %v1309 = vadd.f32 %v1232, %v1308
    %1310 = vmatmul.bf16.gmra.mxu0 %v1271
    %v1311 = vpop.f32.mrf.mxu0
    %v1312 = vadd.f32 %v1235, %v1311
    %v1313 = vpop.f32.mrf.mxu0
    %v1314 = vadd.f32 %v1237, %v1313
    %1315 = vmatmul.bf16.gmra.mxu0 %v1273
    %v1316 = vpop.f32.mrf.mxu0
    %v1317 = vadd.f32 %v1240, %v1316
    %v1318 = vpop.f32.mrf.mxu0
    %v1319 = vadd.f32 %v1242, %v1318
    %1320 = vmatmul.bf16.gmra.mxu0 %v1275
    %v1321 = vpop.f32.mrf.mxu0
    %v1322 = vadd.f32 %v1245, %v1321
    %v1323 = vpop.f32.mrf.mxu0
    %v1324 = vadd.f32 %v1247, %v1323
    %1325 = vdwg.mxu0
    %v1326 = vld [vmem:[#allocation2] sm:$0xe]
    %s1327 = scalar_lea.vmem %s2, 32
    %v1328 = vld [vmem:[%s1327] sm:$0xf]
    %v1329 = vld [vmem:[%s1327 + $0x4] sm:$0xf]
    %v1330 = vld [vmem:[%s1327 + $0x8] sm:$0xf]
    %v1331 = vld [vmem:[%s1327 + $0xc] sm:$0xf]
    %v1333 = vunpack.c.l.b16 %v1326
    %v1334 = vpack.c.b16 %v1071, %v1333
    %vm1335 = vcmask 1046528
    %v1336 = vrot.slane %v1334, 1
    %v1337 = vrot.slane %v1088, 1
    %v1338 = vsel %vm1335, %v1336, %v1337
    %v1339 = vrot.slane %v1089, 1
    %v1340 = vsel %vm1335, %v1337, %v1339
    %v1341 = vrot.slane %v1090, 1
    %v1342 = vsel %vm1335, %v1339, %v1341
    %v1343 = vrot.slane %v1091, 1
    %v1344 = vsel %vm1335, %v1341, %v1343
    %v1345 = vrot.slane %v1092, 1
    %v1346 = vsel %vm1335, %v1343, %v1345
    %v1347 = vrot.slane %v1093, 1
    %v1348 = vsel %vm1335, %v1345, %v1347
    %v1349 = vrot.slane %v1094, 1
    %v1350 = vsel %vm1335, %v1347, %v1349
    %v1351 = vrot.slane %v1095, 1
    %v1352 = vsel %vm1335, %v1349, %v1351
    %v1357 = vunpack.c.l.b16 %v1328
    %v1358 = vunpack.c.l.b16 %v1329
    %v1359 = vunpack.c.l.b16 %v1330
    %v1360 = vunpack.c.l.b16 %v1331
    %v1361 = vpack.c.b16 %v1358, %v1357
    %v1362 = vpack.c.b16 %v1360, %v1359
    %v1366 = vsel %vm790, %v1338, 0
    %v1369 = vsel %vm790, %v1340, 0
    %v1372 = vsel %vm790, %v1342, 0
    %v1375 = vsel %vm790, %v1344, 0
    %v1378 = vsel %vm790, %v1346, 0
    %v1381 = vsel %vm790, %v1348, 0
    %v1384 = vsel %vm790, %v1350, 0
    %v1387 = vsel %vm790, %v1352, 0
    %1389 = vmatpush.bf16.msra.mxu0 0
    %1390 = vmatpush.bf16.msra.mxu0 0
    %1391 = vmatpush.bf16.msra.mxu0 0
    %1392 = vmatpush.bf16.msra.mxu0 0
    %1393 = vmatpush.bf16.msra.mxu0 0
    %1394 = vmatpush.bf16.msra.mxu0 0
    %1395 = vmatpush.bf16.msra.mxu0 %v1362
    %1396 = vmatpush.bf16.msra.mxu0 %v1361
    %1397 = vmatmul.bf16.gmra.mxu0 %v1366
    %v1398 = vpop.f32.mrf.mxu0
    %v1399 = vadd.f32 0.0, %v1398
    %v1400 = vpop.f32.mrf.mxu0
    %v1401 = vadd.f32 0.0, %v1400
    %1402 = vmatmul.bf16.gmra.mxu0 %v1369
    %v1403 = vpop.f32.mrf.mxu0
    %v1404 = vadd.f32 0.0, %v1403
    %v1405 = vpop.f32.mrf.mxu0
    %v1406 = vadd.f32 0.0, %v1405
    %1407 = vmatmul.bf16.gmra.mxu0 %v1372
    %v1408 = vpop.f32.mrf.mxu0
    %v1409 = vadd.f32 0.0, %v1408
    %v1410 = vpop.f32.mrf.mxu0
    %v1411 = vadd.f32 0.0, %v1410
    %1412 = vmatmul.bf16.gmra.mxu0 %v1375
    %v1413 = vpop.f32.mrf.mxu0
    %v1414 = vadd.f32 0.0, %v1413
    %v1415 = vpop.f32.mrf.mxu0
    %v1416 = vadd.f32 0.0, %v1415
    %1417 = vmatmul.bf16.gmra.mxu0 %v1378
    %v1418 = vpop.f32.mrf.mxu0
    %v1419 = vadd.f32 0.0, %v1418
    %v1420 = vpop.f32.mrf.mxu0
    %v1421 = vadd.f32 0.0, %v1420
    %1422 = vmatmul.bf16.gmra.mxu0 %v1381
    %v1423 = vpop.f32.mrf.mxu0
    %v1424 = vadd.f32 0.0, %v1423
    %v1425 = vpop.f32.mrf.mxu0
    %v1426 = vadd.f32 0.0, %v1425
    %1427 = vmatmul.bf16.gmra.mxu0 %v1384
    %v1428 = vpop.f32.mrf.mxu0
    %v1429 = vadd.f32 0.0, %v1428
    %v1430 = vpop.f32.mrf.mxu0
    %v1431 = vadd.f32 0.0, %v1430
    %1432 = vmatmul.bf16.gmra.mxu0 %v1387
    %v1433 = vpop.f32.mrf.mxu0
    %v1434 = vadd.f32 0.0, %v1433
    %v1435 = vpop.f32.mrf.mxu0
    %v1436 = vadd.f32 0.0, %v1435
    %1437 = vdwg.mxu0
    %v1438 = vadd.f32 %v1287, %v1399
    %v1439 = vadd.f32 %v1289, %v1401
    %v1440 = vadd.f32 %v1292, %v1404
    %v1441 = vadd.f32 %v1294, %v1406
    %v1442 = vadd.f32 %v1297, %v1409
    %v1443 = vadd.f32 %v1299, %v1411
    %v1444 = vadd.f32 %v1302, %v1414
    %v1445 = vadd.f32 %v1304, %v1416
    %v1446 = vadd.f32 %v1307, %v1419
    %v1447 = vadd.f32 %v1309, %v1421
    %v1448 = vadd.f32 %v1312, %v1424
    %v1449 = vadd.f32 %v1314, %v1426
    %v1450 = vadd.f32 %v1317, %v1429
    %v1451 = vadd.f32 %v1319, %v1431
    %v1452 = vadd.f32 %v1322, %v1434
    %v1453 = vadd.f32 %v1324, %v1436
    %v1454 = vld [vmem:[#allocation2 + $0x40] sm:$0xf]
    %s1455 = scalar_lea.vmem %s2, 48
    %v1456 = vld [vmem:[%s1455] sm:$0xf]
    %v1457 = vld [vmem:[%s1455 + $0x4] sm:$0xf]
    %v1458 = vld [vmem:[%s1455 + $0x8] sm:$0xf]
    %v1459 = vld [vmem:[%s1455 + $0xc] sm:$0xf]
    %v1461 = vunpack.c.l.b16 %v1454
    %v1462 = vpack.c.b16 %v1072, %v1071
    %v1463 = vpack.c.b16 %v1074, %v1073
    %v1464 = vpack.c.b16 %v1076, %v1075
    %v1465 = vpack.c.b16 %v1078, %v1077
    %v1466 = vpack.c.b16 %v1080, %v1079
    %v1467 = vpack.c.b16 %v1082, %v1081
    %v1468 = vpack.c.b16 %v1084, %v1083
    %v1469 = vpack.c.b16 %v1461, %v1085
    %v1474 = vunpack.c.l.b16 %v1456
    %v1475 = vunpack.c.l.b16 %v1457
    %v1476 = vunpack.c.l.b16 %v1458
    %v1477 = vunpack.c.l.b16 %v1459
    %v1478 = vpack.c.b16 %v1475, %v1474
    %v1479 = vpack.c.b16 %v1477, %v1476
    %v1483 = vsel %vm790, %v1462, 0
    %v1486 = vsel %vm790, %v1463, 0
    %v1489 = vsel %vm790, %v1464, 0
    %v1492 = vsel %vm790, %v1465, 0
    %v1495 = vsel %vm790, %v1466, 0
    %v1498 = vsel %vm790, %v1467, 0
    %v1501 = vsel %vm790, %v1468, 0
    %v1504 = vsel %vm790, %v1469, 0
    %1506 = vmatpush.bf16.msra.mxu0 0
    %1507 = vmatpush.bf16.msra.mxu0 0
    %1508 = vmatpush.bf16.msra.mxu0 0
    %1509 = vmatpush.bf16.msra.mxu0 0
    %1510 = vmatpush.bf16.msra.mxu0 0
    %1511 = vmatpush.bf16.msra.mxu0 0
    %1512 = vmatpush.bf16.msra.mxu0 %v1479
    %1513 = vmatpush.bf16.msra.mxu0 %v1478
    %1514 = vmatmul.bf16.gmra.mxu0 %v1483
    %v1515 = vpop.f32.mrf.mxu0
    %v1516 = vadd.f32 0.0, %v1515
    %v1517 = vpop.f32.mrf.mxu0
    %v1518 = vadd.f32 0.0, %v1517
    %1519 = vmatmul.bf16.gmra.mxu0 %v1486
    %v1520 = vpop.f32.mrf.mxu0
    %v1521 = vadd.f32 0.0, %v1520
    %v1522 = vpop.f32.mrf.mxu0
    %v1523 = vadd.f32 0.0, %v1522
    %1524 = vmatmul.bf16.gmra.mxu0 %v1489
    %v1525 = vpop.f32.mrf.mxu0
    %v1526 = vadd.f32 0.0, %v1525
    %v1527 = vpop.f32.mrf.mxu0
    %v1528 = vadd.f32 0.0, %v1527
    %1529 = vmatmul.bf16.gmra.mxu0 %v1492
    %v1530 = vpop.f32.mrf.mxu0
    %v1531 = vadd.f32 0.0, %v1530
    %v1532 = vpop.f32.mrf.mxu0
    %v1533 = vadd.f32 0.0, %v1532
    %1534 = vmatmul.bf16.gmra.mxu0 %v1495
    %v1535 = vpop.f32.mrf.mxu0
    %v1536 = vadd.f32 0.0, %v1535
    %v1537 = vpop.f32.mrf.mxu0
    %v1538 = vadd.f32 0.0, %v1537
    %1539 = vmatmul.bf16.gmra.mxu0 %v1498
    %v1540 = vpop.f32.mrf.mxu0
    %v1541 = vadd.f32 0.0, %v1540
    %v1542 = vpop.f32.mrf.mxu0
    %v1543 = vadd.f32 0.0, %v1542
    %1544 = vmatmul.bf16.gmra.mxu0 %v1501
    %v1545 = vpop.f32.mrf.mxu0
    %v1546 = vadd.f32 0.0, %v1545
    %v1547 = vpop.f32.mrf.mxu0
    %v1548 = vadd.f32 0.0, %v1547
    %1549 = vmatmul.bf16.gmra.mxu0 %v1504
    %v1550 = vpop.f32.mrf.mxu0
    %v1551 = vadd.f32 0.0, %v1550
    %v1552 = vpop.f32.mrf.mxu0
    %v1553 = vadd.f32 0.0, %v1552
    %1554 = vdwg.mxu0
    %v1555 = vadd.f32 %v1438, %v1516
    %v1556 = vadd.f32 %v1439, %v1518
    %v1557 = vadd.f32 %v1440, %v1521
    %v1558 = vadd.f32 %v1441, %v1523
    %v1559 = vadd.f32 %v1442, %v1526
    %v1560 = vadd.f32 %v1443, %v1528
    %v1561 = vadd.f32 %v1444, %v1531
    %v1562 = vadd.f32 %v1445, %v1533
    %v1563 = vadd.f32 %v1446, %v1536
    %v1564 = vadd.f32 %v1447, %v1538
    %v1565 = vadd.f32 %v1448, %v1541
    %v1566 = vadd.f32 %v1449, %v1543
    %v1567 = vadd.f32 %v1450, %v1546
    %v1568 = vadd.f32 %v1451, %v1548
    %v1569 = vadd.f32 %v1452, %v1551
    %v1570 = vadd.f32 %v1453, %v1553
    %v1571 = vld [vmem:[#allocation2 + $0x4] sm:$0xf]
    %v1572 = vld [vmem:[#allocation2 + $0x8] sm:$0xf]
    %v1573 = vld [vmem:[#allocation2 + $0xc] sm:$0xf]
    %v1574 = vld [vmem:[#allocation2 + $0x10] sm:$0xf]
    %v1575 = vld [vmem:[#allocation2 + $0x14] sm:$0xf]
    %v1576 = vld [vmem:[#allocation2 + $0x18] sm:$0xf]
    %v1577 = vld [vmem:[#allocation2 + $0x1c] sm:$0xf]
    %v1578 = vld [vmem:[#allocation2 + $0x20] sm:$0xf]
    %v1579 = vld [vmem:[#allocation2 + $0x24] sm:$0xf]
    %v1580 = vld [vmem:[#allocation2 + $0x28] sm:$0xf]
    %v1581 = vld [vmem:[#allocation2 + $0x2c] sm:$0xf]
    %v1582 = vld [vmem:[#allocation2 + $0x30] sm:$0xf]
    %v1583 = vld [vmem:[#allocation2 + $0x34] sm:$0xf]
    %v1584 = vld [vmem:[#allocation2 + $0x38] sm:$0xf]
    %v1585 = vld [vmem:[#allocation2 + $0x3c] sm:$0xf]
    %v1586 = vld [vmem:[#allocation2 + $0x40] sm:$0xf]
    %v1587 = vld [vmem:[#allocation2 + $0x44] sm:$0x1]
    %s1588 = scalar_lea.vmem %s2, 64
    %v1589 = vld [vmem:[%s1588] sm:$0xf]
    %v1590 = vld [vmem:[%s1588 + $0x4] sm:$0xf]
    %v1591 = vld [vmem:[%s1588 + $0x8] sm:$0xf]
    %v1592 = vld [vmem:[%s1588 + $0xc] sm:$0xf]
    %v1610 = vunpack.c.l.b16 %v1571
    %v1611 = vunpack.c.l.b16 %v1572
    %v1612 = vunpack.c.l.b16 %v1573
    %v1613 = vunpack.c.l.b16 %v1574
    %v1614 = vunpack.c.l.b16 %v1575
    %v1615 = vunpack.c.l.b16 %v1576
    %v1616 = vunpack.c.l.b16 %v1577
    %v1617 = vunpack.c.l.b16 %v1578
    %v1618 = vunpack.c.l.b16 %v1579
    %v1619 = vunpack.c.l.b16 %v1580
    %v1620 = vunpack.c.l.b16 %v1581
    %v1621 = vunpack.c.l.b16 %v1582
    %v1622 = vunpack.c.l.b16 %v1583
    %v1623 = vunpack.c.l.b16 %v1584
    %v1624 = vunpack.c.l.b16 %v1585
    %v1625 = vunpack.c.l.b16 %v1586
    %v1626 = vunpack.c.l.b16 %v1587
    %v1627 = vpack.c.b16 %v1611, %v1610
    %v1628 = vpack.c.b16 %v1613, %v1612
    %v1629 = vpack.c.b16 %v1615, %v1614
    %v1630 = vpack.c.b16 %v1617, %v1616
    %v1631 = vpack.c.b16 %v1619, %v1618
    %v1632 = vpack.c.b16 %v1621, %v1620
    %v1633 = vpack.c.b16 %v1623, %v1622
    %v1634 = vpack.c.b16 %v1625, %v1624
    %v1635 = vpack.c.b16 %v1626, %v1626
    %v1637 = vshrl.u32 %v1627, 16
    %v1639 = vshll.u32 %v1627, 16
    %v1641 = vrot.slane %v1639, 1
    %v1642 = vor.u32 %v1637, %v1641
    %v1644 = vshll.u32 %v1628, 16
    %v1646 = vrot.slane %v1644, 1
    %v1647 = vsel %vm123, %v1642, %v1646
    %v1648 = vshrl.u32 %v1628, 16
    %v1650 = vor.u32 %v1648, %v1646
    %v1652 = vshll.u32 %v1629, 16
    %v1654 = vrot.slane %v1652, 1
    %v1655 = vsel %vm123, %v1650, %v1654
    %v1656 = vshrl.u32 %v1629, 16
    %v1658 = vor.u32 %v1656, %v1654
    %v1660 = vshll.u32 %v1630, 16
    %v1662 = vrot.slane %v1660, 1
    %v1663 = vsel %vm123, %v1658, %v1662
    %v1664 = vshrl.u32 %v1630, 16
    %v1666 = vor.u32 %v1664, %v1662
    %v1668 = vshll.u32 %v1631, 16
    %v1670 = vrot.slane %v1668, 1
    %v1671 = vsel %vm123, %v1666, %v1670
    %v1672 = vshrl.u32 %v1631, 16
    %v1674 = vor.u32 %v1672, %v1670
    %v1676 = vshll.u32 %v1632, 16
    %v1678 = vrot.slane %v1676, 1
    %v1679 = vsel %vm123, %v1674, %v1678
    %v1680 = vshrl.u32 %v1632, 16
    %v1682 = vor.u32 %v1680, %v1678
    %v1684 = vshll.u32 %v1633, 16
    %v1686 = vrot.slane %v1684, 1
    %v1687 = vsel %vm123, %v1682, %v1686
    %v1688 = vshrl.u32 %v1633, 16
    %v1690 = vor.u32 %v1688, %v1686
    %v1692 = vshll.u32 %v1634, 16
    %v1694 = vrot.slane %v1692, 1
    %v1695 = vsel %vm123, %v1690, %v1694
    %v1696 = vshrl.u32 %v1634, 16
    %v1698 = vor.u32 %v1696, %v1694
    %v1700 = vshll.u32 %v1635, 16
    %v1702 = vrot.slane %v1700, 1
    %v1703 = vsel %vm123, %v1698, %v1702
    %v1708 = vunpack.c.l.b16 %v1589
    %v1709 = vunpack.c.l.b16 %v1590
    %v1710 = vunpack.c.l.b16 %v1591
    %v1711 = vunpack.c.l.b16 %v1592
    %v1712 = vpack.c.b16 %v1709, %v1708
    %v1713 = vpack.c.b16 %v1711, %v1710
    %v1717 = vsel %vm790, %v1647, 0
    %v1720 = vsel %vm790, %v1655, 0
    %v1723 = vsel %vm790, %v1663, 0
    %v1726 = vsel %vm790, %v1671, 0
    %v1729 = vsel %vm790, %v1679, 0
    %v1732 = vsel %vm790, %v1687, 0
    %v1735 = vsel %vm790, %v1695, 0
    %v1738 = vsel %vm790, %v1703, 0
    %1740 = vmatpush.bf16.msra.mxu0 0
    %1741 = vmatpush.bf16.msra.mxu0 0
    %1742 = vmatpush.bf16.msra.mxu0 0
    %1743 = vmatpush.bf16.msra.mxu0 0
    %1744 = vmatpush.bf16.msra.mxu0 0
    %1745 = vmatpush.bf16.msra.mxu0 0
    %1746 = vmatpush.bf16.msra.mxu0 %v1713
    %1747 = vmatpush.bf16.msra.mxu0 %v1712
    %1748 = vmatmul.bf16.gmra.mxu0 %v1717
    %v1749 = vpop.f32.mrf.mxu0
    %v1750 = vadd.f32 0.0, %v1749
    %v1751 = vpop.f32.mrf.mxu0
    %v1752 = vadd.f32 0.0, %v1751
    %1753 = vmatmul.bf16.gmra.mxu0 %v1720
    %v1754 = vpop.f32.mrf.mxu0
    %v1755 = vadd.f32 0.0, %v1754
    %v1756 = vpop.f32.mrf.mxu0
    %v1757 = vadd.f32 0.0, %v1756
    %1758 = vmatmul.bf16.gmra.mxu0 %v1723
    %v1759 = vpop.f32.mrf.mxu0
    %v1760 = vadd.f32 0.0, %v1759
    %v1761 = vpop.f32.mrf.mxu0
    %v1762 = vadd.f32 0.0, %v1761
    %1763 = vmatmul.bf16.gmra.mxu0 %v1726
    %v1764 = vpop.f32.mrf.mxu0
    %v1765 = vadd.f32 0.0, %v1764
    %v1766 = vpop.f32.mrf.mxu0
    %v1767 = vadd.f32 0.0, %v1766
    %1768 = vmatmul.bf16.gmra.mxu0 %v1729
    %v1769 = vpop.f32.mrf.mxu0
    %v1770 = vadd.f32 0.0, %v1769
    %v1771 = vpop.f32.mrf.mxu0
    %v1772 = vadd.f32 0.0, %v1771
    %1773 = vmatmul.bf16.gmra.mxu0 %v1732
    %v1774 = vpop.f32.mrf.mxu0
    %v1775 = vadd.f32 0.0, %v1774
    %v1776 = vpop.f32.mrf.mxu0
    %v1777 = vadd.f32 0.0, %v1776
    %1778 = vmatmul.bf16.gmra.mxu0 %v1735
    %v1779 = vpop.f32.mrf.mxu0
    %v1780 = vadd.f32 0.0, %v1779
    %v1781 = vpop.f32.mrf.mxu0
    %v1782 = vadd.f32 0.0, %v1781
    %1783 = vmatmul.bf16.gmra.mxu0 %v1738
    %v1784 = vpop.f32.mrf.mxu0
    %v1785 = vadd.f32 0.0, %v1784
    %v1786 = vpop.f32.mrf.mxu0
    %v1787 = vadd.f32 0.0, %v1786
    %1788 = vdwg.mxu0
    %v1789 = vadd.f32 %v1555, %v1750
    %v1790 = vadd.f32 %v1556, %v1752
    %v1791 = vadd.f32 %v1557, %v1755
    %v1792 = vadd.f32 %v1558, %v1757
    %v1793 = vadd.f32 %v1559, %v1760
    %v1794 = vadd.f32 %v1560, %v1762
    %v1795 = vadd.f32 %v1561, %v1765
    %v1796 = vadd.f32 %v1562, %v1767
    %v1797 = vadd.f32 %v1563, %v1770
    %v1798 = vadd.f32 %v1564, %v1772
    %v1799 = vadd.f32 %v1565, %v1775
    %v1800 = vadd.f32 %v1566, %v1777
    %v1801 = vadd.f32 %v1567, %v1780
    %v1802 = vadd.f32 %v1568, %v1782
    %v1803 = vadd.f32 %v1569, %v1785
    %v1804 = vadd.f32 %v1570, %v1787
    %v1805 = vld [vmem:[#allocation2 + $0x4] sm:$0xe]
    %s1806 = scalar_lea.vmem %s2, 80
    %v1807 = vld [vmem:[%s1806] sm:$0xf]
    %v1808 = vld [vmem:[%s1806 + $0x4] sm:$0xf]
    %v1809 = vld [vmem:[%s1806 + $0x8] sm:$0xf]
    %v1810 = vld [vmem:[%s1806 + $0xc] sm:$0xf]
    %v1812 = vunpack.c.l.b16 %v1805
    %v1813 = vpack.c.b16 %v1611, %v1812
    %v1814 = vrot.slane %v1813, 1
    %v1815 = vrot.slane %v1628, 1
    %v1816 = vsel %vm1335, %v1814, %v1815
    %v1817 = vrot.slane %v1629, 1
    %v1818 = vsel %vm1335, %v1815, %v1817
    %v1819 = vrot.slane %v1630, 1
    %v1820 = vsel %vm1335, %v1817, %v1819
    %v1821 = vrot.slane %v1631, 1
    %v1822 = vsel %vm1335, %v1819, %v1821
    %v1823 = vrot.slane %v1632, 1
    %v1824 = vsel %vm1335, %v1821, %v1823
    %v1825 = vrot.slane %v1633, 1
    %v1826 = vsel %vm1335, %v1823, %v1825
    %v1827 = vrot.slane %v1634, 1
    %v1828 = vsel %vm1335, %v1825, %v1827
    %v1829 = vrot.slane %v1635, 1
    %v1830 = vsel %vm1335, %v1827, %v1829
    %v1835 = vunpack.c.l.b16 %v1807
    %v1836 = vunpack.c.l.b16 %v1808
    %v1837 = vunpack.c.l.b16 %v1809
    %v1838 = vunpack.c.l.b16 %v1810
    %v1839 = vpack.c.b16 %v1836, %v1835
    %v1840 = vpack.c.b16 %v1838, %v1837
    %v1844 = vsel %vm790, %v1816, 0
    %v1847 = vsel %vm790, %v1818, 0
    %v1850 = vsel %vm790, %v1820, 0
    %v1853 = vsel %vm790, %v1822, 0
    %v1856 = vsel %vm790, %v1824, 0
    %v1859 = vsel %vm790, %v1826, 0
    %v1862 = vsel %vm790, %v1828, 0
    %v1865 = vsel %vm790, %v1830, 0
    %1867 = vmatpush.bf16.msra.mxu0 0
    %1868 = vmatpush.bf16.msra.mxu0 0
    %1869 = vmatpush.bf16.msra.mxu0 0
    %1870 = vmatpush.bf16.msra.mxu0 0
    %1871 = vmatpush.bf16.msra.mxu0 0
    %1872 = vmatpush.bf16.msra.mxu0 0
    %1873 = vmatpush.bf16.msra.mxu0 %v1840
    %1874 = vmatpush.bf16.msra.mxu0 %v1839
    %1875 = vmatmul.bf16.gmra.mxu0 %v1844
    %v1876 = vpop.f32.mrf.mxu0
    %v1877 = vadd.f32 0.0, %v1876
    %v1878 = vpop.f32.mrf.mxu0
    %v1879 = vadd.f32 0.0, %v1878
    %1880 = vmatmul.bf16.gmra.mxu0 %v1847
    %v1881 = vpop.f32.mrf.mxu0
    %v1882 = vadd.f32 0.0, %v1881
    %v1883 = vpop.f32.mrf.mxu0
    %v1884 = vadd.f32 0.0, %v1883
    %1885 = vmatmul.bf16.gmra.mxu0 %v1850
    %v1886 = vpop.f32.mrf.mxu0
    %v1887 = vadd.f32 0.0, %v1886
    %v1888 = vpop.f32.mrf.mxu0
    %v1889 = vadd.f32 0.0, %v1888
    %1890 = vmatmul.bf16.gmra.mxu0 %v1853
    %v1891 = vpop.f32.mrf.mxu0
    %v1892 = vadd.f32 0.0, %v1891
    %v1893 = vpop.f32.mrf.mxu0
    %v1894 = vadd.f32 0.0, %v1893
    %1895 = vmatmul.bf16.gmra.mxu0 %v1856
    %v1896 = vpop.f32.mrf.mxu0
    %v1897 = vadd.f32 0.0, %v1896
    %v1898 = vpop.f32.mrf.mxu0
    %v1899 = vadd.f32 0.0, %v1898
    %1900 = vmatmul.bf16.gmra.mxu0 %v1859
    %v1901 = vpop.f32.mrf.mxu0
    %v1902 = vadd.f32 0.0, %v1901
    %v1903 = vpop.f32.mrf.mxu0
    %v1904 = vadd.f32 0.0, %v1903
    %1905 = vmatmul.bf16.gmra.mxu0 %v1862
    %v1906 = vpop.f32.mrf.mxu0
    %v1907 = vadd.f32 0.0, %v1906
    %v1908 = vpop.f32.mrf.mxu0
    %v1909 = vadd.f32 0.0, %v1908
    %1910 = vmatmul.bf16.gmra.mxu0 %v1865
    %v1911 = vpop.f32.mrf.mxu0
    %v1912 = vadd.f32 0.0, %v1911
    %v1913 = vpop.f32.mrf.mxu0
    %v1914 = vadd.f32 0.0, %v1913
    %1915 = vdwg.mxu0
    %v1916 = vadd.f32 %v1789, %v1877
    %v1917 = vadd.f32 %v1790, %v1879
    %v1918 = vadd.f32 %v1791, %v1882
    %v1919 = vadd.f32 %v1792, %v1884
    %v1920 = vadd.f32 %v1793, %v1887
    %v1921 = vadd.f32 %v1794, %v1889
    %v1922 = vadd.f32 %v1795, %v1892
    %v1923 = vadd.f32 %v1796, %v1894
    %v1924 = vadd.f32 %v1797, %v1897
    %v1925 = vadd.f32 %v1798, %v1899
    %v1926 = vadd.f32 %v1799, %v1902
    %v1927 = vadd.f32 %v1800, %v1904
    %v1928 = vadd.f32 %v1801, %v1907
    %v1929 = vadd.f32 %v1802, %v1909
    %v1930 = vadd.f32 %v1803, %v1912
    %v1931 = vadd.f32 %v1804, %v1914
    %v1932 = vld [vmem:[#allocation2 + $0x44] sm:$0xf]
    %s1933 = scalar_lea.vmem %s2, 96
    %v1934 = vld [vmem:[%s1933] sm:$0xf]
    %v1935 = vld [vmem:[%s1933 + $0x4] sm:$0xf]
    %v1936 = vld [vmem:[%s1933 + $0x8] sm:$0xf]
    %v1937 = vld [vmem:[%s1933 + $0xc] sm:$0xf]
    %v1939 = vunpack.c.l.b16 %v1932
    %v1940 = vpack.c.b16 %v1612, %v1611
    %v1941 = vpack.c.b16 %v1614, %v1613
    %v1942 = vpack.c.b16 %v1616, %v1615
    %v1943 = vpack.c.b16 %v1618, %v1617
    %v1944 = vpack.c.b16 %v1620, %v1619
    %v1945 = vpack.c.b16 %v1622, %v1621
    %v1946 = vpack.c.b16 %v1624, %v1623
    %v1947 = vpack.c.b16 %v1939, %v1625
    %v1952 = vunpack.c.l.b16 %v1934
    %v1953 = vunpack.c.l.b16 %v1935
    %v1954 = vunpack.c.l.b16 %v1936
    %v1955 = vunpack.c.l.b16 %v1937
    %v1956 = vpack.c.b16 %v1953, %v1952
    %v1957 = vpack.c.b16 %v1955, %v1954
    %v1961 = vsel %vm790, %v1940, 0
    %v1964 = vsel %vm790, %v1941, 0
    %v1967 = vsel %vm790, %v1942, 0
    %v1970 = vsel %vm790, %v1943, 0
    %v1973 = vsel %vm790, %v1944, 0
    %v1976 = vsel %vm790, %v1945, 0
    %v1979 = vsel %vm790, %v1946, 0
    %v1982 = vsel %vm790, %v1947, 0
    %1984 = vmatpush.bf16.msra.mxu0 0
    %1985 = vmatpush.bf16.msra.mxu0 0
    %1986 = vmatpush.bf16.msra.mxu0 0
    %1987 = vmatpush.bf16.msra.mxu0 0
    %1988 = vmatpush.bf16.msra.mxu0 0
    %1989 = vmatpush.bf16.msra.mxu0 0
    %1990 = vmatpush.bf16.msra.mxu0 %v1957
    %1991 = vmatpush.bf16.msra.mxu0 %v1956
    %1992 = vmatmul.bf16.gmra.mxu0 %v1961
    %v1993 = vpop.f32.mrf.mxu0
    %v1994 = vadd.f32 0.0, %v1993
    %v1995 = vpop.f32.mrf.mxu0
    %v1996 = vadd.f32 0.0, %v1995
    %1997 = vmatmul.bf16.gmra.mxu0 %v1964
    %v1998 = vpop.f32.mrf.mxu0
    %v1999 = vadd.f32 0.0, %v1998
    %v2000 = vpop.f32.mrf.mxu0
    %v2001 = vadd.f32 0.0, %v2000
    %2002 = vmatmul.bf16.gmra.mxu0 %v1967
    %v2003 = vpop.f32.mrf.mxu0
    %v2004 = vadd.f32 0.0, %v2003
    %v2005 = vpop.f32.mrf.mxu0
    %v2006 = vadd.f32 0.0, %v2005
    %2007 = vmatmul.bf16.gmra.mxu0 %v1970
    %v2008 = vpop.f32.mrf.mxu0
    %v2009 = vadd.f32 0.0, %v2008
    %v2010 = vpop.f32.mrf.mxu0
    %v2011 = vadd.f32 0.0, %v2010
    %2012 = vmatmul.bf16.gmra.mxu0 %v1973
    %v2013 = vpop.f32.mrf.mxu0
    %v2014 = vadd.f32 0.0, %v2013
    %v2015 = vpop.f32.mrf.mxu0
    %v2016 = vadd.f32 0.0, %v2015
    %2017 = vmatmul.bf16.gmra.mxu0 %v1976
    %v2018 = vpop.f32.mrf.mxu0
    %v2019 = vadd.f32 0.0, %v2018
    %v2020 = vpop.f32.mrf.mxu0
    %v2021 = vadd.f32 0.0, %v2020
    %2022 = vmatmul.bf16.gmra.mxu0 %v1979
    %v2023 = vpop.f32.mrf.mxu0
    %v2024 = vadd.f32 0.0, %v2023
    %v2025 = vpop.f32.mrf.mxu0
    %v2026 = vadd.f32 0.0, %v2025
    %2027 = vmatmul.bf16.gmra.mxu0 %v1982
    %v2028 = vpop.f32.mrf.mxu0
    %v2029 = vadd.f32 0.0, %v2028
    %v2030 = vpop.f32.mrf.mxu0
    %v2031 = vadd.f32 0.0, %v2030
    %2032 = vdwg.mxu0
    %v2033 = vadd.f32 %v1916, %v1994
    %v2034 = vadd.f32 %v1917, %v1996
    %v2035 = vadd.f32 %v1918, %v1999
    %v2036 = vadd.f32 %v1919, %v2001
    %v2037 = vadd.f32 %v1920, %v2004
    %v2038 = vadd.f32 %v1921, %v2006
    %v2039 = vadd.f32 %v1922, %v2009
    %v2040 = vadd.f32 %v1923, %v2011
    %v2041 = vadd.f32 %v1924, %v2014
    %v2042 = vadd.f32 %v1925, %v2016
    %v2043 = vadd.f32 %v1926, %v2019
    %v2044 = vadd.f32 %v1927, %v2021
    %v2045 = vadd.f32 %v1928, %v2024
    %v2046 = vadd.f32 %v1929, %v2026
    %v2047 = vadd.f32 %v1930, %v2029
    %v2048 = vadd.f32 %v1931, %v2031
    %v2049 = vld [vmem:[#allocation2 + $0x8] sm:$0xf]
    %v2050 = vld [vmem:[#allocation2 + $0xc] sm:$0xf]
    %v2051 = vld [vmem:[#allocation2 + $0x10] sm:$0xf]
    %v2052 = vld [vmem:[#allocation2 + $0x14] sm:$0xf]
    %v2053 = vld [vmem:[#allocation2 + $0x18] sm:$0xf]
    %v2054 = vld [vmem:[#allocation2 + $0x1c] sm:$0xf]
    %v2055 = vld [vmem:[#allocation2 + $0x20] sm:$0xf]
    %v2056 = vld [vmem:[#allocation2 + $0x24] sm:$0xf]
    %v2057 = vld [vmem:[#allocation2 + $0x28] sm:$0xf]
    %v2058 = vld [vmem:[#allocation2 + $0x2c] sm:$0xf]
    %v2059 = vld [vmem:[#allocation2 + $0x30] sm:$0xf]
    %v2060 = vld [vmem:[#allocation2 + $0x34] sm:$0xf]
    %v2061 = vld [vmem:[#allocation2 + $0x38] sm:$0xf]
    %v2062 = vld [vmem:[#allocation2 + $0x3c] sm:$0xf]
    %v2063 = vld [vmem:[#allocation2 + $0x40] sm:$0xf]
    %v2064 = vld [vmem:[#allocation2 + $0x44] sm:$0xf]
    %v2065 = vld [vmem:[#allocation2 + $0x48] sm:$0x1]
    %s2066 = scalar_lea.vmem %s2, 112
    %v2067 = vld [vmem:[%s2066] sm:$0xf]
    %v2068 = vld [vmem:[%s2066 + $0x4] sm:$0xf]
    %v2069 = vld [vmem:[%s2066 + $0x8] sm:$0xf]
    %v2070 = vld [vmem:[%s2066 + $0xc] sm:$0xf]
    %v2088 = vunpack.c.l.b16 %v2049
    %v2089 = vunpack.c.l.b16 %v2050
    %v2090 = vunpack.c.l.b16 %v2051
    %v2091 = vunpack.c.l.b16 %v2052
    %v2092 = vunpack.c.l.b16 %v2053
    %v2093 = vunpack.c.l.b16 %v2054
    %v2094 = vunpack.c.l.b16 %v2055
    %v2095 = vunpack.c.l.b16 %v2056
    %v2096 = vunpack.c.l.b16 %v2057
    %v2097 = vunpack.c.l.b16 %v2058
    %v2098 = vunpack.c.l.b16 %v2059
    %v2099 = vunpack.c.l.b16 %v2060
    %v2100 = vunpack.c.l.b16 %v2061
    %v2101 = vunpack.c.l.b16 %v2062
    %v2102 = vunpack.c.l.b16 %v2063
    %v2103 = vunpack.c.l.b16 %v2064
    %v2104 = vunpack.c.l.b16 %v2065
    %v2105 = vpack.c.b16 %v2089, %v2088
    %v2106 = vpack.c.b16 %v2091, %v2090
    %v2107 = vpack.c.b16 %v2093, %v2092
    %v2108 = vpack.c.b16 %v2095, %v2094
    %v2109 = vpack.c.b16 %v2097, %v2096
    %v2110 = vpack.c.b16 %v2099, %v2098
    %v2111 = vpack.c.b16 %v2101, %v2100
    %v2112 = vpack.c.b16 %v2103, %v2102
    %v2113 = vpack.c.b16 %v2104, %v2104
    %v2115 = vshrl.u32 %v2105, 16
    %v2117 = vshll.u32 %v2105, 16
    %v2119 = vrot.slane %v2117, 1
    %v2120 = vor.u32 %v2115, %v2119
    %v2122 = vshll.u32 %v2106, 16
    %v2124 = vrot.slane %v2122, 1
    %v2125 = vsel %vm123, %v2120, %v2124
    %v2126 = vshrl.u32 %v2106, 16
    %v2128 = vor.u32 %v2126, %v2124
    %v2130 = vshll.u32 %v2107, 16
    %v2132 = vrot.slane %v2130, 1
    %v2133 = vsel %vm123, %v2128, %v2132
    %v2134 = vshrl.u32 %v2107, 16
    %v2136 = vor.u32 %v2134, %v2132
    %v2138 = vshll.u32 %v2108, 16
    %v2140 = vrot.slane %v2138, 1
    %v2141 = vsel %vm123, %v2136, %v2140
    %v2142 = vshrl.u32 %v2108, 16
    %v2144 = vor.u32 %v2142, %v2140
    %v2146 = vshll.u32 %v2109, 16
    %v2148 = vrot.slane %v2146, 1
    %v2149 = vsel %vm123, %v2144, %v2148
    %v2150 = vshrl.u32 %v2109, 16
    %v2152 = vor.u32 %v2150, %v2148
    %v2154 = vshll.u32 %v2110, 16
    %v2156 = vrot.slane %v2154, 1
    %v2157 = vsel %vm123, %v2152, %v2156
    %v2158 = vshrl.u32 %v2110, 16
    %v2160 = vor.u32 %v2158, %v2156
    %v2162 = vshll.u32 %v2111, 16
    %v2164 = vrot.slane %v2162, 1
    %v2165 = vsel %vm123, %v2160, %v2164
    %v2166 = vshrl.u32 %v2111, 16
    %v2168 = vor.u32 %v2166, %v2164
    %v2170 = vshll.u32 %v2112, 16
    %v2172 = vrot.slane %v2170, 1
    %v2173 = vsel %vm123, %v2168, %v2172
    %v2174 = vshrl.u32 %v2112, 16
    %v2176 = vor.u32 %v2174, %v2172
    %v2178 = vshll.u32 %v2113, 16
    %v2180 = vrot.slane %v2178, 1
    %v2181 = vsel %vm123, %v2176, %v2180
    %v2186 = vunpack.c.l.b16 %v2067
    %v2187 = vunpack.c.l.b16 %v2068
    %v2188 = vunpack.c.l.b16 %v2069
    %v2189 = vunpack.c.l.b16 %v2070
    %v2190 = vpack.c.b16 %v2187, %v2186
    %v2191 = vpack.c.b16 %v2189, %v2188
    %v2195 = vsel %vm790, %v2125, 0
    %v2198 = vsel %vm790, %v2133, 0
    %v2201 = vsel %vm790, %v2141, 0
    %v2204 = vsel %vm790, %v2149, 0
    %v2207 = vsel %vm790, %v2157, 0
    %v2210 = vsel %vm790, %v2165, 0
    %v2213 = vsel %vm790, %v2173, 0
    %v2216 = vsel %vm790, %v2181, 0
    %2218 = vmatpush.bf16.msra.mxu0 0
    %2219 = vmatpush.bf16.msra.mxu0 0
    %2220 = vmatpush.bf16.msra.mxu0 0
    %2221 = vmatpush.bf16.msra.mxu0 0
    %2222 = vmatpush.bf16.msra.mxu0 0
    %2223 = vmatpush.bf16.msra.mxu0 0
    %2224 = vmatpush.bf16.msra.mxu0 %v2191
    %2225 = vmatpush.bf16.msra.mxu0 %v2190
    %2226 = vmatmul.bf16.gmra.mxu0 %v2195
    %v2227 = vpop.f32.mrf.mxu0
    %v2228 = vadd.f32 0.0, %v2227
    %v2229 = vpop.f32.mrf.mxu0
    %v2230 = vadd.f32 0.0, %v2229
    %2231 = vmatmul.bf16.gmra.mxu0 %v2198
    %v2232 = vpop.f32.mrf.mxu0
    %v2233 = vadd.f32 0.0, %v2232
    %v2234 = vpop.f32.mrf.mxu0
    %v2235 = vadd.f32 0.0, %v2234
    %2236 = vmatmul.bf16.gmra.mxu0 %v2201
    %v2237 = vpop.f32.mrf.mxu0
    %v2238 = vadd.f32 0.0, %v2237
    %v2239 = vpop.f32.mrf.mxu0
    %v2240 = vadd.f32 0.0, %v2239
    %2241 = vmatmul.bf16.gmra.mxu0 %v2204
    %v2242 = vpop.f32.mrf.mxu0
    %v2243 = vadd.f32 0.0, %v2242
    %v2244 = vpop.f32.mrf.mxu0
    %v2245 = vadd.f32 0.0, %v2244
    %2246 = vmatmul.bf16.gmra.mxu0 %v2207
    %v2247 = vpop.f32.mrf.mxu0
    %v2248 = vadd.f32 0.0, %v2247
    %v2249 = vpop.f32.mrf.mxu0
    %v2250 = vadd.f32 0.0, %v2249
    %2251 = vmatmul.bf16.gmra.mxu0 %v2210
    %v2252 = vpop.f32.mrf.mxu0
    %v2253 = vadd.f32 0.0, %v2252
    %v2254 = vpop.f32.mrf.mxu0
    %v2255 = vadd.f32 0.0, %v2254
    %2256 = vmatmul.bf16.gmra.mxu0 %v2213
    %v2257 = vpop.f32.mrf.mxu0
    %v2258 = vadd.f32 0.0, %v2257
    %v2259 = vpop.f32.mrf.mxu0
    %v2260 = vadd.f32 0.0, %v2259
    %2261 = vmatmul.bf16.gmra.mxu0 %v2216
    %v2262 = vpop.f32.mrf.mxu0
    %v2263 = vadd.f32 0.0, %v2262
    %v2264 = vpop.f32.mrf.mxu0
    %v2265 = vadd.f32 0.0, %v2264
    %2266 = vdwg.mxu0
    %v2267 = vadd.f32 %v2033, %v2228
    %v2268 = vadd.f32 %v2034, %v2230
    %v2269 = vadd.f32 %v2035, %v2233
    %v2270 = vadd.f32 %v2036, %v2235
    %v2271 = vadd.f32 %v2037, %v2238
    %v2272 = vadd.f32 %v2038, %v2240
    %v2273 = vadd.f32 %v2039, %v2243
    %v2274 = vadd.f32 %v2040, %v2245
    %v2275 = vadd.f32 %v2041, %v2248
    %v2276 = vadd.f32 %v2042, %v2250
    %v2277 = vadd.f32 %v2043, %v2253
    %v2278 = vadd.f32 %v2044, %v2255
    %v2279 = vadd.f32 %v2045, %v2258
    %v2280 = vadd.f32 %v2046, %v2260
    %v2281 = vadd.f32 %v2047, %v2263
    %v2282 = vadd.f32 %v2048, %v2265
    %v2283 = vld [vmem:[#allocation2 + $0x8] sm:$0xe]
    %s2284 = scalar_lea.vmem %s2, 128
    %v2285 = vld [vmem:[%s2284] sm:$0xf]
    %v2286 = vld [vmem:[%s2284 + $0x4] sm:$0xf]
    %v2287 = vld [vmem:[%s2284 + $0x8] sm:$0xf]
    %v2288 = vld [vmem:[%s2284 + $0xc] sm:$0xf]
    %v2290 = vunpack.c.l.b16 %v2283
    %v2291 = vpack.c.b16 %v2089, %v2290
    %v2292 = vrot.slane %v2291, 1
    %v2293 = vrot.slane %v2106, 1
    %v2294 = vsel %vm1335, %v2292, %v2293
    %v2295 = vrot.slane %v2107, 1
    %v2296 = vsel %vm1335, %v2293, %v2295
    %v2297 = vrot.slane %v2108, 1
    %v2298 = vsel %vm1335, %v2295, %v2297
    %v2299 = vrot.slane %v2109, 1
    %v2300 = vsel %vm1335, %v2297, %v2299
    %v2301 = vrot.slane %v2110, 1
    %v2302 = vsel %vm1335, %v2299, %v2301
    %v2303 = vrot.slane %v2111, 1
    %v2304 = vsel %vm1335, %v2301, %v2303
    %v2305 = vrot.slane %v2112, 1
    %v2306 = vsel %vm1335, %v2303, %v2305
    %v2307 = vrot.slane %v2113, 1
    %v2308 = vsel %vm1335, %v2305, %v2307
    %v2313 = vunpack.c.l.b16 %v2285
    %v2314 = vunpack.c.l.b16 %v2286
    %v2315 = vunpack.c.l.b16 %v2287
    %v2316 = vunpack.c.l.b16 %v2288
    %v2317 = vpack.c.b16 %v2314, %v2313
    %v2318 = vpack.c.b16 %v2316, %v2315
    %v2322 = vsel %vm790, %v2294, 0
    %v2325 = vsel %vm790, %v2296, 0
    %v2328 = vsel %vm790, %v2298, 0
    %v2331 = vsel %vm790, %v2300, 0
    %v2334 = vsel %vm790, %v2302, 0
    %v2337 = vsel %vm790, %v2304, 0
    %v2340 = vsel %vm790, %v2306, 0
    %v2343 = vsel %vm790, %v2308, 0
    %2345 = vmatpush.bf16.msra.mxu0 0
    %2346 = vmatpush.bf16.msra.mxu0 0
    %2347 = vmatpush.bf16.msra.mxu0 0
    %2348 = vmatpush.bf16.msra.mxu0 0
    %2349 = vmatpush.bf16.msra.mxu0 0
    %2350 = vmatpush.bf16.msra.mxu0 0
    %2351 = vmatpush.bf16.msra.mxu0 %v2318
    %2352 = vmatpush.bf16.msra.mxu0 %v2317
    %2353 = vmatmul.bf16.gmra.mxu0 %v2322
    %v2354 = vpop.f32.mrf.mxu0
    %v2355 = vadd.f32 0.0, %v2354
    %v2356 = vpop.f32.mrf.mxu0
    %v2357 = vadd.f32 0.0, %v2356
    %2358 = vmatmul.bf16.gmra.mxu0 %v2325
    %v2359 = vpop.f32.mrf.mxu0
    %v2360 = vadd.f32 0.0, %v2359
    %v2361 = vpop.f32.mrf.mxu0
    %v2362 = vadd.f32 0.0, %v2361
    %2363 = vmatmul.bf16.gmra.mxu0 %v2328
    %v2364 = vpop.f32.mrf.mxu0
    %v2365 = vadd.f32 0.0, %v2364
    %v2366 = vpop.f32.mrf.mxu0
    %v2367 = vadd.f32 0.0, %v2366
    %2368 = vmatmul.bf16.gmra.mxu0 %v2331
    %v2369 = vpop.f32.mrf.mxu0
    %v2370 = vadd.f32 0.0, %v2369
    %v2371 = vpop.f32.mrf.mxu0
    %v2372 = vadd.f32 0.0, %v2371
    %2373 = vmatmul.bf16.gmra.mxu0 %v2334
    %v2374 = vpop.f32.mrf.mxu0
    %v2375 = vadd.f32 0.0, %v2374
    %v2376 = vpop.f32.mrf.mxu0
    %v2377 = vadd.f32 0.0, %v2376
    %2378 = vmatmul.bf16.gmra.mxu0 %v2337
    %v2379 = vpop.f32.mrf.mxu0
    %v2380 = vadd.f32 0.0, %v2379
    %v2381 = vpop.f32.mrf.mxu0
    %v2382 = vadd.f32 0.0, %v2381
    %2383 = vmatmul.bf16.gmra.mxu0 %v2340
    %v2384 = vpop.f32.mrf.mxu0
    %v2385 = vadd.f32 0.0, %v2384
    %v2386 = vpop.f32.mrf.mxu0
    %v2387 = vadd.f32 0.0, %v2386
    %2388 = vmatmul.bf16.gmra.mxu0 %v2343
    %v2389 = vpop.f32.mrf.mxu0
    %v2390 = vadd.f32 0.0, %v2389
    %v2391 = vpop.f32.mrf.mxu0
    %v2392 = vadd.f32 0.0, %v2391
    %2393 = vdwg.mxu0
    %v2394 = vadd.f32 %v2267, %v2355
    %v2395 = vadd.f32 %v2268, %v2357
    %v2396 = vadd.f32 %v2269, %v2360
    %v2397 = vadd.f32 %v2270, %v2362
    %v2398 = vadd.f32 %v2271, %v2365
    %v2399 = vadd.f32 %v2272, %v2367
    %v2400 = vadd.f32 %v2273, %v2370
    %v2401 = vadd.f32 %v2274, %v2372
    %v2402 = vadd.f32 %v2275, %v2375
    %v2403 = vadd.f32 %v2276, %v2377
    %v2404 = vadd.f32 %v2277, %v2380
    %v2405 = vadd.f32 %v2278, %v2382
    %v2406 = vadd.f32 %v2279, %v2385
    %v2407 = vadd.f32 %v2280, %v2387
    %v2408 = vadd.f32 %v2281, %v2390
    %v2409 = vadd.f32 %v2282, %v2392
    %v2410 = vld [vmem:[%s11] sm:$0xff]
    %v2411 = vld [vmem:[%s11 + $0x8] sm:$0xff]
    %v2412 = vld [vmem:[%s11 + $0x10] sm:$0xff]
    %v2413 = vld [vmem:[%s11 + $0x18] sm:$0xff]
    %v2414 = vld [vmem:[%s11 + $0x20] sm:$0xff]
    %v2415 = vld [vmem:[%s11 + $0x28] sm:$0xff]
    %v2416 = vld [vmem:[%s11 + $0x30] sm:$0xff]
    %v2417 = vld [vmem:[%s11 + $0x38] sm:$0xff]
    %v2418 = vld [vmem:[%s11 + $0x40] sm:$0xff]
    %v2419 = vld [vmem:[%s11 + $0x48] sm:$0xff]
    %v2420 = vld [vmem:[%s11 + $0x50] sm:$0xff]
    %v2421 = vld [vmem:[%s11 + $0x58] sm:$0xff]
    %v2422 = vld [vmem:[%s11 + $0x60] sm:$0xff]
    %v2423 = vld [vmem:[%s11 + $0x68] sm:$0xff]
    %v2424 = vld [vmem:[%s11 + $0x70] sm:$0xff]
    %v2425 = vld [vmem:[%s11 + $0x78] sm:$0xff]
    %2427 = vset.pattern.permute.xlu0 0
    %2428 = vperm.xlu0 %2427, %v2410
    %v2429 = vpop.permute.xlu0 %2428
    %2432 = vset.pattern.permute.xlu0 0
    %2433 = vperm.xlu0 %2432, %v2411
    %v2434 = vpop.permute.xlu0 %2433
    %2437 = vset.pattern.permute.xlu0 0
    %2438 = vperm.xlu0 %2437, %v2412
    %v2439 = vpop.permute.xlu0 %2438
    %2442 = vset.pattern.permute.xlu0 0
    %2443 = vperm.xlu0 %2442, %v2413
    %v2444 = vpop.permute.xlu0 %2443
    %2447 = vset.pattern.permute.xlu0 0
    %2448 = vperm.xlu0 %2447, %v2414
    %v2449 = vpop.permute.xlu0 %2448
    %2452 = vset.pattern.permute.xlu0 0
    %2453 = vperm.xlu0 %2452, %v2415
    %v2454 = vpop.permute.xlu0 %2453
    %2457 = vset.pattern.permute.xlu0 0
    %2458 = vperm.xlu0 %2457, %v2416
    %v2459 = vpop.permute.xlu0 %2458
    %2462 = vset.pattern.permute.xlu0 0
    %2463 = vperm.xlu0 %2462, %v2417
    %v2464 = vpop.permute.xlu0 %2463
    %2467 = vset.pattern.permute.xlu0 0
    %2468 = vperm.xlu0 %2467, %v2418
    %v2469 = vpop.permute.xlu0 %2468
    %2472 = vset.pattern.permute.xlu0 0
    %2473 = vperm.xlu0 %2472, %v2419
    %v2474 = vpop.permute.xlu0 %2473
    %2477 = vset.pattern.permute.xlu0 0
    %2478 = vperm.xlu0 %2477, %v2420
    %v2479 = vpop.permute.xlu0 %2478
    %2482 = vset.pattern.permute.xlu0 0
    %2483 = vperm.xlu0 %2482, %v2421
    %v2484 = vpop.permute.xlu0 %2483
    %2487 = vset.pattern.permute.xlu0 0
    %2488 = vperm.xlu0 %2487, %v2422
    %v2489 = vpop.permute.xlu0 %2488
    %2492 = vset.pattern.permute.xlu0 0
    %2493 = vperm.xlu0 %2492, %v2423
    %v2494 = vpop.permute.xlu0 %2493
    %2497 = vset.pattern.permute.xlu0 0
    %2498 = vperm.xlu0 %2497, %v2424
    %v2499 = vpop.permute.xlu0 %2498
    %2502 = vset.pattern.permute.xlu0 0
    %2503 = vperm.xlu0 %2502, %v2425
    %v2504 = vpop.permute.xlu0 %2503
    %v2506 = vmul.f32 %v2394, %v2429
    %v2507 = vmul.f32 %v2395, %v2434
    %v2508 = vmul.f32 %v2396, %v2439
    %v2509 = vmul.f32 %v2397, %v2444
    %v2510 = vmul.f32 %v2398, %v2449
    %v2511 = vmul.f32 %v2399, %v2454
    %v2512 = vmul.f32 %v2400, %v2459
    %v2513 = vmul.f32 %v2401, %v2464
    %v2514 = vmul.f32 %v2402, %v2469
    %v2515 = vmul.f32 %v2403, %v2474
    %v2516 = vmul.f32 %v2404, %v2479
    %v2517 = vmul.f32 %v2405, %v2484
    %v2518 = vmul.f32 %v2406, %v2489
    %v2519 = vmul.f32 %v2407, %v2494
    %v2520 = vmul.f32 %v2408, %v2499
    %v2521 = vmul.f32 %v2409, %v2504
    %vm2522 = vcmask 523264
    %v2523 = vsel %vm2522, %v2506, 0.0
    %v2524 = vsel %vm2522, %v2507, 0.0
    %v2525 = vadd.f32 %v2523, %v2524
    %v2526 = vsel %vm2522, %v2508, 0.0
    %v2527 = vadd.f32 %v2525, %v2526
    %v2528 = vsel %vm2522, %v2509, 0.0
    %v2529 = vadd.f32 %v2527, %v2528
    %v2530 = vsel %vm2522, %v2510, 0.0
    %v2531 = vadd.f32 %v2529, %v2530
    %v2532 = vsel %vm2522, %v2511, 0.0
    %v2533 = vadd.f32 %v2531, %v2532
    %v2534 = vsel %vm2522, %v2512, 0.0
    %v2535 = vadd.f32 %v2533, %v2534
    %v2536 = vsel %vm2522, %v2513, 0.0
    %v2537 = vadd.f32 %v2535, %v2536
    %v2538 = vsel %vm2522, %v2514, 0.0
    %v2539 = vadd.f32 %v2537, %v2538
    %v2540 = vsel %vm2522, %v2515, 0.0
    %v2541 = vadd.f32 %v2539, %v2540
    %v2542 = vsel %vm2522, %v2516, 0.0
    %v2543 = vadd.f32 %v2541, %v2542
    %v2544 = vsel %vm2522, %v2517, 0.0
    %v2545 = vadd.f32 %v2543, %v2544
    %v2546 = vsel %vm2522, %v2518, 0.0
    %v2547 = vadd.f32 %v2545, %v2546
    %v2548 = vsel %vm2522, %v2519, 0.0
    %v2549 = vadd.f32 %v2547, %v2548
    %v2550 = vsel %vm2522, %v2520, 0.0
    %v2551 = vadd.f32 %v2549, %v2550
    %v2552 = vsel %vm2522, %v2521, 0.0
    %v2553 = vadd.f32 %v2551, %v2552
    %v2554 = vrot.slane %v2553, 4
    %v2555 = vadd.f32 %v2553, %v2554
    %v2556 = vrot.slane %v2555, 2
    %v2557 = vadd.f32 %v2555, %v2556
    %v2558 = vrot.slane %v2557, 1
    %v2559 = vadd.f32 %v2557, %v2558
    %v2560 = vrcp.pop 50.0
    %v2561 = vmul.f32 50.0, %v2560
    %v2562 = vsub.f32 1.0, %v2561
    %v2563 = vmul.f32 %v2560, %v2562
    %v2564 = vadd.f32 %v2560, %v2563
    %vm2565 = vweird.f32 %v2560
    %v2566 = vsel %vm2565, %v2560, %v2564
    %v2567 = vmul.f32 %v2559, %v2566
    %v2568 = vsub.f32 %v2394, %v2567
    %v2569 = vsub.f32 %v2395, %v2567
    %v2570 = vsub.f32 %v2396, %v2567
    %v2571 = vsub.f32 %v2397, %v2567
    %v2572 = vsub.f32 %v2398, %v2567
    %v2573 = vsub.f32 %v2399, %v2567
    %v2574 = vsub.f32 %v2400, %v2567
    %v2575 = vsub.f32 %v2401, %v2567
    %v2576 = vsub.f32 %v2402, %v2567
    %v2577 = vsub.f32 %v2403, %v2567
    %v2578 = vsub.f32 %v2404, %v2567
    %v2579 = vsub.f32 %v2405, %v2567
    %v2580 = vsub.f32 %v2406, %v2567
    %v2581 = vsub.f32 %v2407, %v2567
    %v2582 = vsub.f32 %v2408, %v2567
    %v2583 = vsub.f32 %v2409, %v2567
    %v2584 = vmul.f32 %v2568, %v2429
    %v2585 = vmul.f32 %v2569, %v2434
    %v2586 = vmul.f32 %v2570, %v2439
    %v2587 = vmul.f32 %v2571, %v2444
    %v2588 = vmul.f32 %v2572, %v2449
    %v2589 = vmul.f32 %v2573, %v2454
    %v2590 = vmul.f32 %v2574, %v2459
    %v2591 = vmul.f32 %v2575, %v2464
    %v2592 = vmul.f32 %v2576, %v2469
    %v2593 = vmul.f32 %v2577, %v2474
    %v2594 = vmul.f32 %v2578, %v2479
    %v2595 = vmul.f32 %v2579, %v2484
    %v2596 = vmul.f32 %v2580, %v2489
    %v2597 = vmul.f32 %v2581, %v2494
    %v2598 = vmul.f32 %v2582, %v2499
    %v2599 = vmul.f32 %v2583, %v2504
    %v2600 = vmul.f32 %v2584, %v2584
    %v2601 = vmul.f32 %v2585, %v2585
    %v2602 = vmul.f32 %v2586, %v2586
    %v2603 = vmul.f32 %v2587, %v2587
    %v2604 = vmul.f32 %v2588, %v2588
    %v2605 = vmul.f32 %v2589, %v2589
    %v2606 = vmul.f32 %v2590, %v2590
    %v2607 = vmul.f32 %v2591, %v2591
    %v2608 = vmul.f32 %v2592, %v2592
    %v2609 = vmul.f32 %v2593, %v2593
    %v2610 = vmul.f32 %v2594, %v2594
    %v2611 = vmul.f32 %v2595, %v2595
    %v2612 = vmul.f32 %v2596, %v2596
    %v2613 = vmul.f32 %v2597, %v2597
    %v2614 = vmul.f32 %v2598, %v2598
    %v2615 = vmul.f32 %v2599, %v2599
    %v2616 = vsel %vm2522, %v2600, 0.0
    %v2617 = vsel %vm2522, %v2601, 0.0
    %v2618 = vadd.f32 %v2616, %v2617
    %v2619 = vsel %vm2522, %v2602, 0.0
    %v2620 = vadd.f32 %v2618, %v2619
    %v2621 = vsel %vm2522, %v2603, 0.0
    %v2622 = vadd.f32 %v2620, %v2621
    %v2623 = vsel %vm2522, %v2604, 0.0
    %v2624 = vadd.f32 %v2622, %v2623
    %v2625 = vsel %vm2522, %v2605, 0.0
    %v2626 = vadd.f32 %v2624, %v2625
    %v2627 = vsel %vm2522, %v2606, 0.0
    %v2628 = vadd.f32 %v2626, %v2627
    %v2629 = vsel %vm2522, %v2607, 0.0
    %v2630 = vadd.f32 %v2628, %v2629
    %v2631 = vsel %vm2522, %v2608, 0.0
    %v2632 = vadd.f32 %v2630, %v2631
    %v2633 = vsel %vm2522, %v2609, 0.0
    %v2634 = vadd.f32 %v2632, %v2633
    %v2635 = vsel %vm2522, %v2610, 0.0
    %v2636 = vadd.f32 %v2634, %v2635
    %v2637 = vsel %vm2522, %v2611, 0.0
    %v2638 = vadd.f32 %v2636, %v2637
    %v2639 = vsel %vm2522, %v2612, 0.0
    %v2640 = vadd.f32 %v2638, %v2639
    %v2641 = vsel %vm2522, %v2613, 0.0
    %v2642 = vadd.f32 %v2640, %v2641
    %v2643 = vsel %vm2522, %v2614, 0.0
    %v2644 = vadd.f32 %v2642, %v2643
    %v2645 = vsel %vm2522, %v2615, 0.0
    %v2646 = vadd.f32 %v2644, %v2645
    %v2647 = vrot.slane %v2646, 4
    %v2648 = vadd.f32 %v2646, %v2647
    %v2649 = vrot.slane %v2648, 2
    %v2650 = vadd.f32 %v2648, %v2649
    %v2651 = vrot.slane %v2650, 1
    %v2652 = vadd.f32 %v2650, %v2651
    %v2653 = vmul.f32 %v2652, %v2566
    %v2654 = vadd.f32 %v2653, 1e-05
    %v2655 = vrsqrt.pop %v2654
    %v2656 = vmul.f32 %v2655, %v2654
    %v2657 = vmul.f32 %v2656, %v2655
    %v2658 = vmul.f32 0.5, %v2657
    %v2659 = vsub.f32 1.5, %v2658
    %v2660 = vmul.f32 %v2655, %v2659
    %vm2661 = vweird.f32 %v2654
    %vm2662 = vweird.f32 %v2655
    %vm2663 = vmor %vm2661, %vm2662
    %v2664 = vsel %vm2663, %v2655, %v2660
    %v2665 = vld [vmem:[%s5] sm:$0x1]
    %v2666 = vmul.f32 %v2664, %v2665
    %v2667 = vld [vmem:[%s6] sm:$0x1]
    %v2668 = vmul.f32 %v2567, %v2666
    %v2669 = vsub.f32 %v2667, %v2668
    %v2670 = vperm.slane %v2666, 0
    %v2671 = vmul.f32 %v2394, %v2670
    %v2672 = vmul.f32 %v2395, %v2670
    %v2673 = vmul.f32 %v2396, %v2670
    %v2674 = vmul.f32 %v2397, %v2670
    %v2675 = vmul.f32 %v2398, %v2670
    %v2676 = vmul.f32 %v2399, %v2670
    %v2677 = vmul.f32 %v2400, %v2670
    %v2678 = vmul.f32 %v2401, %v2670
    %v2679 = vmul.f32 %v2402, %v2670
    %v2680 = vmul.f32 %v2403, %v2670
    %v2681 = vmul.f32 %v2404, %v2670
    %v2682 = vmul.f32 %v2405, %v2670
    %v2683 = vmul.f32 %v2406, %v2670
    %v2684 = vmul.f32 %v2407, %v2670
    %v2685 = vmul.f32 %v2408, %v2670
    %v2686 = vmul.f32 %v2409, %v2670
    %v2688 = vperm.slane %v2669, 0
    %v2690 = vadd.f32 %v2671, %v2688
    %v2691 = vadd.f32 %v2672, %v2688
    %v2692 = vadd.f32 %v2673, %v2688
    %v2693 = vadd.f32 %v2674, %v2688
    %v2694 = vadd.f32 %v2675, %v2688
    %v2695 = vadd.f32 %v2676, %v2688
    %v2696 = vadd.f32 %v2677, %v2688
    %v2697 = vadd.f32 %v2678, %v2688
    %v2698 = vadd.f32 %v2679, %v2688
    %v2699 = vadd.f32 %v2680, %v2688
    %v2700 = vadd.f32 %v2681, %v2688
    %v2701 = vadd.f32 %v2682, %v2688
    %v2702 = vadd.f32 %v2683, %v2688
    %v2703 = vadd.f32 %v2684, %v2688
    %v2704 = vadd.f32 %v2685, %v2688
    %v2705 = vadd.f32 %v2686, %v2688
    %v2706 = vmax.f32 %v2690, 0.0
    %v2707 = vmax.f32 %v2691, 0.0
    %v2708 = vmax.f32 %v2692, 0.0
    %v2709 = vmax.f32 %v2693, 0.0
    %v2710 = vmax.f32 %v2694, 0.0
    %v2711 = vmax.f32 %v2695, 0.0
    %v2712 = vmax.f32 %v2696, 0.0
    %v2713 = vmax.f32 %v2697, 0.0
    %v2714 = vmax.f32 %v2698, 0.0
    %v2715 = vmax.f32 %v2699, 0.0
    %v2716 = vmax.f32 %v2700, 0.0
    %v2717 = vmax.f32 %v2701, 0.0
    %v2718 = vmax.f32 %v2702, 0.0
    %v2719 = vmax.f32 %v2703, 0.0
    %v2720 = vmax.f32 %v2704, 0.0
    %v2721 = vmax.f32 %v2705, 0.0
    %v2722 = vsel %vm2522, %v2706, 0.0
    %2723 = vadd.xlane.f32.xlu0 %v2722
    %v2724 = vpop.xlane.xlu0 %2723
    %v2725 = vsel %vm2522, %v2707, 0.0
    %2726 = vadd.xlane.f32.xlu0 %v2725
    %v2727 = vpop.xlane.xlu0 %2726
    %v2728 = vsel %vm2522, %v2708, 0.0
    %2729 = vadd.xlane.f32.xlu0 %v2728
    %v2730 = vpop.xlane.xlu0 %2729
    %v2731 = vsel %vm2522, %v2709, 0.0
    %2732 = vadd.xlane.f32.xlu0 %v2731
    %v2733 = vpop.xlane.xlu0 %2732
    %v2734 = vsel %vm2522, %v2710, 0.0
    %2735 = vadd.xlane.f32.xlu0 %v2734
    %v2736 = vpop.xlane.xlu0 %2735
    %v2737 = vsel %vm2522, %v2711, 0.0
    %2738 = vadd.xlane.f32.xlu0 %v2737
    %v2739 = vpop.xlane.xlu0 %2738
    %v2740 = vsel %vm2522, %v2712, 0.0
    %2741 = vadd.xlane.f32.xlu0 %v2740
    %v2742 = vpop.xlane.xlu0 %2741
    %v2743 = vsel %vm2522, %v2713, 0.0
    %2744 = vadd.xlane.f32.xlu0 %v2743
    %v2745 = vpop.xlane.xlu0 %2744
    %v2746 = vsel %vm2522, %v2714, 0.0
    %2747 = vadd.xlane.f32.xlu0 %v2746
    %v2748 = vpop.xlane.xlu0 %2747
    %v2749 = vsel %vm2522, %v2715, 0.0
    %2750 = vadd.xlane.f32.xlu0 %v2749
    %v2751 = vpop.xlane.xlu0 %2750
    %v2752 = vsel %vm2522, %v2716, 0.0
    %2753 = vadd.xlane.f32.xlu0 %v2752
    %v2754 = vpop.xlane.xlu0 %2753
    %v2755 = vsel %vm2522, %v2717, 0.0
    %2756 = vadd.xlane.f32.xlu0 %v2755
    %v2757 = vpop.xlane.xlu0 %2756
    %v2758 = vsel %vm2522, %v2718, 0.0
    %2759 = vadd.xlane.f32.xlu0 %v2758
    %v2760 = vpop.xlane.xlu0 %2759
    %v2761 = vsel %vm2522, %v2719, 0.0
    %2762 = vadd.xlane.f32.xlu0 %v2761
    %v2763 = vpop.xlane.xlu0 %2762
    %v2764 = vsel %vm2522, %v2720, 0.0
    %2765 = vadd.xlane.f32.xlu0 %v2764
    %v2766 = vpop.xlane.xlu0 %2765
    %v2767 = vsel %vm2522, %v2721, 0.0
    %2768 = vadd.xlane.f32.xlu0 %v2767
    %v2769 = vpop.xlane.xlu0 %2768
    %v2770 = vrcp.pop 64.0
    %v2771 = vmul.f32 64.0, %v2770
    %v2772 = vsub.f32 1.0, %v2771
    %v2773 = vmul.f32 %v2770, %v2772
    %v2774 = vadd.f32 %v2770, %v2773
    %vm2775 = vweird.f32 %v2770
    %v2776 = vsel %vm2775, %v2770, %v2774
    %v2777 = vmul.f32 %v2724, %v2776
    %v2778 = vmul.f32 %v2727, %v2776
    %v2779 = vmul.f32 %v2730, %v2776
    %v2780 = vmul.f32 %v2733, %v2776
    %v2781 = vmul.f32 %v2736, %v2776
    %v2782 = vmul.f32 %v2739, %v2776
    %v2783 = vmul.f32 %v2742, %v2776
    %v2784 = vmul.f32 %v2745, %v2776
    %v2785 = vmul.f32 %v2748, %v2776
    %v2786 = vmul.f32 %v2751, %v2776
    %v2787 = vmul.f32 %v2754, %v2776
    %v2788 = vmul.f32 %v2757, %v2776
    %v2789 = vmul.f32 %v2760, %v2776
    %v2790 = vmul.f32 %v2763, %v2776
    %v2791 = vmul.f32 %v2766, %v2776
    %v2792 = vmul.f32 %v2769, %v2776
    %v2793 = vsel %vm2522, %v2706, -inf
    %2794 = vmax.xlane.f32.xlu0 %v2793
    %v2795 = vpop.xlane.xlu0 %2794
    %v2796 = vsel %vm2522, %v2707, -inf
    %2797 = vmax.xlane.f32.xlu0 %v2796
    %v2798 = vpop.xlane.xlu0 %2797
    %v2799 = vsel %vm2522, %v2708, -inf
    %2800 = vmax.xlane.f32.xlu0 %v2799
    %v2801 = vpop.xlane.xlu0 %2800
    %v2802 = vsel %vm2522, %v2709, -inf
    %2803 = vmax.xlane.f32.xlu0 %v2802
    %v2804 = vpop.xlane.xlu0 %2803
    %v2805 = vsel %vm2522, %v2710, -inf
    %2806 = vmax.xlane.f32.xlu0 %v2805
    %v2807 = vpop.xlane.xlu0 %2806
    %v2808 = vsel %vm2522, %v2711, -inf
    %2809 = vmax.xlane.f32.xlu0 %v2808
    %v2810 = vpop.xlane.xlu0 %2809
    %v2811 = vsel %vm2522, %v2712, -inf
    %2812 = vmax.xlane.f32.xlu0 %v2811
    %v2813 = vpop.xlane.xlu0 %2812
    %v2814 = vsel %vm2522, %v2713, -inf
    %2815 = vmax.xlane.f32.xlu0 %v2814
    %v2816 = vpop.xlane.xlu0 %2815
    %v2817 = vsel %vm2522, %v2714, -inf
    %2818 = vmax.xlane.f32.xlu0 %v2817
    %v2819 = vpop.xlane.xlu0 %2818
    %v2820 = vsel %vm2522, %v2715, -inf
    %2821 = vmax.xlane.f32.xlu0 %v2820
    %v2822 = vpop.xlane.xlu0 %2821
    %v2823 = vsel %vm2522, %v2716, -inf
    %2824 = vmax.xlane.f32.xlu0 %v2823
    %v2825 = vpop.xlane.xlu0 %2824
    %v2826 = vsel %vm2522, %v2717, -inf
    %2827 = vmax.xlane.f32.xlu0 %v2826
    %v2828 = vpop.xlane.xlu0 %2827
    %v2829 = vsel %vm2522, %v2718, -inf
    %2830 = vmax.xlane.f32.xlu0 %v2829
    %v2831 = vpop.xlane.xlu0 %2830
    %v2832 = vsel %vm2522, %v2719, -inf
    %2833 = vmax.xlane.f32.xlu0 %v2832
    %v2834 = vpop.xlane.xlu0 %2833
    %v2835 = vsel %vm2522, %v2720, -inf
    %2836 = vmax.xlane.f32.xlu0 %v2835
    %v2837 = vpop.xlane.xlu0 %2836
    %v2838 = vsel %vm2522, %v2721, -inf
    %2839 = vmax.xlane.f32.xlu0 %v2838
    %v2840 = vpop.xlane.xlu0 %2839
    %v2841 = vld [vmem:[%s8] sm:$0xff]
    %v2842 = vld [vmem:[%s8 + $0x8] sm:$0xff]
    %v2843 = vld [vmem:[%s8 + $0x10] sm:$0xff]
    %v2844 = vld [vmem:[%s8 + $0x18] sm:$0xff]
    %v2845 = vld [vmem:[%s8 + $0x20] sm:$0xff]
    %v2846 = vld [vmem:[%s8 + $0x28] sm:$0xff]
    %v2847 = vld [vmem:[%s8 + $0x30] sm:$0xff]
    %v2848 = vld [vmem:[%s8 + $0x38] sm:$0xff]
    %v2849 = vld [vmem:[%s8 + $0x40] sm:$0xff]
    %v2850 = vld [vmem:[%s8 + $0x48] sm:$0xff]
    %v2851 = vld [vmem:[%s8 + $0x50] sm:$0xff]
    %v2852 = vld [vmem:[%s8 + $0x58] sm:$0xff]
    %v2853 = vld [vmem:[%s8 + $0x60] sm:$0xff]
    %v2854 = vld [vmem:[%s8 + $0x68] sm:$0xff]
    %v2855 = vld [vmem:[%s8 + $0x70] sm:$0xff]
    %v2856 = vld [vmem:[%s8 + $0x78] sm:$0xff]
    %v2857 = vmul.f32 %v2777, %v2841
    %v2858 = vmul.f32 %v2778, %v2842
    %v2859 = vmul.f32 %v2779, %v2843
    %v2860 = vmul.f32 %v2780, %v2844
    %v2861 = vmul.f32 %v2781, %v2845
    %v2862 = vmul.f32 %v2782, %v2846
    %v2863 = vmul.f32 %v2783, %v2847
    %v2864 = vmul.f32 %v2784, %v2848
    %v2865 = vmul.f32 %v2785, %v2849
    %v2866 = vmul.f32 %v2786, %v2850
    %v2867 = vmul.f32 %v2787, %v2851
    %v2868 = vmul.f32 %v2788, %v2852
    %v2869 = vmul.f32 %v2789, %v2853
    %v2870 = vmul.f32 %v2790, %v2854
    %v2871 = vmul.f32 %v2791, %v2855
    %v2872 = vmul.f32 %v2792, %v2856
    %v2873 = vld [vmem:[%s9] sm:$0xff]
    %v2874 = vld [vmem:[%s9 + $0x8] sm:$0xff]
    %v2875 = vld [vmem:[%s9 + $0x10] sm:$0xff]
    %v2876 = vld [vmem:[%s9 + $0x18] sm:$0xff]
    %v2877 = vld [vmem:[%s9 + $0x20] sm:$0xff]
    %v2878 = vld [vmem:[%s9 + $0x28] sm:$0xff]
    %v2879 = vld [vmem:[%s9 + $0x30] sm:$0xff]
    %v2880 = vld [vmem:[%s9 + $0x38] sm:$0xff]
    %v2881 = vld [vmem:[%s9 + $0x40] sm:$0xff]
    %v2882 = vld [vmem:[%s9 + $0x48] sm:$0xff]
    %v2883 = vld [vmem:[%s9 + $0x50] sm:$0xff]
    %v2884 = vld [vmem:[%s9 + $0x58] sm:$0xff]
    %v2885 = vld [vmem:[%s9 + $0x60] sm:$0xff]
    %v2886 = vld [vmem:[%s9 + $0x68] sm:$0xff]
    %v2887 = vld [vmem:[%s9 + $0x70] sm:$0xff]
    %v2888 = vld [vmem:[%s9 + $0x78] sm:$0xff]
    %v2889 = vmul.f32 %v2795, %v2873
    %v2890 = vmul.f32 %v2798, %v2874
    %v2891 = vmul.f32 %v2801, %v2875
    %v2892 = vmul.f32 %v2804, %v2876
    %v2893 = vmul.f32 %v2807, %v2877
    %v2894 = vmul.f32 %v2810, %v2878
    %v2895 = vmul.f32 %v2813, %v2879
    %v2896 = vmul.f32 %v2816, %v2880
    %v2897 = vmul.f32 %v2819, %v2881
    %v2898 = vmul.f32 %v2822, %v2882
    %v2899 = vmul.f32 %v2825, %v2883
    %v2900 = vmul.f32 %v2828, %v2884
    %v2901 = vmul.f32 %v2831, %v2885
    %v2902 = vmul.f32 %v2834, %v2886
    %v2903 = vmul.f32 %v2837, %v2887
    %v2904 = vmul.f32 %v2840, %v2888
    %v2905 = vadd.f32 %v2857, %v2889
    %v2906 = vadd.f32 %v2858, %v2890
    %v2907 = vadd.f32 %v2859, %v2891
    %v2908 = vadd.f32 %v2860, %v2892
    %v2909 = vadd.f32 %v2861, %v2893
    %v2910 = vadd.f32 %v2862, %v2894
    %v2911 = vadd.f32 %v2863, %v2895
    %v2912 = vadd.f32 %v2864, %v2896
    %v2913 = vadd.f32 %v2865, %v2897
    %v2914 = vadd.f32 %v2866, %v2898
    %v2915 = vadd.f32 %v2867, %v2899
    %v2916 = vadd.f32 %v2868, %v2900
    %v2917 = vadd.f32 %v2869, %v2901
    %v2918 = vadd.f32 %v2870, %v2902
    %v2919 = vadd.f32 %v2871, %v2903
    %v2920 = vadd.f32 %v2872, %v2904
    %v2921 = vld [vmem:[%s7] sm:$0xff]
    %v2922 = vld [vmem:[%s7 + $0x8] sm:$0xff]
    %2923 = vmatpush.msra.mxu0 %v2920
    %2924 = vmatpush.msra.mxu0 %v2919
    %2925 = vmatpush.msra.mxu0 %v2918
    %2926 = vmatpush.msra.mxu0 %v2917
    %2927 = vmatpush.msra.mxu0 %v2916
    %2928 = vmatpush.msra.mxu0 %v2915
    %2929 = vmatpush.msra.mxu0 %v2914
    %2930 = vmatpush.msra.mxu0 %v2913
    %2931 = vmatpush.msra.mxu0 %v2912
    %2932 = vmatpush.msra.mxu0 %v2911
    %2933 = vmatpush.msra.mxu0 %v2910
    %2934 = vmatpush.msra.mxu0 %v2909
    %2935 = vmatpush.msra.mxu0 %v2908
    %2936 = vmatpush.msra.mxu0 %v2907
    %2937 = vmatpush.msra.mxu0 %v2906
    %2938 = vmatpush.msra.mxu0 %v2905
    %2939 = vmatmul.f32.gmra.mxu0 %v2921
    %v2940 = vpop.f32.mrf.mxu0
    %v2941 = vadd.f32 0.0, %v2940
    %2942 = vmatmul.f32.gmra.mxu0 %v2922
    %v2943 = vpop.f32.mrf.mxu0
    %v2944 = vadd.f32 0.0, %v2943
    %2945 = vdwg.mxu0
    %vm2946 = vcmask 89088
    %2947 = vst.msk [vmem:[#allocation3] sm:$0xff] %vm2946, 0.0
    %vm2948 = vcmask 83968
    %2949 = vst.msk [vmem:[#allocation3 + $0x8] sm:$0x7] %vm2948, 0.0
    %2950 = vst.msk [vmem:[#allocation3 + $0x10] sm:$0xff] %vm2946, 0.0
    %2951 = vst.msk [vmem:[#allocation3 + $0x18] sm:$0x7] %vm2948, 0.0
    %2952 = vst.msk [vmem:[#allocation3 + $0x20] sm:$0xff] %vm2946, 0.0
    %2953 = vst.msk [vmem:[#allocation3 + $0x28] sm:$0x7] %vm2948, 0.0
    %2954 = vst.msk [vmem:[#allocation3 + $0x30] sm:$0xff] %vm2946, 0.0
    %2955 = vst.msk [vmem:[#allocation3 + $0x38] sm:$0x7] %vm2948, 0.0
    %2957 = vrot.lane.b32.xlu0 %v2941, 3
    %v2958 = vpop.permute.xlu0 %2957
    %vm2960 = vcmask 61464
    %2961 = vst.msk [vmem:[#allocation3 + $0x3] sm:$0x1f] %vm2960, %v2958
    %2962 = vrot.lane.b32.xlu0 %v2941, 123
    %v2963 = vpop.permute.xlu0 %2962
    %s2965 = scalar_lea.vmem [#allocation3], 32
    %2966 = vst.msk [vmem:[%s2965 + $0x3] sm:$0x1f] %vm2960, %v2963
    %2968 = vrot.lane.b32.xlu0 %v2944, 3
    %v2969 = vpop.permute.xlu0 %2968
    %s2971 = scalar_lea.vmem [#allocation3], 16
    %2972 = vst.msk [vmem:[%s2971 + $0x3] sm:$0x1f] %vm2960, %v2969
    %2973 = vrot.lane.b32.xlu0 %v2944, 123
    %v2974 = vpop.permute.xlu0 %2973
    %s2976 = scalar_lea.vmem [#allocation3], 48
    %2977 = vst.msk [vmem:[%s2976 + $0x3] sm:$0x1f] %vm2960, %v2974
    %s2978 = sld [smem:[#allocation4]]
    %v2979 = vld [vmem:[#allocation3] sm:$0x1f]
    %v2980 = vld [vmem:[#allocation3 + $0x10] sm:$0x1f]
    %v2981 = vstv %s2978
    %v2982 = vmul.f32 %v2981, %v2979
    %v2983 = vmul.f32 %v2981, %v2980
    %v2984 = vadd.f32 %v2982, 0.0
    %v2985 = vadd.f32 %v2983, 0.0
    %s2986 = sld [smem:[#allocation4 + $0x1]]
    %v2987 = vstv %s2986
    %v2988 = vmul.f32 %v2987, %v2979
    %v2989 = vmul.f32 %v2987, %v2980
    %2992 = vrot.lane.b32.xlu0 %v2988, 127
    %v2993 = vpop.permute.xlu0 %2992
    %2994 = vrot.lane.b32.xlu0 %v2989, 127
    %v2995 = vpop.permute.xlu0 %2994
    %v2998 = vadd.f32 %v2984, %v2993
    %v2999 = vadd.f32 %v2985, %v2995
    %s3000 = sld [smem:[#allocation4 + $0x2]]
    %v3001 = vstv %s3000
    %v3002 = vmul.f32 %v3001, %v2979
    %v3003 = vmul.f32 %v3001, %v2980
    %3006 = vrot.lane.b32.xlu0 %v3002, 126
    %v3007 = vpop.permute.xlu0 %3006
    %3008 = vrot.lane.b32.xlu0 %v3003, 126
    %v3009 = vpop.permute.xlu0 %3008
    %v3012 = vadd.f32 %v2998, %v3007
    %v3013 = vadd.f32 %v2999, %v3009
    %s3014 = sld [smem:[#allocation4 + $0x3]]
    %v3015 = vstv %s3014
    %v3016 = vmul.f32 %v3015, %v2979
    %v3017 = vmul.f32 %v3015, %v2980
    %3020 = vrot.lane.b32.xlu0 %v3016, 125
    %v3021 = vpop.permute.xlu0 %3020
    %3022 = vrot.lane.b32.xlu0 %v3017, 125
    %v3023 = vpop.permute.xlu0 %3022
    %v3026 = vadd.f32 %v3012, %v3021
    %v3027 = vadd.f32 %v3013, %v3023
    %s3028 = sld [smem:[#allocation4 + $0x4]]
    %v3029 = vstv %s3028
    %v3030 = vmul.f32 %v3029, %v2979
    %v3031 = vmul.f32 %v3029, %v2980
    %3034 = vrot.lane.b32.xlu0 %v3030, 124
    %v3035 = vpop.permute.xlu0 %3034
    %3036 = vrot.lane.b32.xlu0 %v3031, 124
    %v3037 = vpop.permute.xlu0 %3036
    %v3040 = vadd.f32 %v3026, %v3035
    %v3041 = vadd.f32 %v3027, %v3037
    %s3042 = sld [smem:[#allocation4 + $0x5]]
    %v3043 = vstv %s3042
    %v3044 = vmul.f32 %v3043, %v2979
    %v3045 = vmul.f32 %v3043, %v2980
    %3048 = vrot.lane.b32.xlu0 %v3044, 123
    %v3049 = vpop.permute.xlu0 %3048
    %3050 = vrot.lane.b32.xlu0 %v3045, 123
    %v3051 = vpop.permute.xlu0 %3050
    %v3054 = vadd.f32 %v3040, %v3049
    %v3055 = vadd.f32 %v3041, %v3051
    %s3056 = sld [smem:[#allocation4 + $0x6]]
    %v3057 = vstv %s3056
    %v3058 = vmul.f32 %v3057, %v2979
    %v3059 = vmul.f32 %v3057, %v2980
    %3062 = vrot.lane.b32.xlu0 %v3058, 122
    %v3063 = vpop.permute.xlu0 %3062
    %3064 = vrot.lane.b32.xlu0 %v3059, 122
    %v3065 = vpop.permute.xlu0 %3064
    %v3068 = vadd.f32 %v3054, %v3063
    %v3069 = vadd.f32 %v3055, %v3065
    %s3070 = sld [smem:[#allocation4 + $0x7]]
    %v3071 = vld [vmem:[#allocation3 + $0x1] sm:$0x1f]
    %v3072 = vld [vmem:[#allocation3 + $0x11] sm:$0x1f]
    %v3073 = vstv %s3070
    %v3074 = vmul.f32 %v3073, %v3071
    %v3075 = vmul.f32 %v3073, %v3072
    %v3076 = vadd.f32 %v3068, %v3074
    %v3077 = vadd.f32 %v3069, %v3075
    %s3078 = sld [smem:[#allocation4 + $0x8]]
    %v3079 = vstv %s3078
    %v3080 = vmul.f32 %v3079, %v3071
    %v3081 = vmul.f32 %v3079, %v3072
    %3084 = vrot.lane.b32.xlu0 %v3080, 127
    %v3085 = vpop.permute.xlu0 %3084
    %3086 = vrot.lane.b32.xlu0 %v3081, 127
    %v3087 = vpop.permute.xlu0 %3086
    %v3090 = vadd.f32 %v3076, %v3085
    %v3091 = vadd.f32 %v3077, %v3087
    %s3092 = sld [smem:[#allocation4 + $0x9]]
    %v3093 = vstv %s3092
    %v3094 = vmul.f32 %v3093, %v3071
    %v3095 = vmul.f32 %v3093, %v3072
    %3098 = vrot.lane.b32.xlu0 %v3094, 126
    %v3099 = vpop.permute.xlu0 %3098
    %3100 = vrot.lane.b32.xlu0 %v3095, 126
    %v3101 = vpop.permute.xlu0 %3100
    %v3104 = vadd.f32 %v3090, %v3099
    %v3105 = vadd.f32 %v3091, %v3101
    %s3106 = sld [smem:[#allocation4 + $0xa]]
    %v3107 = vstv %s3106
    %v3108 = vmul.f32 %v3107, %v3071
    %v3109 = vmul.f32 %v3107, %v3072
    %3112 = vrot.lane.b32.xlu0 %v3108, 125
    %v3113 = vpop.permute.xlu0 %3112
    %3114 = vrot.lane.b32.xlu0 %v3109, 125
    %v3115 = vpop.permute.xlu0 %3114
    %v3118 = vadd.f32 %v3104, %v3113
    %v3119 = vadd.f32 %v3105, %v3115
    %s3120 = sld [smem:[#allocation4 + $0xb]]
    %v3121 = vstv %s3120
    %v3122 = vmul.f32 %v3121, %v3071
    %v3123 = vmul.f32 %v3121, %v3072
    %3126 = vrot.lane.b32.xlu0 %v3122, 124
    %v3127 = vpop.permute.xlu0 %3126
    %3128 = vrot.lane.b32.xlu0 %v3123, 124
    %v3129 = vpop.permute.xlu0 %3128
    %v3132 = vadd.f32 %v3118, %v3127
    %v3133 = vadd.f32 %v3119, %v3129
    %s3134 = sld [smem:[#allocation4 + $0xc]]
    %v3135 = vstv %s3134
    %v3136 = vmul.f32 %v3135, %v3071
    %v3137 = vmul.f32 %v3135, %v3072
    %3140 = vrot.lane.b32.xlu0 %v3136, 123
    %v3141 = vpop.permute.xlu0 %3140
    %3142 = vrot.lane.b32.xlu0 %v3137, 123
    %v3143 = vpop.permute.xlu0 %3142
    %v3146 = vadd.f32 %v3132, %v3141
    %v3147 = vadd.f32 %v3133, %v3143
    %s3148 = sld [smem:[#allocation4 + $0xd]]
    %v3149 = vstv %s3148
    %v3150 = vmul.f32 %v3149, %v3071
    %v3151 = vmul.f32 %v3149, %v3072
    %3154 = vrot.lane.b32.xlu0 %v3150, 122
    %v3155 = vpop.permute.xlu0 %3154
    %3156 = vrot.lane.b32.xlu0 %v3151, 122
    %v3157 = vpop.permute.xlu0 %3156
    %v3160 = vadd.f32 %v3146, %v3155
    %v3161 = vadd.f32 %v3147, %v3157
    %s3162 = sld [smem:[#allocation4 + $0xe]]
    %v3163 = vld [vmem:[#allocation3 + $0x2] sm:$0x1f]
    %v3164 = vld [vmem:[#allocation3 + $0x12] sm:$0x1f]
    %v3165 = vstv %s3162
    %v3166 = vmul.f32 %v3165, %v3163
    %v3167 = vmul.f32 %v3165, %v3164
    %v3168 = vadd.f32 %v3160, %v3166
    %v3169 = vadd.f32 %v3161, %v3167
    %s3170 = sld [smem:[#allocation4 + $0xf]]
    %v3171 = vstv %s3170
    %v3172 = vmul.f32 %v3171, %v3163
    %v3173 = vmul.f32 %v3171, %v3164
    %3176 = vrot.lane.b32.xlu0 %v3172, 127
    %v3177 = vpop.permute.xlu0 %3176
    %3178 = vrot.lane.b32.xlu0 %v3173, 127
    %v3179 = vpop.permute.xlu0 %3178
    %v3182 = vadd.f32 %v3168, %v3177
    %v3183 = vadd.f32 %v3169, %v3179
    %s3184 = sld [smem:[#allocation4 + $0x10]]
    %v3185 = vstv %s3184
    %v3186 = vmul.f32 %v3185, %v3163
    %v3187 = vmul.f32 %v3185, %v3164
    %3190 = vrot.lane.b32.xlu0 %v3186, 126
    %v3191 = vpop.permute.xlu0 %3190
    %3192 = vrot.lane.b32.xlu0 %v3187, 126
    %v3193 = vpop.permute.xlu0 %3192
    %v3196 = vadd.f32 %v3182, %v3191
    %v3197 = vadd.f32 %v3183, %v3193
    %s3198 = sld [smem:[#allocation4 + $0x11]]
    %v3199 = vstv %s3198
    %v3200 = vmul.f32 %v3199, %v3163
    %v3201 = vmul.f32 %v3199, %v3164
    %3204 = vrot.lane.b32.xlu0 %v3200, 125
    %v3205 = vpop.permute.xlu0 %3204
    %3206 = vrot.lane.b32.xlu0 %v3201, 125
    %v3207 = vpop.permute.xlu0 %3206
    %v3210 = vadd.f32 %v3196, %v3205
    %v3211 = vadd.f32 %v3197, %v3207
    %s3212 = sld [smem:[#allocation4 + $0x12]]
    %v3213 = vstv %s3212
    %v3214 = vmul.f32 %v3213, %v3163
    %v3215 = vmul.f32 %v3213, %v3164
    %3218 = vrot.lane.b32.xlu0 %v3214, 124
    %v3219 = vpop.permute.xlu0 %3218
    %3220 = vrot.lane.b32.xlu0 %v3215, 124
    %v3221 = vpop.permute.xlu0 %3220
    %v3224 = vadd.f32 %v3210, %v3219
    %v3225 = vadd.f32 %v3211, %v3221
    %s3226 = sld [smem:[#allocation4 + $0x13]]
    %v3227 = vstv %s3226
    %v3228 = vmul.f32 %v3227, %v3163
    %v3229 = vmul.f32 %v3227, %v3164
    %3232 = vrot.lane.b32.xlu0 %v3228, 123
    %v3233 = vpop.permute.xlu0 %3232
    %3234 = vrot.lane.b32.xlu0 %v3229, 123
    %v3235 = vpop.permute.xlu0 %3234
    %v3238 = vadd.f32 %v3224, %v3233
    %v3239 = vadd.f32 %v3225, %v3235
    %s3240 = sld [smem:[#allocation4 + $0x14]]
    %v3241 = vstv %s3240
    %v3242 = vmul.f32 %v3241, %v3163
    %v3243 = vmul.f32 %v3241, %v3164
    %3246 = vrot.lane.b32.xlu0 %v3242, 122
    %v3247 = vpop.permute.xlu0 %3246
    %3248 = vrot.lane.b32.xlu0 %v3243, 122
    %v3249 = vpop.permute.xlu0 %3248
    %v3252 = vadd.f32 %v3238, %v3247
    %v3253 = vadd.f32 %v3239, %v3249
    %s3254 = sld [smem:[#allocation4 + $0x15]]
    %v3255 = vld [vmem:[#allocation3 + $0x3] sm:$0x1f]
    %v3256 = vld [vmem:[#allocation3 + $0x13] sm:$0x1f]
    %v3257 = vstv %s3254
    %v3258 = vmul.f32 %v3257, %v3255
    %v3259 = vmul.f32 %v3257, %v3256
    %v3260 = vadd.f32 %v3252, %v3258
    %v3261 = vadd.f32 %v3253, %v3259
    %s3262 = sld [smem:[#allocation4 + $0x16]]
    %v3263 = vstv %s3262
    %v3264 = vmul.f32 %v3263, %v3255
    %v3265 = vmul.f32 %v3263, %v3256
    %3268 = vrot.lane.b32.xlu0 %v3264, 127
    %v3269 = vpop.permute.xlu0 %3268
    %3270 = vrot.lane.b32.xlu0 %v3265, 127
    %v3271 = vpop.permute.xlu0 %3270
    %v3274 = vadd.f32 %v3260, %v3269
    %v3275 = vadd.f32 %v3261, %v3271
    %s3276 = sld [smem:[#allocation4 + $0x17]]
    %v3277 = vstv %s3276
    %v3278 = vmul.f32 %v3277, %v3255
    %v3279 = vmul.f32 %v3277, %v3256
    %3282 = vrot.lane.b32.xlu0 %v3278, 126
    %v3283 = vpop.permute.xlu0 %3282
    %3284 = vrot.lane.b32.xlu0 %v3279, 126
    %v3285 = vpop.permute.xlu0 %3284
    %v3288 = vadd.f32 %v3274, %v3283
    %v3289 = vadd.f32 %v3275, %v3285
    %s3290 = sld [smem:[#allocation4 + $0x18]]
    %v3291 = vstv %s3290
    %v3292 = vmul.f32 %v3291, %v3255
    %v3293 = vmul.f32 %v3291, %v3256
    %3296 = vrot.lane.b32.xlu0 %v3292, 125
    %v3297 = vpop.permute.xlu0 %3296
    %3298 = vrot.lane.b32.xlu0 %v3293, 125
    %v3299 = vpop.permute.xlu0 %3298
    %v3302 = vadd.f32 %v3288, %v3297
    %v3303 = vadd.f32 %v3289, %v3299
    %s3304 = sld [smem:[#allocation4 + $0x19]]
    %v3305 = vstv %s3304
    %v3306 = vmul.f32 %v3305, %v3255
    %v3307 = vmul.f32 %v3305, %v3256
    %3310 = vrot.lane.b32.xlu0 %v3306, 124
    %v3311 = vpop.permute.xlu0 %3310
    %3312 = vrot.lane.b32.xlu0 %v3307, 124
    %v3313 = vpop.permute.xlu0 %3312
    %v3316 = vadd.f32 %v3302, %v3311
    %v3317 = vadd.f32 %v3303, %v3313
    %s3318 = sld [smem:[#allocation4 + $0x1a]]
    %v3319 = vstv %s3318
    %v3320 = vmul.f32 %v3319, %v3255
    %v3321 = vmul.f32 %v3319, %v3256
    %3324 = vrot.lane.b32.xlu0 %v3320, 123
    %v3325 = vpop.permute.xlu0 %3324
    %3326 = vrot.lane.b32.xlu0 %v3321, 123
    %v3327 = vpop.permute.xlu0 %3326
    %v3330 = vadd.f32 %v3316, %v3325
    %v3331 = vadd.f32 %v3317, %v3327
    %s3332 = sld [smem:[#allocation4 + $0x1b]]
    %v3333 = vstv %s3332
    %v3334 = vmul.f32 %v3333, %v3255
    %v3335 = vmul.f32 %v3333, %v3256
    %3338 = vrot.lane.b32.xlu0 %v3334, 122
    %v3339 = vpop.permute.xlu0 %3338
    %3340 = vrot.lane.b32.xlu0 %v3335, 122
    %v3341 = vpop.permute.xlu0 %3340
    %v3344 = vadd.f32 %v3330, %v3339
    %v3345 = vadd.f32 %v3331, %v3341
    %s3346 = sld [smem:[#allocation4 + $0x1c]]
    %v3347 = vld [vmem:[#allocation3 + $0x4] sm:$0x1f]
    %v3348 = vld [vmem:[#allocation3 + $0x14] sm:$0x1f]
    %v3349 = vstv %s3346
    %v3350 = vmul.f32 %v3349, %v3347
    %v3351 = vmul.f32 %v3349, %v3348
    %v3352 = vadd.f32 %v3344, %v3350
    %v3353 = vadd.f32 %v3345, %v3351
    %s3354 = sld [smem:[#allocation4 + $0x1d]]
    %v3355 = vstv %s3354
    %v3356 = vmul.f32 %v3355, %v3347
    %v3357 = vmul.f32 %v3355, %v3348
    %3360 = vrot.lane.b32.xlu0 %v3356, 127
    %v3361 = vpop.permute.xlu0 %3360
    %3362 = vrot.lane.b32.xlu0 %v3357, 127
    %v3363 = vpop.permute.xlu0 %3362
    %v3366 = vadd.f32 %v3352, %v3361
    %v3367 = vadd.f32 %v3353, %v3363
    %s3368 = sld [smem:[#allocation4 + $0x1e]]
    %v3369 = vstv %s3368
    %v3370 = vmul.f32 %v3369, %v3347
    %v3371 = vmul.f32 %v3369, %v3348
    %3374 = vrot.lane.b32.xlu0 %v3370, 126
    %v3375 = vpop.permute.xlu0 %3374
    %3376 = vrot.lane.b32.xlu0 %v3371, 126
    %v3377 = vpop.permute.xlu0 %3376
    %v3380 = vadd.f32 %v3366, %v3375
    %v3381 = vadd.f32 %v3367, %v3377
    %s3382 = sld [smem:[#allocation4 + $0x1f]]
    %v3383 = vstv %s3382
    %v3384 = vmul.f32 %v3383, %v3347
    %v3385 = vmul.f32 %v3383, %v3348
    %3388 = vrot.lane.b32.xlu0 %v3384, 125
    %v3389 = vpop.permute.xlu0 %3388
    %3390 = vrot.lane.b32.xlu0 %v3385, 125
    %v3391 = vpop.permute.xlu0 %3390
    %v3394 = vadd.f32 %v3380, %v3389
    %v3395 = vadd.f32 %v3381, %v3391
    %s3396 = sld [smem:[#allocation4 + $0x20]]
    %v3397 = vstv %s3396
    %v3398 = vmul.f32 %v3397, %v3347
    %v3399 = vmul.f32 %v3397, %v3348
    %3402 = vrot.lane.b32.xlu0 %v3398, 124
    %v3403 = vpop.permute.xlu0 %3402
    %3404 = vrot.lane.b32.xlu0 %v3399, 124
    %v3405 = vpop.permute.xlu0 %3404
    %v3408 = vadd.f32 %v3394, %v3403
    %v3409 = vadd.f32 %v3395, %v3405
    %s3410 = sld [smem:[#allocation4 + $0x21]]
    %v3411 = vstv %s3410
    %v3412 = vmul.f32 %v3411, %v3347
    %v3413 = vmul.f32 %v3411, %v3348
    %3416 = vrot.lane.b32.xlu0 %v3412, 123
    %v3417 = vpop.permute.xlu0 %3416
    %3418 = vrot.lane.b32.xlu0 %v3413, 123
    %v3419 = vpop.permute.xlu0 %3418
    %v3422 = vadd.f32 %v3408, %v3417
    %v3423 = vadd.f32 %v3409, %v3419
    %s3424 = sld [smem:[#allocation4 + $0x22]]
    %v3425 = vstv %s3424
    %v3426 = vmul.f32 %v3425, %v3347
    %v3427 = vmul.f32 %v3425, %v3348
    %3430 = vrot.lane.b32.xlu0 %v3426, 122
    %v3431 = vpop.permute.xlu0 %3430
    %3432 = vrot.lane.b32.xlu0 %v3427, 122
    %v3433 = vpop.permute.xlu0 %3432
    %v3436 = vadd.f32 %v3422, %v3431
    %v3437 = vadd.f32 %v3423, %v3433
    %s3438 = sld [smem:[#allocation4 + $0x23]]
    %v3439 = vld [vmem:[#allocation3 + $0x5] sm:$0x1f]
    %v3440 = vld [vmem:[#allocation3 + $0x15] sm:$0x1f]
    %v3441 = vstv %s3438
    %v3442 = vmul.f32 %v3441, %v3439
    %v3443 = vmul.f32 %v3441, %v3440
    %v3444 = vadd.f32 %v3436, %v3442
    %v3445 = vadd.f32 %v3437, %v3443
    %s3446 = sld [smem:[#allocation4 + $0x24]]
    %v3447 = vstv %s3446
    %v3448 = vmul.f32 %v3447, %v3439
    %v3449 = vmul.f32 %v3447, %v3440
    %3452 = vrot.lane.b32.xlu0 %v3448, 127
    %v3453 = vpop.permute.xlu0 %3452
    %3454 = vrot.lane.b32.xlu0 %v3449, 127
    %v3455 = vpop.permute.xlu0 %3454
    %v3458 = vadd.f32 %v3444, %v3453
    %v3459 = vadd.f32 %v3445, %v3455
    %s3460 = sld [smem:[#allocation4 + $0x25]]
    %v3461 = vstv %s3460
    %v3462 = vmul.f32 %v3461, %v3439
    %v3463 = vmul.f32 %v3461, %v3440
    %3466 = vrot.lane.b32.xlu0 %v3462, 126
    %v3467 = vpop.permute.xlu0 %3466
    %3468 = vrot.lane.b32.xlu0 %v3463, 126
    %v3469 = vpop.permute.xlu0 %3468
    %v3472 = vadd.f32 %v3458, %v3467
    %v3473 = vadd.f32 %v3459, %v3469
    %s3474 = sld [smem:[#allocation4 + $0x26]]
    %v3475 = vstv %s3474
    %v3476 = vmul.f32 %v3475, %v3439
    %v3477 = vmul.f32 %v3475, %v3440
    %3480 = vrot.lane.b32.xlu0 %v3476, 125
    %v3481 = vpop.permute.xlu0 %3480
    %3482 = vrot.lane.b32.xlu0 %v3477, 125
    %v3483 = vpop.permute.xlu0 %3482
    %v3486 = vadd.f32 %v3472, %v3481
    %v3487 = vadd.f32 %v3473, %v3483
    %s3488 = sld [smem:[#allocation4 + $0x27]]
    %v3489 = vstv %s3488
    %v3490 = vmul.f32 %v3489, %v3439
    %v3491 = vmul.f32 %v3489, %v3440
    %3494 = vrot.lane.b32.xlu0 %v3490, 124
    %v3495 = vpop.permute.xlu0 %3494
    %3496 = vrot.lane.b32.xlu0 %v3491, 124
    %v3497 = vpop.permute.xlu0 %3496
    %v3500 = vadd.f32 %v3486, %v3495
    %v3501 = vadd.f32 %v3487, %v3497
    %s3502 = sld [smem:[#allocation4 + $0x28]]
    %v3503 = vstv %s3502
    %v3504 = vmul.f32 %v3503, %v3439
    %v3505 = vmul.f32 %v3503, %v3440
    %3508 = vrot.lane.b32.xlu0 %v3504, 123
    %v3509 = vpop.permute.xlu0 %3508
    %3510 = vrot.lane.b32.xlu0 %v3505, 123
    %v3511 = vpop.permute.xlu0 %3510
    %v3514 = vadd.f32 %v3500, %v3509
    %v3515 = vadd.f32 %v3501, %v3511
    %s3516 = sld [smem:[#allocation4 + $0x29]]
    %v3517 = vstv %s3516
    %v3518 = vmul.f32 %v3517, %v3439
    %v3519 = vmul.f32 %v3517, %v3440
    %3522 = vrot.lane.b32.xlu0 %v3518, 122
    %v3523 = vpop.permute.xlu0 %3522
    %3524 = vrot.lane.b32.xlu0 %v3519, 122
    %v3525 = vpop.permute.xlu0 %3524
    %v3528 = vadd.f32 %v3514, %v3523
    %v3529 = vadd.f32 %v3515, %v3525
    %s3530 = sld [smem:[#allocation4 + $0x2a]]
    %v3531 = vld [vmem:[#allocation3 + $0x6] sm:$0x1f]
    %v3532 = vld [vmem:[#allocation3 + $0x16] sm:$0x1f]
    %v3533 = vstv %s3530
    %v3534 = vmul.f32 %v3533, %v3531
    %v3535 = vmul.f32 %v3533, %v3532
    %v3536 = vadd.f32 %v3528, %v3534
    %v3537 = vadd.f32 %v3529, %v3535
    %s3538 = sld [smem:[#allocation4 + $0x2b]]
    %v3539 = vstv %s3538
    %v3540 = vmul.f32 %v3539, %v3531
    %v3541 = vmul.f32 %v3539, %v3532
    %3544 = vrot.lane.b32.xlu0 %v3540, 127
    %v3545 = vpop.permute.xlu0 %3544
    %3546 = vrot.lane.b32.xlu0 %v3541, 127
    %v3547 = vpop.permute.xlu0 %3546
    %v3550 = vadd.f32 %v3536, %v3545
    %v3551 = vadd.f32 %v3537, %v3547
    %s3552 = sld [smem:[#allocation4 + $0x2c]]
    %v3553 = vstv %s3552
    %v3554 = vmul.f32 %v3553, %v3531
    %v3555 = vmul.f32 %v3553, %v3532
    %3558 = vrot.lane.b32.xlu0 %v3554, 126
    %v3559 = vpop.permute.xlu0 %3558
    %3560 = vrot.lane.b32.xlu0 %v3555, 126
    %v3561 = vpop.permute.xlu0 %3560
    %v3564 = vadd.f32 %v3550, %v3559
    %v3565 = vadd.f32 %v3551, %v3561
    %s3566 = sld [smem:[#allocation4 + $0x2d]]
    %v3567 = vstv %s3566
    %v3568 = vmul.f32 %v3567, %v3531
    %v3569 = vmul.f32 %v3567, %v3532
    %3572 = vrot.lane.b32.xlu0 %v3568, 125
    %v3573 = vpop.permute.xlu0 %3572
    %3574 = vrot.lane.b32.xlu0 %v3569, 125
    %v3575 = vpop.permute.xlu0 %3574
    %v3578 = vadd.f32 %v3564, %v3573
    %v3579 = vadd.f32 %v3565, %v3575
    %s3580 = sld [smem:[#allocation4 + $0x2e]]
    %v3581 = vstv %s3580
    %v3582 = vmul.f32 %v3581, %v3531
    %v3583 = vmul.f32 %v3581, %v3532
    %3586 = vrot.lane.b32.xlu0 %v3582, 124
    %v3587 = vpop.permute.xlu0 %3586
    %3588 = vrot.lane.b32.xlu0 %v3583, 124
    %v3589 = vpop.permute.xlu0 %3588
    %v3592 = vadd.f32 %v3578, %v3587
    %v3593 = vadd.f32 %v3579, %v3589
    %s3594 = sld [smem:[#allocation4 + $0x2f]]
    %v3595 = vstv %s3594
    %v3596 = vmul.f32 %v3595, %v3531
    %v3597 = vmul.f32 %v3595, %v3532
    %3600 = vrot.lane.b32.xlu0 %v3596, 123
    %v3601 = vpop.permute.xlu0 %3600
    %3602 = vrot.lane.b32.xlu0 %v3597, 123
    %v3603 = vpop.permute.xlu0 %3602
    %v3606 = vadd.f32 %v3592, %v3601
    %v3607 = vadd.f32 %v3593, %v3603
    %s3608 = sld [smem:[#allocation4 + $0x30]]
    %v3609 = vstv %s3608
    %v3610 = vmul.f32 %v3609, %v3531
    %v3611 = vmul.f32 %v3609, %v3532
    %3614 = vrot.lane.b32.xlu0 %v3610, 122
    %v3615 = vpop.permute.xlu0 %3614
    %3616 = vrot.lane.b32.xlu0 %v3611, 122
    %v3617 = vpop.permute.xlu0 %3616
    %v3620 = vadd.f32 %v3606, %v3615
    %v3621 = vadd.f32 %v3607, %v3617
    %s3622 = sld [smem:[#allocation4 + $0x31]]
    %v3623 = vld [vmem:[%s2965] sm:$0x1f]
    %v3624 = vld [vmem:[%s2965 + $0x10] sm:$0x1f]
    %v3625 = vstv %s3622
    %v3626 = vmul.f32 %v3625, %v3623
    %v3627 = vmul.f32 %v3625, %v3624
    %v3628 = vadd.f32 %v3620, %v3626
    %v3629 = vadd.f32 %v3621, %v3627
    %s3630 = sld [smem:[#allocation4 + $0x32]]
    %v3631 = vstv %s3630
    %v3632 = vmul.f32 %v3631, %v3623
    %v3633 = vmul.f32 %v3631, %v3624
    %3636 = vrot.lane.b32.xlu0 %v3632, 127
    %v3637 = vpop.permute.xlu0 %3636
    %3638 = vrot.lane.b32.xlu0 %v3633, 127
    %v3639 = vpop.permute.xlu0 %3638
    %v3642 = vadd.f32 %v3628, %v3637
    %v3643 = vadd.f32 %v3629, %v3639
    %s3644 = sld [smem:[#allocation4 + $0x33]]
    %v3645 = vstv %s3644
    %v3646 = vmul.f32 %v3645, %v3623
    %v3647 = vmul.f32 %v3645, %v3624
    %3650 = vrot.lane.b32.xlu0 %v3646, 126
    %v3651 = vpop.permute.xlu0 %3650
    %3652 = vrot.lane.b32.xlu0 %v3647, 126
    %v3653 = vpop.permute.xlu0 %3652
    %v3656 = vadd.f32 %v3642, %v3651
    %v3657 = vadd.f32 %v3643, %v3653
    %s3658 = sld [smem:[#allocation4 + $0x34]]
    %v3659 = vstv %s3658
    %v3660 = vmul.f32 %v3659, %v3623
    %v3661 = vmul.f32 %v3659, %v3624
    %3664 = vrot.lane.b32.xlu0 %v3660, 125
    %v3665 = vpop.permute.xlu0 %3664
    %3666 = vrot.lane.b32.xlu0 %v3661, 125
    %v3667 = vpop.permute.xlu0 %3666
    %v3670 = vadd.f32 %v3656, %v3665
    %v3671 = vadd.f32 %v3657, %v3667
    %s3672 = sld [smem:[#allocation4 + $0x35]]
    %v3673 = vstv %s3672
    %v3674 = vmul.f32 %v3673, %v3623
    %v3675 = vmul.f32 %v3673, %v3624
    %3678 = vrot.lane.b32.xlu0 %v3674, 124
    %v3679 = vpop.permute.xlu0 %3678
    %3680 = vrot.lane.b32.xlu0 %v3675, 124
    %v3681 = vpop.permute.xlu0 %3680
    %v3684 = vadd.f32 %v3670, %v3679
    %v3685 = vadd.f32 %v3671, %v3681
    %s3686 = sld [smem:[#allocation4 + $0x36]]
    %v3687 = vstv %s3686
    %v3688 = vmul.f32 %v3687, %v3623
    %v3689 = vmul.f32 %v3687, %v3624
    %3692 = vrot.lane.b32.xlu0 %v3688, 123
    %v3693 = vpop.permute.xlu0 %3692
    %3694 = vrot.lane.b32.xlu0 %v3689, 123
    %v3695 = vpop.permute.xlu0 %3694
    %v3698 = vadd.f32 %v3684, %v3693
    %v3699 = vadd.f32 %v3685, %v3695
    %s3700 = sld [smem:[#allocation4 + $0x37]]
    %v3701 = vstv %s3700
    %v3702 = vmul.f32 %v3701, %v3623
    %v3703 = vmul.f32 %v3701, %v3624
    %3706 = vrot.lane.b32.xlu0 %v3702, 122
    %v3707 = vpop.permute.xlu0 %3706
    %3708 = vrot.lane.b32.xlu0 %v3703, 122
    %v3709 = vpop.permute.xlu0 %3708
    %v3712 = vadd.f32 %v3698, %v3707
    %v3713 = vadd.f32 %v3699, %v3709
    %s3714 = sld [smem:[#allocation4 + $0x38]]
    %v3715 = vld [vmem:[%s2965 + $0x1] sm:$0x1f]
    %v3716 = vld [vmem:[%s2965 + $0x11] sm:$0x1f]
    %v3717 = vstv %s3714
    %v3718 = vmul.f32 %v3717, %v3715
    %v3719 = vmul.f32 %v3717, %v3716
    %v3720 = vadd.f32 %v3712, %v3718
    %v3721 = vadd.f32 %v3713, %v3719
    %s3722 = sld [smem:[#allocation4 + $0x39]]
    %v3723 = vstv %s3722
    %v3724 = vmul.f32 %v3723, %v3715
    %v3725 = vmul.f32 %v3723, %v3716
    %3728 = vrot.lane.b32.xlu0 %v3724, 127
    %v3729 = vpop.permute.xlu0 %3728
    %3730 = vrot.lane.b32.xlu0 %v3725, 127
    %v3731 = vpop.permute.xlu0 %3730
    %v3734 = vadd.f32 %v3720, %v3729
    %v3735 = vadd.f32 %v3721, %v3731
    %s3736 = sld [smem:[#allocation4 + $0x3a]]
    %v3737 = vstv %s3736
    %v3738 = vmul.f32 %v3737, %v3715
    %v3739 = vmul.f32 %v3737, %v3716
    %3742 = vrot.lane.b32.xlu0 %v3738, 126
    %v3743 = vpop.permute.xlu0 %3742
    %3744 = vrot.lane.b32.xlu0 %v3739, 126
    %v3745 = vpop.permute.xlu0 %3744
    %v3748 = vadd.f32 %v3734, %v3743
    %v3749 = vadd.f32 %v3735, %v3745
    %s3750 = sld [smem:[#allocation4 + $0x3b]]
    %v3751 = vstv %s3750
    %v3752 = vmul.f32 %v3751, %v3715
    %v3753 = vmul.f32 %v3751, %v3716
    %3756 = vrot.lane.b32.xlu0 %v3752, 125
    %v3757 = vpop.permute.xlu0 %3756
    %3758 = vrot.lane.b32.xlu0 %v3753, 125
    %v3759 = vpop.permute.xlu0 %3758
    %v3762 = vadd.f32 %v3748, %v3757
    %v3763 = vadd.f32 %v3749, %v3759
    %s3764 = sld [smem:[#allocation4 + $0x3c]]
    %v3765 = vstv %s3764
    %v3766 = vmul.f32 %v3765, %v3715
    %v3767 = vmul.f32 %v3765, %v3716
    %3770 = vrot.lane.b32.xlu0 %v3766, 124
    %v3771 = vpop.permute.xlu0 %3770
    %3772 = vrot.lane.b32.xlu0 %v3767, 124
    %v3773 = vpop.permute.xlu0 %3772
    %v3776 = vadd.f32 %v3762, %v3771
    %v3777 = vadd.f32 %v3763, %v3773
    %s3778 = sld [smem:[#allocation4 + $0x3d]]
    %v3779 = vstv %s3778
    %v3780 = vmul.f32 %v3779, %v3715
    %v3781 = vmul.f32 %v3779, %v3716
    %3784 = vrot.lane.b32.xlu0 %v3780, 123
    %v3785 = vpop.permute.xlu0 %3784
    %3786 = vrot.lane.b32.xlu0 %v3781, 123
    %v3787 = vpop.permute.xlu0 %3786
    %v3790 = vadd.f32 %v3776, %v3785
    %v3791 = vadd.f32 %v3777, %v3787
    %s3792 = sld [smem:[#allocation4 + $0x3e]]
    %v3793 = vstv %s3792
    %v3794 = vmul.f32 %v3793, %v3715
    %v3795 = vmul.f32 %v3793, %v3716
    %3798 = vrot.lane.b32.xlu0 %v3794, 122
    %v3799 = vpop.permute.xlu0 %3798
    %3800 = vrot.lane.b32.xlu0 %v3795, 122
    %v3801 = vpop.permute.xlu0 %3800
    %v3804 = vadd.f32 %v3790, %v3799
    %v3805 = vadd.f32 %v3791, %v3801
    %s3806 = sld [smem:[#allocation4 + $0x3f]]
    %v3807 = vld [vmem:[%s2965 + $0x2] sm:$0x1f]
    %v3808 = vld [vmem:[%s2965 + $0x12] sm:$0x1f]
    %v3809 = vstv %s3806
    %v3810 = vmul.f32 %v3809, %v3807
    %v3811 = vmul.f32 %v3809, %v3808
    %v3812 = vadd.f32 %v3804, %v3810
    %v3813 = vadd.f32 %v3805, %v3811
    %s3814 = sld [smem:[#allocation4 + $0x40]]
    %v3815 = vstv %s3814
    %v3816 = vmul.f32 %v3815, %v3807
    %v3817 = vmul.f32 %v3815, %v3808
    %3820 = vrot.lane.b32.xlu0 %v3816, 127
    %v3821 = vpop.permute.xlu0 %3820
    %3822 = vrot.lane.b32.xlu0 %v3817, 127
    %v3823 = vpop.permute.xlu0 %3822
    %v3826 = vadd.f32 %v3812, %v3821
    %v3827 = vadd.f32 %v3813, %v3823
    %s3828 = sld [smem:[#allocation4 + $0x41]]
    %v3829 = vstv %s3828
    %v3830 = vmul.f32 %v3829, %v3807
    %v3831 = vmul.f32 %v3829, %v3808
    %3834 = vrot.lane.b32.xlu0 %v3830, 126
    %v3835 = vpop.permute.xlu0 %3834
    %3836 = vrot.lane.b32.xlu0 %v3831, 126
    %v3837 = vpop.permute.xlu0 %3836
    %v3840 = vadd.f32 %v3826, %v3835
    %v3841 = vadd.f32 %v3827, %v3837
    %s3842 = sld [smem:[#allocation4 + $0x42]]
    %v3843 = vstv %s3842
    %v3844 = vmul.f32 %v3843, %v3807
    %v3845 = vmul.f32 %v3843, %v3808
    %3848 = vrot.lane.b32.xlu0 %v3844, 125
    %v3849 = vpop.permute.xlu0 %3848
    %3850 = vrot.lane.b32.xlu0 %v3845, 125
    %v3851 = vpop.permute.xlu0 %3850
    %v3854 = vadd.f32 %v3840, %v3849
    %v3855 = vadd.f32 %v3841, %v3851
    %s3856 = sld [smem:[#allocation4 + $0x43]]
    %v3857 = vstv %s3856
    %v3858 = vmul.f32 %v3857, %v3807
    %v3859 = vmul.f32 %v3857, %v3808
    %3862 = vrot.lane.b32.xlu0 %v3858, 124
    %v3863 = vpop.permute.xlu0 %3862
    %3864 = vrot.lane.b32.xlu0 %v3859, 124
    %v3865 = vpop.permute.xlu0 %3864
    %v3868 = vadd.f32 %v3854, %v3863
    %v3869 = vadd.f32 %v3855, %v3865
    %s3870 = sld [smem:[#allocation4 + $0x44]]
    %v3871 = vstv %s3870
    %v3872 = vmul.f32 %v3871, %v3807
    %v3873 = vmul.f32 %v3871, %v3808
    %3876 = vrot.lane.b32.xlu0 %v3872, 123
    %v3877 = vpop.permute.xlu0 %3876
    %3878 = vrot.lane.b32.xlu0 %v3873, 123
    %v3879 = vpop.permute.xlu0 %3878
    %v3882 = vadd.f32 %v3868, %v3877
    %v3883 = vadd.f32 %v3869, %v3879
    %s3884 = sld [smem:[#allocation4 + $0x45]]
    %v3885 = vstv %s3884
    %v3886 = vmul.f32 %v3885, %v3807
    %v3887 = vmul.f32 %v3885, %v3808
    %3890 = vrot.lane.b32.xlu0 %v3886, 122
    %v3891 = vpop.permute.xlu0 %3890
    %3892 = vrot.lane.b32.xlu0 %v3887, 122
    %v3893 = vpop.permute.xlu0 %3892
    %v3896 = vadd.f32 %v3882, %v3891
    %v3897 = vadd.f32 %v3883, %v3893
    %s3898 = sld [smem:[#allocation4 + $0x46]]
    %v3899 = vld [vmem:[%s2965 + $0x3] sm:$0x1f]
    %v3900 = vld [vmem:[%s2965 + $0x13] sm:$0x1f]
    %v3901 = vstv %s3898
    %v3902 = vmul.f32 %v3901, %v3899
    %v3903 = vmul.f32 %v3901, %v3900
    %v3904 = vadd.f32 %v3896, %v3902
    %v3905 = vadd.f32 %v3897, %v3903
    %s3906 = sld [smem:[#allocation4 + $0x47]]
    %v3907 = vstv %s3906
    %v3908 = vmul.f32 %v3907, %v3899
    %v3909 = vmul.f32 %v3907, %v3900
    %3912 = vrot.lane.b32.xlu0 %v3908, 127
    %v3913 = vpop.permute.xlu0 %3912
    %3914 = vrot.lane.b32.xlu0 %v3909, 127
    %v3915 = vpop.permute.xlu0 %3914
    %v3918 = vadd.f32 %v3904, %v3913
    %v3919 = vadd.f32 %v3905, %v3915
    %s3920 = sld [smem:[#allocation4 + $0x48]]
    %v3921 = vstv %s3920
    %v3922 = vmul.f32 %v3921, %v3899
    %v3923 = vmul.f32 %v3921, %v3900
    %3926 = vrot.lane.b32.xlu0 %v3922, 126
    %v3927 = vpop.permute.xlu0 %3926
    %3928 = vrot.lane.b32.xlu0 %v3923, 126
    %v3929 = vpop.permute.xlu0 %3928
    %v3932 = vadd.f32 %v3918, %v3927
    %v3933 = vadd.f32 %v3919, %v3929
    %s3934 = sld [smem:[#allocation4 + $0x49]]
    %v3935 = vstv %s3934
    %v3936 = vmul.f32 %v3935, %v3899
    %v3937 = vmul.f32 %v3935, %v3900
    %3940 = vrot.lane.b32.xlu0 %v3936, 125
    %v3941 = vpop.permute.xlu0 %3940
    %3942 = vrot.lane.b32.xlu0 %v3937, 125
    %v3943 = vpop.permute.xlu0 %3942
    %v3946 = vadd.f32 %v3932, %v3941
    %v3947 = vadd.f32 %v3933, %v3943
    %s3948 = sld [smem:[#allocation4 + $0x4a]]
    %v3949 = vstv %s3948
    %v3950 = vmul.f32 %v3949, %v3899
    %v3951 = vmul.f32 %v3949, %v3900
    %3954 = vrot.lane.b32.xlu0 %v3950, 124
    %v3955 = vpop.permute.xlu0 %3954
    %3956 = vrot.lane.b32.xlu0 %v3951, 124
    %v3957 = vpop.permute.xlu0 %3956
    %v3960 = vadd.f32 %v3946, %v3955
    %v3961 = vadd.f32 %v3947, %v3957
    %s3962 = sld [smem:[#allocation4 + $0x4b]]
    %v3963 = vstv %s3962
    %v3964 = vmul.f32 %v3963, %v3899
    %v3965 = vmul.f32 %v3963, %v3900
    %3968 = vrot.lane.b32.xlu0 %v3964, 123
    %v3969 = vpop.permute.xlu0 %3968
    %3970 = vrot.lane.b32.xlu0 %v3965, 123
    %v3971 = vpop.permute.xlu0 %3970
    %v3974 = vadd.f32 %v3960, %v3969
    %v3975 = vadd.f32 %v3961, %v3971
    %s3976 = sld [smem:[#allocation4 + $0x4c]]
    %v3977 = vstv %s3976
    %v3978 = vmul.f32 %v3977, %v3899
    %v3979 = vmul.f32 %v3977, %v3900
    %3982 = vrot.lane.b32.xlu0 %v3978, 122
    %v3983 = vpop.permute.xlu0 %3982
    %3984 = vrot.lane.b32.xlu0 %v3979, 122
    %v3985 = vpop.permute.xlu0 %3984
    %v3988 = vadd.f32 %v3974, %v3983
    %v3989 = vadd.f32 %v3975, %v3985
    %s3990 = sld [smem:[#allocation4 + $0x4d]]
    %v3991 = vld [vmem:[%s2965 + $0x4] sm:$0x1f]
    %v3992 = vld [vmem:[%s2965 + $0x14] sm:$0x1f]
    %v3993 = vstv %s3990
    %v3994 = vmul.f32 %v3993, %v3991
    %v3995 = vmul.f32 %v3993, %v3992
    %v3996 = vadd.f32 %v3988, %v3994
    %v3997 = vadd.f32 %v3989, %v3995
    %s3998 = sld [smem:[#allocation4 + $0x4e]]
    %v3999 = vstv %s3998
    %v4000 = vmul.f32 %v3999, %v3991
    %v4001 = vmul.f32 %v3999, %v3992
    %4004 = vrot.lane.b32.xlu0 %v4000, 127
    %v4005 = vpop.permute.xlu0 %4004
    %4006 = vrot.lane.b32.xlu0 %v4001, 127
    %v4007 = vpop.permute.xlu0 %4006
    %v4010 = vadd.f32 %v3996, %v4005
    %v4011 = vadd.f32 %v3997, %v4007
    %s4012 = sld [smem:[#allocation4 + $0x4f]]
    %v4013 = vstv %s4012
    %v4014 = vmul.f32 %v4013, %v3991
    %v4015 = vmul.f32 %v4013, %v3992
    %4018 = vrot.lane.b32.xlu0 %v4014, 126
    %v4019 = vpop.permute.xlu0 %4018
    %4020 = vrot.lane.b32.xlu0 %v4015, 126
    %v4021 = vpop.permute.xlu0 %4020
    %v4024 = vadd.f32 %v4010, %v4019
    %v4025 = vadd.f32 %v4011, %v4021
    %s4026 = sld [smem:[#allocation4 + $0x50]]
    %v4027 = vstv %s4026
    %v4028 = vmul.f32 %v4027, %v3991
    %v4029 = vmul.f32 %v4027, %v3992
    %4032 = vrot.lane.b32.xlu0 %v4028, 125
    %v4033 = vpop.permute.xlu0 %4032
    %4034 = vrot.lane.b32.xlu0 %v4029, 125
    %v4035 = vpop.permute.xlu0 %4034
    %v4038 = vadd.f32 %v4024, %v4033
    %v4039 = vadd.f32 %v4025, %v4035
    %s4040 = sld [smem:[#allocation4 + $0x51]]
    %v4041 = vstv %s4040
    %v4042 = vmul.f32 %v4041, %v3991
    %v4043 = vmul.f32 %v4041, %v3992
    %4046 = vrot.lane.b32.xlu0 %v4042, 124
    %v4047 = vpop.permute.xlu0 %4046
    %4048 = vrot.lane.b32.xlu0 %v4043, 124
    %v4049 = vpop.permute.xlu0 %4048
    %v4052 = vadd.f32 %v4038, %v4047
    %v4053 = vadd.f32 %v4039, %v4049
    %s4054 = sld [smem:[#allocation4 + $0x52]]
    %v4055 = vstv %s4054
    %v4056 = vmul.f32 %v4055, %v3991
    %v4057 = vmul.f32 %v4055, %v3992
    %4060 = vrot.lane.b32.xlu0 %v4056, 123
    %v4061 = vpop.permute.xlu0 %4060
    %4062 = vrot.lane.b32.xlu0 %v4057, 123
    %v4063 = vpop.permute.xlu0 %4062
    %v4066 = vadd.f32 %v4052, %v4061
    %v4067 = vadd.f32 %v4053, %v4063
    %s4068 = sld [smem:[#allocation4 + $0x53]]
    %v4069 = vstv %s4068
    %v4070 = vmul.f32 %v4069, %v3991
    %v4071 = vmul.f32 %v4069, %v3992
    %4074 = vrot.lane.b32.xlu0 %v4070, 122
    %v4075 = vpop.permute.xlu0 %4074
    %4076 = vrot.lane.b32.xlu0 %v4071, 122
    %v4077 = vpop.permute.xlu0 %4076
    %v4080 = vadd.f32 %v4066, %v4075
    %v4081 = vadd.f32 %v4067, %v4077
    %s4082 = sld [smem:[#allocation4 + $0x54]]
    %v4083 = vld [vmem:[%s2965 + $0x5] sm:$0x1f]
    %v4084 = vld [vmem:[%s2965 + $0x15] sm:$0x1f]
    %v4085 = vstv %s4082
    %v4086 = vmul.f32 %v4085, %v4083
    %v4087 = vmul.f32 %v4085, %v4084
    %v4088 = vadd.f32 %v4080, %v4086
    %v4089 = vadd.f32 %v4081, %v4087
    %s4090 = sld [smem:[#allocation4 + $0x55]]
    %v4091 = vstv %s4090
    %v4092 = vmul.f32 %v4091, %v4083
    %v4093 = vmul.f32 %v4091, %v4084
    %4096 = vrot.lane.b32.xlu0 %v4092, 127
    %v4097 = vpop.permute.xlu0 %4096
    %4098 = vrot.lane.b32.xlu0 %v4093, 127
    %v4099 = vpop.permute.xlu0 %4098
    %v4102 = vadd.f32 %v4088, %v4097
    %v4103 = vadd.f32 %v4089, %v4099
    %s4104 = sld [smem:[#allocation4 + $0x56]]
    %v4105 = vstv %s4104
    %v4106 = vmul.f32 %v4105, %v4083
    %v4107 = vmul.f32 %v4105, %v4084
    %4110 = vrot.lane.b32.xlu0 %v4106, 126
    %v4111 = vpop.permute.xlu0 %4110
    %4112 = vrot.lane.b32.xlu0 %v4107, 126
    %v4113 = vpop.permute.xlu0 %4112
    %v4116 = vadd.f32 %v4102, %v4111
    %v4117 = vadd.f32 %v4103, %v4113
    %s4118 = sld [smem:[#allocation4 + $0x57]]
    %v4119 = vstv %s4118
    %v4120 = vmul.f32 %v4119, %v4083
    %v4121 = vmul.f32 %v4119, %v4084
    %4124 = vrot.lane.b32.xlu0 %v4120, 125
    %v4125 = vpop.permute.xlu0 %4124
    %4126 = vrot.lane.b32.xlu0 %v4121, 125
    %v4127 = vpop.permute.xlu0 %4126
    %v4130 = vadd.f32 %v4116, %v4125
    %v4131 = vadd.f32 %v4117, %v4127
    %s4132 = sld [smem:[#allocation4 + $0x58]]
    %v4133 = vstv %s4132
    %v4134 = vmul.f32 %v4133, %v4083
    %v4135 = vmul.f32 %v4133, %v4084
    %4138 = vrot.lane.b32.xlu0 %v4134, 124
    %v4139 = vpop.permute.xlu0 %4138
    %4140 = vrot.lane.b32.xlu0 %v4135, 124
    %v4141 = vpop.permute.xlu0 %4140
    %v4144 = vadd.f32 %v4130, %v4139
    %v4145 = vadd.f32 %v4131, %v4141
    %s4146 = sld [smem:[#allocation4 + $0x59]]
    %v4147 = vstv %s4146
    %v4148 = vmul.f32 %v4147, %v4083
    %v4149 = vmul.f32 %v4147, %v4084
    %4152 = vrot.lane.b32.xlu0 %v4148, 123
    %v4153 = vpop.permute.xlu0 %4152
    %4154 = vrot.lane.b32.xlu0 %v4149, 123
    %v4155 = vpop.permute.xlu0 %4154
    %v4158 = vadd.f32 %v4144, %v4153
    %v4159 = vadd.f32 %v4145, %v4155
    %s4160 = sld [smem:[#allocation4 + $0x5a]]
    %v4161 = vstv %s4160
    %v4162 = vmul.f32 %v4161, %v4083
    %v4163 = vmul.f32 %v4161, %v4084
    %4166 = vrot.lane.b32.xlu0 %v4162, 122
    %v4167 = vpop.permute.xlu0 %4166
    %4168 = vrot.lane.b32.xlu0 %v4163, 122
    %v4169 = vpop.permute.xlu0 %4168
    %v4172 = vadd.f32 %v4158, %v4167
    %v4173 = vadd.f32 %v4159, %v4169
    %s4174 = sld [smem:[#allocation4 + $0x5b]]
    %v4175 = vld [vmem:[%s2965 + $0x6] sm:$0x1f]
    %v4176 = vld [vmem:[%s2965 + $0x16] sm:$0x1f]
    %v4177 = vstv %s4174
    %v4178 = vmul.f32 %v4177, %v4175
    %v4179 = vmul.f32 %v4177, %v4176
    %v4180 = vadd.f32 %v4172, %v4178
    %v4181 = vadd.f32 %v4173, %v4179
    %s4182 = sld [smem:[#allocation4 + $0x5c]]
    %v4183 = vstv %s4182
    %v4184 = vmul.f32 %v4183, %v4175
    %v4185 = vmul.f32 %v4183, %v4176
    %4188 = vrot.lane.b32.xlu0 %v4184, 127
    %v4189 = vpop.permute.xlu0 %4188
    %4190 = vrot.lane.b32.xlu0 %v4185, 127
    %v4191 = vpop.permute.xlu0 %4190
    %v4194 = vadd.f32 %v4180, %v4189
    %v4195 = vadd.f32 %v4181, %v4191
    %s4196 = sld [smem:[#allocation4 + $0x5d]]
    %v4197 = vstv %s4196
    %v4198 = vmul.f32 %v4197, %v4175
    %v4199 = vmul.f32 %v4197, %v4176
    %4202 = vrot.lane.b32.xlu0 %v4198, 126
    %v4203 = vpop.permute.xlu0 %4202
    %4204 = vrot.lane.b32.xlu0 %v4199, 126
    %v4205 = vpop.permute.xlu0 %4204
    %v4208 = vadd.f32 %v4194, %v4203
    %v4209 = vadd.f32 %v4195, %v4205
    %s4210 = sld [smem:[#allocation4 + $0x5e]]
    %v4211 = vstv %s4210
    %v4212 = vmul.f32 %v4211, %v4175
    %v4213 = vmul.f32 %v4211, %v4176
    %4216 = vrot.lane.b32.xlu0 %v4212, 125
    %v4217 = vpop.permute.xlu0 %4216
    %4218 = vrot.lane.b32.xlu0 %v4213, 125
    %v4219 = vpop.permute.xlu0 %4218
    %v4222 = vadd.f32 %v4208, %v4217
    %v4223 = vadd.f32 %v4209, %v4219
    %s4224 = sld [smem:[#allocation4 + $0x5f]]
    %v4225 = vstv %s4224
    %v4226 = vmul.f32 %v4225, %v4175
    %v4227 = vmul.f32 %v4225, %v4176
    %4230 = vrot.lane.b32.xlu0 %v4226, 124
    %v4231 = vpop.permute.xlu0 %4230
    %4232 = vrot.lane.b32.xlu0 %v4227, 124
    %v4233 = vpop.permute.xlu0 %4232
    %v4236 = vadd.f32 %v4222, %v4231
    %v4237 = vadd.f32 %v4223, %v4233
    %s4238 = sld [smem:[#allocation4 + $0x60]]
    %v4239 = vstv %s4238
    %v4240 = vmul.f32 %v4239, %v4175
    %v4241 = vmul.f32 %v4239, %v4176
    %4244 = vrot.lane.b32.xlu0 %v4240, 123
    %v4245 = vpop.permute.xlu0 %4244
    %4246 = vrot.lane.b32.xlu0 %v4241, 123
    %v4247 = vpop.permute.xlu0 %4246
    %v4250 = vadd.f32 %v4236, %v4245
    %v4251 = vadd.f32 %v4237, %v4247
    %s4252 = sld [smem:[#allocation4 + $0x61]]
    %v4253 = vstv %s4252
    %v4254 = vmul.f32 %v4253, %v4175
    %v4255 = vmul.f32 %v4253, %v4176
    %4258 = vrot.lane.b32.xlu0 %v4254, 122
    %v4259 = vpop.permute.xlu0 %4258
    %4260 = vrot.lane.b32.xlu0 %v4255, 122
    %v4261 = vpop.permute.xlu0 %4260
    %v4264 = vadd.f32 %v4250, %v4259
    %v4265 = vadd.f32 %v4251, %v4261
    %v4266 = vxor.u32 %v4264, 2147483648
    %v4267 = vxor.u32 %v4265, 2147483648
    %v4268 = vmul.f32 %v4266, 1.442695
    %v4269 = vpow.pop %v4268
    %v4270 = vmul.f32 %v4267, 1.442695
    %v4271 = vpow.pop %v4270
    %v4272 = vadd.f32 %v4269, 1.0
    %v4273 = vadd.f32 %v4271, 1.0
    %v4274 = vrcp.pop %v4272
    %v4275 = vmul.f32 %v4272, %v4274
    %v4276 = vsub.f32 1.0, %v4275
    %v4277 = vmul.f32 %v4274, %v4276
    %v4278 = vadd.f32 %v4274, %v4277
    %vm4279 = vweird.f32 %v4272
    %vm4280 = vweird.f32 %v4274
    %vm4281 = vmor %vm4279, %vm4280
    %v4282 = vsel %vm4281, %v4274, %v4278
    %v4283 = vand.u32 2147483647, %v4272
    %vm4284 = vcmp.eq.f32.partialorder %v4283, 8.507059e+37
    %v4285 = vand.u32 %v4272, 2147483648
    %v4286 = vor.u32 1.1754944e-38, %v4285
    %v4287 = vsel %vm4284, %v4286, %v4282
    %v4288 = vmul.f32 1.0, %v4287
    %v4289 = vrcp.pop %v4273
    %v4290 = vmul.f32 %v4273, %v4289
    %v4291 = vsub.f32 1.0, %v4290
    %v4292 = vmul.f32 %v4289, %v4291
    %v4293 = vadd.f32 %v4289, %v4292
    %vm4294 = vweird.f32 %v4273
    %vm4295 = vweird.f32 %v4289
    %vm4296 = vmor %vm4294, %vm4295
    %v4297 = vsel %vm4296, %v4289, %v4293
    %v4298 = vand.u32 2147483647, %v4273
    %vm4299 = vcmp.eq.f32.partialorder %v4298, 8.507059e+37
    %v4300 = vand.u32 %v4273, 2147483648
    %v4301 = vor.u32 1.1754944e-38, %v4300
    %v4302 = vsel %vm4299, %v4301, %v4297
    %v4303 = vmul.f32 1.0, %v4302
    %vm4304 = vcmask 36864
    %4305 = vst.msk [vmem:[%s13] sm:$0x1f] %vm4304, %v4288
    %4306 = vst.msk [vmem:[%s13 + $0x8] sm:$0x1f] %vm4304, %v4303
    // Predicated region
    $region58: #{srm_pixel_attention.1} parent=1 // pred_check
      _
    $region59: #{srm_pixel_attention.1} parent=1 // pred_check_branch
      %4308 = sbr.rel (0) target = $region61
    $region60: #{srm_pixel_attention.1} parent=1 // pred_region
      _
    $region61: #{srm_pixel_attention.1} parent=1 // pred_fallthru
      _
    // Predicated region
    $region62: #{srm_pixel_attention.1} parent=1 // pred_check
      _
    $region63: #{srm_pixel_attention.1} parent=1 // pred_check_branch
      %4310 = sbr.rel (0) target = $region65
    $region64: #{srm_pixel_attention.1} parent=1 // pred_region
      _
    $region65: #{srm_pixel_attention.1} parent=1 // pred_fallthru
      _
    %4311 = vsyncpa [#allocation5], 1

</llo_original>
